<compile_context>
chip_gen: v7x
topology: tpu7x:2x2x1
jax: 0.10.0
libtpu: 0.0.40
codegen_flags: <defaults>
</compile_context>

<pallas_src>
import functools

import jax
import jax.numpy as jnp
from jax.experimental import pallas as pl
from jax.experimental.pallas import tpu as pltpu


# ----------------------------------------------------------------------------
# Kernel
# ----------------------------------------------------------------------------
def kernelnn_kernel(alpha_ref,                    # SMEM (4,) PReLU slopes (f32)
                    xT_ref,                       # (3, TN)   f32
                    w1t_ref, b1_ref,              # (256, 3)  f32, (256, 1) f32
                    w2t_ref, b2_ref,              # (256,256) bf16, (256,1) f32
                    w3t_ref, b3_ref,              # (256,256) bf16, (256,1) f32
                    w4t_ref, b4_ref,              # (256,256) bf16, (256,1) f32
                    w5t_ref, b5_ref,              # (1, 256)  bf16, (1, 1)  f32
                    o_ref,                        # (1, TN)   f32
                    *, fast_bf16):
    # Epilogue compute dtype: bf16 where the VPU has bf16 ALUs (v6e/v7x),
    # f32 elsewhere (v5e and older have no bf16 VPU).
    cdt = jnp.bfloat16 if fast_bf16 else jnp.float32

    # Hoist scalar slope reads once per grid step.
    a1 = alpha_ref[0].astype(cdt)
    a2 = alpha_ref[1].astype(cdt)
    a3 = alpha_ref[2].astype(cdt)
    a4 = alpha_ref[3].astype(cdt)

    xT = xT_ref[...]                              # (3, TN) f32

    # ---- Layer 1 (fan_in = 3) ----------------------------------------------
    if fast_bf16:
        # v6e/v7x: MXU has slack while the VPU is the binding slot -> cheap
        # K=3 MXU pass (K pads internally), f32 accumulation.
        h = jnp.dot(w1t_ref[...].astype(jnp.bfloat16),
                    xT.astype(jnp.bfloat16),
                    preferred_element_type=jnp.float32)          # (256, TN) f32
    else:
        # v5e: MXU is the tight unit -> three broadcast FMAs on the VPU (f32).
        w1t = w1t_ref[...]                                       # (256, 3) f32
        h = (w1t[:, 0:1] * xT[0:1, :]
             + w1t[:, 1:2] * xT[1:2, :]
             + w1t[:, 2:3] * xT[2:3, :])                         # (256, TN) f32

    h = h.astype(cdt) + b1_ref[...].astype(cdt)
    h = jnp.where(h >= 0, h, a1 * h)
    h = h.astype(jnp.bfloat16)                    # MXU operand for next layer

    # ---- Layers 2-4: bf16 MXU matmuls, f32 accumulation, cdt epilogue ------
    def hidden_layer(hb, w_ref, b_ref, a):
        z = jnp.dot(w_ref[...], hb, preferred_element_type=jnp.float32)
        z = z.astype(cdt) + b_ref[...].astype(cdt)
        z = jnp.where(z >= 0, z, a * z)
        return z.astype(jnp.bfloat16)

    h = hidden_layer(h, w2t_ref, b2_ref, a2)
    h = hidden_layer(h, w3t_ref, b3_ref, a3)
    h = hidden_layer(h, w4t_ref, b4_ref, a4)

    # ---- Output layer: (1,256) @ (256,TN) -> lane-dense (1, TN), f32 -------
    out = jnp.dot(w5t_ref[...], h,
                  preferred_element_type=jnp.float32) + b5_ref[...]
    o_ref[...] = out.astype(o_ref.dtype)


# ----------------------------------------------------------------------------
# Host-side wrapper
# ----------------------------------------------------------------------------
def _const_spec(arr):
    # Whole-array block revisited every grid step (constant index map).
    return pl.BlockSpec(arr.shape, lambda i: (0, 0))


def _has_bf16_vpu():
    """True for TPU generations whose VPU has bf16 ALUs (v6e / v7x)."""
    try:
        kind = jax.devices()[0].device_kind.lower()
    except Exception:
        return False
    return any(tag in kind for tag in ("v6", "v7", "7x", "trillium"))


def prepare_params(params):
    """One-time layout/dtype prep (hoisted out of the per-call forward path)."""
    (w1, b1, w2, b2, w3, b3, w4, b4, w5, b5, alphas) = params
    return (
        jnp.asarray(alphas, jnp.float32),            # (4,)      SMEM slopes
        w1.T.astype(jnp.float32),                    # (256, 3)
        b1.T.astype(jnp.float32),                    # (256, 1)
        w2.T.astype(jnp.bfloat16), b2.T.astype(jnp.float32),
        w3.T.astype(jnp.bfloat16), b3.T.astype(jnp.float32),
        w4.T.astype(jnp.bfloat16), b4.T.astype(jnp.float32),
        w5.T.astype(jnp.bfloat16),                   # (1, 256)
        b5.T.astype(jnp.float32),                    # (1, 1)
    )


def _choose_tile_n(n, requested):
    # Multiple of 512 (vreg/MXU friendly), capped at 4096 (VMEM-safe everywhere
    # with a 48 MiB scoped limit, including v7x's 64 MiB/TC).
    t = max(512, min(4096, (int(requested) // 512) * 512))
    cover = ((n + 511) // 512) * 512          # smallest 512-multiple covering n
    t = min(t, cover)                         # don't over-pad tiny batches
    # Keep grid >= 2 (megacore / 2-TC sharding) whenever there are at least two
    # 512-wide tiles of work.
    if t >= cover and cover >= 1024:
        t = ((cover // 2 + 511) // 512) * 512
    return t


def kernelnn_forward(x, prep, *, tile_n=2048, fast_bf16=None):
    """x: (N, 3) float32, prep: output of prepare_params().  Returns (N, 1) f32."""
    if fast_bf16 is None:
        fast_bf16 = _has_bf16_vpu()

    N, f_in = x.shape
    (alphas, w1t, b1t, w2t, b2t, w3t, b3t, w4t, b4t, w5t, b5t) = prep

    tile_n = _choose_tile_n(N, tile_n)
    padded_n = ((N + tile_n - 1) // tile_n) * tile_n

    # Transposed, zero-padded input: batch on lanes.
    xT = x.astype(jnp.float32).T                           # (3, N)
    if padded_n != N:
        xT = jnp.pad(xT, ((0, 0), (0, padded_n - N)))

    grid = (padded_n // tile_n,)
    kernel = functools.partial(kernelnn_kernel, fast_bf16=fast_bf16)

    in_specs = [
        pl.BlockSpec(memory_space=pltpu.SMEM),             # alphas (4,)
        pl.BlockSpec((f_in, tile_n), lambda i: (0, i)),    # xT tile (lane-dense)
        _const_spec(w1t), _const_spec(b1t),
        _const_spec(w2t), _const_spec(b2t),
        _const_spec(w3t), _const_spec(b3t),
        _const_spec(w4t), _const_spec(b4t),
        _const_spec(w5t), _const_spec(b5t),
    ]
    out_spec = pl.BlockSpec((1, tile_n), lambda i: (0, i))

    out_t = pl.pallas_call(
        kernel,
        out_shape=jax.ShapeDtypeStruct((1, padded_n), jnp.float32),
        grid=grid,
        in_specs=in_specs,
        out_specs=out_spec,
        compiler_params=pltpu.CompilerParams(
            dimension_semantics=("parallel",),
            vmem_limit_bytes=48 * 1024 * 1024),
    )(alphas, xT, w1t, b1t, w2t, b2t, w3t, b3t, w4t, b4t, w5t, b5t)

    return out_t[0, :N][:, None]                           # (N, 1)


# ----------------------------------------------------------------------------
# Params + pure-JAX reference
# ----------------------------------------------------------------------------
def init_params(key):
    """Deterministic init mimicking torch.nn.Linear default U(-1/sqrt(fan_in), ..)."""
    dims = [(3, 256), (256, 256), (256, 256), (256, 256), (256, 1)]
    params = []
    keys = jax.random.split(key, 2 * len(dims))
    for idx, (fan_in, fan_out) in enumerate(dims):
        bound = 1.0 / jnp.sqrt(fan_in)
        w = jax.random.uniform(keys[2 * idx], (fan_in, fan_out),
                               minval=-bound, maxval=bound, dtype=jnp.float32)
        b = jax.random.uniform(keys[2 * idx + 1], (1, fan_out),
                               minval=-bound, maxval=bound, dtype=jnp.float32)
        params.extend([w, b])
    # nn.PReLU() default: one shared slope of 0.25 per activation module.
    alphas = jnp.full((4,), 0.25, dtype=jnp.float32)
    params.append(alphas)
    return tuple(params)


def reference_forward(x, params):
    (w1, b1, w2, b2, w3, b3, w4, b4, w5, b5, alphas) = params
    h = x @ w1 + b1
    h = jnp.where(h >= 0, h, alphas[0] * h)
    h = h @ w2 + b2
    h = jnp.where(h >= 0, h, alphas[1] * h)
    h = h @ w3 + b3
    h = jnp.where(h >= 0, h, alphas[2] * h)
    h = h @ w4 + b4
    h = jnp.where(h >= 0, h, alphas[3] * h)
    return h @ w5 + b5


if __name__ == "__main__":
    key = jax.random.PRNGKey(0)
    pkey, xkey = jax.random.split(key)
    params = init_params(pkey)
    prep = prepare_params(params)        # one-time layout/dtype prep

    # N not a multiple of the tile to exercise the padding path; the tile clamp
    # picks tile_n=512 here so grid=(2,) and both v7x TensorCores get work.
    N = 1000
    x = jax.random.normal(xkey, (N, 3), dtype=jnp.float32)

    fast = _has_bf16_vpu()               # bf16 epilogue + MXU layer1 on v6e/v7x
    fwd = jax.jit(functools.partial(kernelnn_forward, tile_n=2048, fast_bf16=fast))

    out = jax.block_until_ready(fwd(x, prep))

    ref = reference_forward(x, params)
    assert out.shape == (N, 1)
    max_err = float(jnp.max(jnp.abs(out - ref)))
    # bf16 MXU operands (f32 accumulation) + bf16 epilogue on v6e/v7x vs pure-f32
    # reference.
    assert jnp.allclose(out, ref, atol=5e-2, rtol=5e-2), (
        f"mismatch vs reference, max abs err {max_err}")

    print("KERNEL_OK")
</pallas_src>

<mosaic_0001>
module attributes {stable_mosaic.version = 11 : i64} {
  func.func @kernelnn_kernel(%arg0: i32, %arg1: memref<4xf32, #tpu.memory_space<smem>>, %arg2: memref<3x512xf32, #tpu.memory_space<vmem>>, %arg3: memref<256x3xf32, #tpu.memory_space<vmem>>, %arg4: memref<256x1xf32, #tpu.memory_space<vmem>>, %arg5: memref<256x256xbf16, #tpu.memory_space<vmem>>, %arg6: memref<256x1xf32, #tpu.memory_space<vmem>>, %arg7: memref<256x256xbf16, #tpu.memory_space<vmem>>, %arg8: memref<256x1xf32, #tpu.memory_space<vmem>>, %arg9: memref<256x256xbf16, #tpu.memory_space<vmem>>, %arg10: memref<256x1xf32, #tpu.memory_space<vmem>>, %arg11: memref<1x256xbf16, #tpu.memory_space<vmem>>, %arg12: memref<1x1xf32, #tpu.memory_space<vmem>>, %arg13: memref<1x512xf32, #tpu.memory_space<vmem>>) attributes {dimension_semantics = [#tpu.dimension_semantics<parallel>], iteration_bounds = array<i64: 2>, scalar_prefetch = 0 : i64, scratch_operands = 0 : i64, tpu.core_type = #tpu.core_type<tc>, window_params = [{transform_indices = @transform_0, window_bounds = array<i64: 4>}, {transform_indices = @transform_1, window_bounds = array<i64: 3, 512>}, {pipeline_mode = #tpu.pipeline_mode<synchronous>, transform_indices = @transform_2, window_bounds = array<i64: 256, 3>}, {pipeline_mode = #tpu.pipeline_mode<synchronous>, transform_indices = @transform_3, window_bounds = array<i64: 256, 1>}, {pipeline_mode = #tpu.pipeline_mode<synchronous>, transform_indices = @transform_4, window_bounds = array<i64: 256, 256>}, {pipeline_mode = #tpu.pipeline_mode<synchronous>, transform_indices = @transform_5, window_bounds = array<i64: 256, 1>}, {pipeline_mode = #tpu.pipeline_mode<synchronous>, transform_indices = @transform_6, window_bounds = array<i64: 256, 256>}, {pipeline_mode = #tpu.pipeline_mode<synchronous>, transform_indices = @transform_7, window_bounds = array<i64: 256, 1>}, {pipeline_mode = #tpu.pipeline_mode<synchronous>, transform_indices = @transform_8, window_bounds = array<i64: 256, 256>}, {pipeline_mode = #tpu.pipeline_mode<synchronous>, transform_indices = @transform_9, window_bounds = array<i64: 256, 1>}, {pipeline_mode = #tpu.pipeline_mode<synchronous>, transform_indices = @transform_10, window_bounds = array<i64: 1, 256>}, {pipeline_mode = #tpu.pipeline_mode<synchronous>, transform_indices = @transform_11, window_bounds = array<i64: 1, 1>}, {transform_indices = @transform_12, window_bounds = array<i64: 1, 512>}]} {
    %c0 = arith.constant 0 : index
    %0 = memref.load %arg1[%c0] : memref<4xf32, #tpu.memory_space<smem>>
    %c1 = arith.constant 1 : index
    %1 = memref.load %arg1[%c1] : memref<4xf32, #tpu.memory_space<smem>>
    %c2 = arith.constant 2 : index
    %2 = memref.load %arg1[%c2] : memref<4xf32, #tpu.memory_space<smem>>
    %c3 = arith.constant 3 : index
    %3 = memref.load %arg1[%c3] : memref<4xf32, #tpu.memory_space<smem>>
    %c0_0 = arith.constant 0 : index
    %c0_1 = arith.constant 0 : index
    %4 = vector.load %arg2[%c0_0, %c0_1] : memref<3x512xf32, #tpu.memory_space<vmem>>, vector<3x512xf32>
    %c0_2 = arith.constant 0 : index
    %c0_3 = arith.constant 0 : index
    %5 = vector.load %arg3[%c0_2, %c0_3] : memref<256x3xf32, #tpu.memory_space<vmem>>, vector<256x3xf32>
    %6 = vector.extract_strided_slice %5 {offsets = [0, 0], sizes = [256, 1], strides = [1, 1]} : vector<256x3xf32> to vector<256x1xf32>
    %7 = vector.extract_strided_slice %4 {offsets = [0, 0], sizes = [1, 512], strides = [1, 1]} : vector<3x512xf32> to vector<1x512xf32>
    %8 = vector.broadcast %6 : vector<256x1xf32> to vector<256x512xf32>
    %9 = vector.broadcast %7 : vector<1x512xf32> to vector<256x512xf32>
    %10 = arith.mulf %8, %9 : vector<256x512xf32>
    %11 = vector.extract_strided_slice %5 {offsets = [0, 1], sizes = [256, 1], strides = [1, 1]} : vector<256x3xf32> to vector<256x1xf32>
    %12 = vector.extract_strided_slice %4 {offsets = [1, 0], sizes = [1, 512], strides = [1, 1]} : vector<3x512xf32> to vector<1x512xf32>
    %13 = vector.broadcast %11 : vector<256x1xf32> to vector<256x512xf32>
    %14 = vector.broadcast %12 : vector<1x512xf32> to vector<256x512xf32>
    %15 = arith.mulf %13, %14 : vector<256x512xf32>
    %16 = arith.addf %10, %15 : vector<256x512xf32>
    %17 = vector.extract_strided_slice %5 {offsets = [0, 2], sizes = [256, 1], strides = [1, 1]} : vector<256x3xf32> to vector<256x1xf32>
    %18 = vector.extract_strided_slice %4 {offsets = [2, 0], sizes = [1, 512], strides = [1, 1]} : vector<3x512xf32> to vector<1x512xf32>
    %19 = vector.broadcast %17 : vector<256x1xf32> to vector<256x512xf32>
    %20 = vector.broadcast %18 : vector<1x512xf32> to vector<256x512xf32>
    %21 = arith.mulf %19, %20 : vector<256x512xf32>
    %22 = arith.addf %16, %21 : vector<256x512xf32>
    %c0_4 = arith.constant 0 : index
    %c0_5 = arith.constant 0 : index
    %23 = vector.load %arg4[%c0_4, %c0_5] : memref<256x1xf32, #tpu.memory_space<vmem>>, vector<256x1xf32>
    %24 = vector.broadcast %23 : vector<256x1xf32> to vector<256x512xf32>
    %25 = arith.addf %22, %24 : vector<256x512xf32>
    %cst = arith.constant 0.000000e+00 : f32
    %26 = vector.broadcast %cst : f32 to vector<256x512xf32>
    %27 = arith.cmpf oge, %25, %26 : vector<256x512xf32>
    %28 = vector.broadcast %0 : f32 to vector<256x512xf32>
    %29 = arith.mulf %28, %25 : vector<256x512xf32>
    %30 = arith.select %27, %25, %29 : vector<256x512xi1>, vector<256x512xf32>
    %31 = arith.truncf %30 : vector<256x512xf32> to vector<256x512xbf16>
    %c0_6 = arith.constant 0 : index
    %c0_7 = arith.constant 0 : index
    %32 = vector.load %arg5[%c0_6, %c0_7] : memref<256x256xbf16, #tpu.memory_space<vmem>>, vector<256x256xbf16>
    %cst_8 = arith.constant dense<0.000000e+00> : vector<256x512xf32>
    %33 = tpu.matmul %32, %31, %cst_8 {dimension_numbers = #tpu.dot_dimension_numbers<[1], [0], [0], [1], [0, 0, 1, 1], [], []>} : vector<256x256xbf16>, vector<256x512xbf16>, vector<256x512xf32> -> vector<256x512xf32>
    %c0_9 = arith.constant 0 : index
    %c0_10 = arith.constant 0 : index
    %34 = vector.load %arg6[%c0_9, %c0_10] : memref<256x1xf32, #tpu.memory_space<vmem>>, vector<256x1xf32>
    %35 = vector.broadcast %34 : vector<256x1xf32> to vector<256x512xf32>
    %36 = arith.addf %33, %35 : vector<256x512xf32>
    %cst_11 = arith.constant 0.000000e+00 : f32
    %37 = vector.broadcast %cst_11 : f32 to vector<256x512xf32>
    %38 = arith.cmpf oge, %36, %37 : vector<256x512xf32>
    %39 = vector.broadcast %1 : f32 to vector<256x512xf32>
    %40 = arith.mulf %39, %36 : vector<256x512xf32>
    %41 = arith.select %38, %36, %40 : vector<256x512xi1>, vector<256x512xf32>
    %42 = arith.truncf %41 : vector<256x512xf32> to vector<256x512xbf16>
    %c0_12 = arith.constant 0 : index
    %c0_13 = arith.constant 0 : index
    %43 = vector.load %arg7[%c0_12, %c0_13] : memref<256x256xbf16, #tpu.memory_space<vmem>>, vector<256x256xbf16>
    %cst_14 = arith.constant dense<0.000000e+00> : vector<256x512xf32>
    %44 = tpu.matmul %43, %42, %cst_14 {dimension_numbers = #tpu.dot_dimension_numbers<[1], [0], [0], [1], [0, 0, 1, 1], [], []>} : vector<256x256xbf16>, vector<256x512xbf16>, vector<256x512xf32> -> vector<256x512xf32>
    %c0_15 = arith.constant 0 : index
    %c0_16 = arith.constant 0 : index
    %45 = vector.load %arg8[%c0_15, %c0_16] : memref<256x1xf32, #tpu.memory_space<vmem>>, vector<256x1xf32>
    %46 = vector.broadcast %45 : vector<256x1xf32> to vector<256x512xf32>
    %47 = arith.addf %44, %46 : vector<256x512xf32>
    %cst_17 = arith.constant 0.000000e+00 : f32
    %48 = vector.broadcast %cst_17 : f32 to vector<256x512xf32>
    %49 = arith.cmpf oge, %47, %48 : vector<256x512xf32>
    %50 = vector.broadcast %2 : f32 to vector<256x512xf32>
    %51 = arith.mulf %50, %47 : vector<256x512xf32>
    %52 = arith.select %49, %47, %51 : vector<256x512xi1>, vector<256x512xf32>
    %53 = arith.truncf %52 : vector<256x512xf32> to vector<256x512xbf16>
    %c0_18 = arith.constant 0 : index
    %c0_19 = arith.constant 0 : index
    %54 = vector.load %arg9[%c0_18, %c0_19] : memref<256x256xbf16, #tpu.memory_space<vmem>>, vector<256x256xbf16>
    %cst_20 = arith.constant dense<0.000000e+00> : vector<256x512xf32>
    %55 = tpu.matmul %54, %53, %cst_20 {dimension_numbers = #tpu.dot_dimension_numbers<[1], [0], [0], [1], [0, 0, 1, 1], [], []>} : vector<256x256xbf16>, vector<256x512xbf16>, vector<256x512xf32> -> vector<256x512xf32>
    %c0_21 = arith.constant 0 : index
    %c0_22 = arith.constant 0 : index
    %56 = vector.load %arg10[%c0_21, %c0_22] : memref<256x1xf32, #tpu.memory_space<vmem>>, vector<256x1xf32>
    %57 = vector.broadcast %56 : vector<256x1xf32> to vector<256x512xf32>
    %58 = arith.addf %55, %57 : vector<256x512xf32>
    %cst_23 = arith.constant 0.000000e+00 : f32
    %59 = vector.broadcast %cst_23 : f32 to vector<256x512xf32>
    %60 = arith.cmpf oge, %58, %59 : vector<256x512xf32>
    %61 = vector.broadcast %3 : f32 to vector<256x512xf32>
    %62 = arith.mulf %61, %58 : vector<256x512xf32>
    %63 = arith.select %60, %58, %62 : vector<256x512xi1>, vector<256x512xf32>
    %64 = arith.truncf %63 : vector<256x512xf32> to vector<256x512xbf16>
    %c0_24 = arith.constant 0 : index
    %c0_25 = arith.constant 0 : index
    %65 = vector.load %arg11[%c0_24, %c0_25] : memref<1x256xbf16, #tpu.memory_space<vmem>>, vector<1x256xbf16>
    %cst_26 = arith.constant dense<0.000000e+00> : vector<1x512xf32>
    %66 = tpu.matmul %65, %64, %cst_26 {dimension_numbers = #tpu.dot_dimension_numbers<[1], [0], [0], [1], [0, 0, 1, 1], [], []>} : vector<1x256xbf16>, vector<256x512xbf16>, vector<1x512xf32> -> vector<1x512xf32>
    %c0_27 = arith.constant 0 : index
    %c0_28 = arith.constant 0 : index
    %67 = vector.load %arg12[%c0_27, %c0_28] : memref<1x1xf32, #tpu.memory_space<vmem>>, vector<1x1xf32>
    %68 = vector.broadcast %67 : vector<1x1xf32> to vector<1x512xf32>
    %69 = arith.addf %66, %68 : vector<1x512xf32>
    %c0_29 = arith.constant 0 : index
    %c0_30 = arith.constant 0 : index
    %70 = vector.load %arg13[%c0_29, %c0_30] : memref<1x512xf32, #tpu.memory_space<vmem>>, vector<1x512xf32>
    tpu.vector_store %arg13[%c0_29, %c0_30], %69 {strides = array<i32>} : memref<1x512xf32, #tpu.memory_space<vmem>>, vector<1x512xf32>,
    return
  }
  func.func @transform_0(%arg0: i32) -> i32 {
    %c0_i32 = arith.constant 0 : i32
    %c0_i32_0 = arith.constant 0 : i32
    return %c0_i32 : i32
  }
  func.func @transform_1(%arg0: i32) -> (i32, i32) {
    %c0_i32 = arith.constant 0 : i32
    %c0_i32_0 = arith.constant 0 : i32
    return %c0_i32, %arg0 : i32, i32
  }
  func.func @transform_2(%arg0: i32) -> (i32, i32) {
    %c0_i32 = arith.constant 0 : i32
    %c0_i32_0 = arith.constant 0 : i32
    %c0_i32_1 = arith.constant 0 : i32
    return %c0_i32, %c0_i32_0 : i32, i32
  }
  func.func @transform_3(%arg0: i32) -> (i32, i32) {
    %c0_i32 = arith.constant 0 : i32
    %c0_i32_0 = arith.constant 0 : i32
    %c0_i32_1 = arith.constant 0 : i32
    return %c0_i32, %c0_i32_0 : i32, i32
  }
  func.func @transform_4(%arg0: i32) -> (i32, i32) {
    %c0_i32 = arith.constant 0 : i32
    %c0_i32_0 = arith.constant 0 : i32
    %c0_i32_1 = arith.constant 0 : i32
    return %c0_i32, %c0_i32_0 : i32, i32
  }
  func.func @transform_5(%arg0: i32) -> (i32, i32) {
    %c0_i32 = arith.constant 0 : i32
    %c0_i32_0 = arith.constant 0 : i32
    %c0_i32_1 = arith.constant 0 : i32
    return %c0_i32, %c0_i32_0 : i32, i32
  }
  func.func @transform_6(%arg0: i32) -> (i32, i32) {
    %c0_i32 = arith.constant 0 : i32
    %c0_i32_0 = arith.constant 0 : i32
    %c0_i32_1 = arith.constant 0 : i32
    return %c0_i32, %c0_i32_0 : i32, i32
  }
  func.func @transform_7(%arg0: i32) -> (i32, i32) {
    %c0_i32 = arith.constant 0 : i32
    %c0_i32_0 = arith.constant 0 : i32
    %c0_i32_1 = arith.constant 0 : i32
    return %c0_i32, %c0_i32_0 : i32, i32
  }
  func.func @transform_8(%arg0: i32) -> (i32, i32) {
    %c0_i32 = arith.constant 0 : i32
    %c0_i32_0 = arith.constant 0 : i32
    %c0_i32_1 = arith.constant 0 : i32
    return %c0_i32, %c0_i32_0 : i32, i32
  }
  func.func @transform_9(%arg0: i32) -> (i32, i32) {
    %c0_i32 = arith.constant 0 : i32
    %c0_i32_0 = arith.constant 0 : i32
    %c0_i32_1 = arith.constant 0 : i32
    return %c0_i32, %c0_i32_0 : i32, i32
  }
  func.func @transform_10(%arg0: i32) -> (i32, i32) {
    %c0_i32 = arith.constant 0 : i32
    %c0_i32_0 = arith.constant 0 : i32
    %c0_i32_1 = arith.constant 0 : i32
    return %c0_i32, %c0_i32_0 : i32, i32
  }
  func.func @transform_11(%arg0: i32) -> (i32, i32) {
    %c0_i32 = arith.constant 0 : i32
    %c0_i32_0 = arith.constant 0 : i32
    %c0_i32_1 = arith.constant 0 : i32
    return %c0_i32, %c0_i32_0 : i32, i32
  }
  func.func @transform_12(%arg0: i32) -> (i32, i32) {
    %c0_i32 = arith.constant 0 : i32
    %c0_i32_0 = arith.constant 0 : i32
    return %c0_i32, %arg0 : i32, i32
  }
}

</mosaic_0001>

<llo_original>
// kernel: kernelnn_forward.1
$region0: #{kernelnn_forward.1}
  #allocation0 [shape = 'u32[]', space=smem, size = 0x4, offset = 0x4, fixed_abs, tag = 'smem constant byte address 0x4 - core index']
  #allocation1 [shape = 'u32[144,128]{1,0:T(1,128)}', space=vmem, size = 0x12000, scoped, tag = 'internal scratch']
  #allocation2 [shape = 'f32[1,1]{1,0:T(1,128)S(1)}', space=vmem, size = 0x200, scoped, tag = 'scoped memory for kernelnn_forward.1']
  %s0 = inlined_call_operand.vmem [shape: f32[4], index: 0, kind: input, shape index: {}]
  %s1 = inlined_call_operand.vmem [shape: f32[3,1024], index: 1, kind: input, shape index: {}]
  %s2 = inlined_call_operand.vmem [shape: f32[256,3], index: 2, kind: input, shape index: {}]
  %s3 = inlined_call_operand.vmem [shape: f32[256,1], index: 3, kind: input, shape index: {}]
  %s4 = inlined_call_operand.vmem [shape: bf16[256,256], index: 4, kind: input, shape index: {}]
  %s5 = inlined_call_operand.vmem [shape: f32[256,1], index: 5, kind: input, shape index: {}]
  %s6 = inlined_call_operand.vmem [shape: bf16[256,256], index: 6, kind: input, shape index: {}]
  %s7 = inlined_call_operand.vmem [shape: f32[256,1], index: 7, kind: input, shape index: {}]
  %s8 = inlined_call_operand.vmem [shape: bf16[256,256], index: 8, kind: input, shape index: {}]
  %s9 = inlined_call_operand.vmem [shape: f32[256,1], index: 9, kind: input, shape index: {}]
  %s10 = inlined_call_operand.vmem [shape: bf16[1,256], index: 10, kind: input, shape index: {}]
  %s11 = inlined_call_operand.<no memory space> [shape: f32[1,1], index: 11, kind: input, shape index: {}]
  %s12 = inlined_call_operand.vmem [shape: f32[1,1024], index: 12, kind: output, shape index: {}]
  %s13 = sld [smem:[#allocation0]]
  $region85: #{kernelnn_forward.1} parent=0
    _
  %s15 = ssub.s32 1, %s13
  %s16 = scalar_select 0, %s15, %s13
  %v17 = vstv %s11
  %18 = vst [vmem:[#allocation2] sm:$0x1] %v17
  $region1: #{kernelnn_forward.1} parent=0
    #allocation3 [shape = 'u8[512]{0}', space=smem, size = 0x200, scoped, tag = 'input window, operand 0, single buffered']
    #allocation4 [shape = 's32[2]{0}', space=sflag, size = 0x8, scoped, tag = 'scoped memory for kernelnn_forward.1']
    %19 = vsyncpa [#allocation4], 0
    loop: start=0, step=1, limit=4
    $region2: #{kernelnn_forward.1} parent=1 // loop_pre_header
      _
    $region3: #{kernelnn_forward.1} parent=1 // loop_header
      %s21 = sphi 0, %s25
      %p22 = scmp.ge.s32.totalorder %s21, 4
      %s29 = sphi 0, %s29
      %s31 = sphi 0, %s29
      %s32 = sphi 0, %s31
      %s46 = sphi 0, %s32
      %s52 = sphi 0, %s54
      %s55 = sphi 0, %s52
      %s56 = sphi 0, %s55
      %s72 = sphi 0, %s56
      %s76 = sphi 0, %s76
      %s78 = sphi 0, %s76
      %s79 = sphi 0, %s78
      %s93 = sphi 0, %s79
      %s97 = sphi 0, %s97
      %s99 = sphi 0, %s97
      %s100 = sphi 0, %s99
      %s114 = sphi 0, %s100
      %s118 = sphi 0, %s118
      %s120 = sphi 0, %s118
      %s121 = sphi 0, %s120
      %s135 = sphi 0, %s121
      %s139 = sphi 0, %s139
      %s141 = sphi 0, %s139
      %s142 = sphi 0, %s141
      %s156 = sphi 0, %s142
      %s160 = sphi 0, %s160
      %s162 = sphi 0, %s160
      %s163 = sphi 0, %s162
      %s177 = sphi 0, %s163
      %s181 = sphi 0, %s181
      %s183 = sphi 0, %s181
      %s184 = sphi 0, %s183
      %s198 = sphi 0, %s184
      %s202 = sphi 0, %s202
      %s204 = sphi 0, %s202
      %s205 = sphi 0, %s204
      %s219 = sphi 0, %s205
      %s223 = sphi 0, %s223
      %s225 = sphi 0, %s223
      %s226 = sphi 0, %s225
      %s240 = sphi 0, %s226
      %s244 = sphi 0, %s244
      %s246 = sphi 0, %s244
      %s247 = sphi 0, %s246
      %s261 = sphi 0, %s247
      %s265 = sphi 0, %s265
      %s267 = sphi 0, %s265
      %s268 = sphi 0, %s267
      %s282 = sphi 0, %s268
      %s288 = sphi 0, %s290
      %s291 = sphi 0, %s288
      %s292 = sphi 0, %s291
      %s308 = sphi 0, %s292
    $region4: #{kernelnn_forward.1} parent=1 // loop_header_branch
      %24 = sbr.rel (%p22) target = $region8
    $region5: #{kernelnn_forward.1} parent=1 // loop_body
      %s26 = ssub.s32 %s21, 1
      %s27 = ssub.s32 %s21, 2
      %s28 = sadd.s32 %s21, 1
      %s30 = sadd.s32 %s29, 1
      %p33 = scmp.eq.s32.totalorder %s21, 1
      %p34 = scmp.ne.s32.totalorder %s29, %s31
      %p35 = scmp.eq.s32.totalorder %s21, 0
      %p36 = por %p34, %p35
      %p37 = scmp.ne.s32.totalorder %s29, %s31
      %p38 = scmp.eq.s32.totalorder %s26, 1
      %p39 = por %p37, %p38
      %p40 = scmp.ne.s32.totalorder %s31, %s32
      %p41 = scmp.eq.s32.totalorder %s26, 0
      %p42 = por %p40, %p41
      %p43 = scmp.ne.s32.totalorder %s31, %s32
      %p44 = scmp.eq.s32.totalorder %s27, 1
      %p45 = por %p43, %p44
      %p47 = scmp.ne.s32.totalorder %s32, %s46
      %p48 = scmp.eq.s32.totalorder %s27, 0
      %p49 = por %p47, %p48
      %s50 = ssub.s32 %s21, %s28
      %p51 = scmp.eq.s32.totalorder %s50, 0
      %s53 = sadd.s32 %s52, 1
      %s54 = scalar_select %p51, %s52, %s53
      %p57 = pneg %p51
      %p58 = scmp.eq.s32.totalorder %s21, 1
      %p59 = por %p57, %p58
      %p60 = scmp.ne.s32.totalorder %s52, %s55
      %p61 = scmp.eq.s32.totalorder %s21, 0
      %p62 = por %p60, %p61
      %p63 = scmp.ne.s32.totalorder %s52, %s55
      %p64 = scmp.eq.s32.totalorder %s26, 1
      %p65 = por %p63, %p64
      %p66 = scmp.ne.s32.totalorder %s55, %s56
      %p67 = scmp.eq.s32.totalorder %s26, 0
      %p68 = por %p66, %p67
      %p69 = scmp.ne.s32.totalorder %s55, %s56
      %p70 = scmp.eq.s32.totalorder %s27, 1
      %p71 = por %p69, %p70
      %p73 = scmp.ne.s32.totalorder %s56, %s72
      %p74 = scmp.eq.s32.totalorder %s27, 0
      %p75 = por %p73, %p74
      %s77 = sadd.s32 %s76, 1
      %p80 = scmp.eq.s32.totalorder %s21, 1
      %p81 = scmp.ne.s32.totalorder %s76, %s78
      %p82 = scmp.eq.s32.totalorder %s21, 0
      %p83 = por %p81, %p82
      %p84 = scmp.ne.s32.totalorder %s76, %s78
      %p85 = scmp.eq.s32.totalorder %s26, 1
      %p86 = por %p84, %p85
      %p87 = scmp.ne.s32.totalorder %s78, %s79
      %p88 = scmp.eq.s32.totalorder %s26, 0
      %p89 = por %p87, %p88
      %p90 = scmp.ne.s32.totalorder %s78, %s79
      %p91 = scmp.eq.s32.totalorder %s27, 1
      %p92 = por %p90, %p91
      %p94 = scmp.ne.s32.totalorder %s79, %s93
      %p95 = scmp.eq.s32.totalorder %s27, 0
      %p96 = por %p94, %p95
      %s98 = sadd.s32 %s97, 1
      %p101 = scmp.eq.s32.totalorder %s21, 1
      %p102 = scmp.ne.s32.totalorder %s97, %s99
      %p103 = scmp.eq.s32.totalorder %s21, 0
      %p104 = por %p102, %p103
      %p105 = scmp.ne.s32.totalorder %s97, %s99
      %p106 = scmp.eq.s32.totalorder %s26, 1
      %p107 = por %p105, %p106
      %p108 = scmp.ne.s32.totalorder %s99, %s100
      %p109 = scmp.eq.s32.totalorder %s26, 0
      %p110 = por %p108, %p109
      %p111 = scmp.ne.s32.totalorder %s99, %s100
      %p112 = scmp.eq.s32.totalorder %s27, 1
      %p113 = por %p111, %p112
      %p115 = scmp.ne.s32.totalorder %s100, %s114
      %p116 = scmp.eq.s32.totalorder %s27, 0
      %p117 = por %p115, %p116
      %s119 = sadd.s32 %s118, 1
      %p122 = scmp.eq.s32.totalorder %s21, 1
      %p123 = scmp.ne.s32.totalorder %s118, %s120
      %p124 = scmp.eq.s32.totalorder %s21, 0
      %p125 = por %p123, %p124
      %p126 = scmp.ne.s32.totalorder %s118, %s120
      %p127 = scmp.eq.s32.totalorder %s26, 1
      %p128 = por %p126, %p127
      %p129 = scmp.ne.s32.totalorder %s120, %s121
      %p130 = scmp.eq.s32.totalorder %s26, 0
      %p131 = por %p129, %p130
      %p132 = scmp.ne.s32.totalorder %s120, %s121
      %p133 = scmp.eq.s32.totalorder %s27, 1
      %p134 = por %p132, %p133
      %p136 = scmp.ne.s32.totalorder %s121, %s135
      %p137 = scmp.eq.s32.totalorder %s27, 0
      %p138 = por %p136, %p137
      %s140 = sadd.s32 %s139, 1
      %p143 = scmp.eq.s32.totalorder %s21, 1
      %p144 = scmp.ne.s32.totalorder %s139, %s141
      %p145 = scmp.eq.s32.totalorder %s21, 0
      %p146 = por %p144, %p145
      %p147 = scmp.ne.s32.totalorder %s139, %s141
      %p148 = scmp.eq.s32.totalorder %s26, 1
      %p149 = por %p147, %p148
      %p150 = scmp.ne.s32.totalorder %s141, %s142
      %p151 = scmp.eq.s32.totalorder %s26, 0
      %p152 = por %p150, %p151
      %p153 = scmp.ne.s32.totalorder %s141, %s142
      %p154 = scmp.eq.s32.totalorder %s27, 1
      %p155 = por %p153, %p154
      %p157 = scmp.ne.s32.totalorder %s142, %s156
      %p158 = scmp.eq.s32.totalorder %s27, 0
      %p159 = por %p157, %p158
      %s161 = sadd.s32 %s160, 1
      %p164 = scmp.eq.s32.totalorder %s21, 1
      %p165 = scmp.ne.s32.totalorder %s160, %s162
      %p166 = scmp.eq.s32.totalorder %s21, 0
      %p167 = por %p165, %p166
      %p168 = scmp.ne.s32.totalorder %s160, %s162
      %p169 = scmp.eq.s32.totalorder %s26, 1
      %p170 = por %p168, %p169
      %p171 = scmp.ne.s32.totalorder %s162, %s163
      %p172 = scmp.eq.s32.totalorder %s26, 0
      %p173 = por %p171, %p172
      %p174 = scmp.ne.s32.totalorder %s162, %s163
      %p175 = scmp.eq.s32.totalorder %s27, 1
      %p176 = por %p174, %p175
      %p178 = scmp.ne.s32.totalorder %s163, %s177
      %p179 = scmp.eq.s32.totalorder %s27, 0
      %p180 = por %p178, %p179
      %s182 = sadd.s32 %s181, 1
      %p185 = scmp.eq.s32.totalorder %s21, 1
      %p186 = scmp.ne.s32.totalorder %s181, %s183
      %p187 = scmp.eq.s32.totalorder %s21, 0
      %p188 = por %p186, %p187
      %p189 = scmp.ne.s32.totalorder %s181, %s183
      %p190 = scmp.eq.s32.totalorder %s26, 1
      %p191 = por %p189, %p190
      %p192 = scmp.ne.s32.totalorder %s183, %s184
      %p193 = scmp.eq.s32.totalorder %s26, 0
      %p194 = por %p192, %p193
      %p195 = scmp.ne.s32.totalorder %s183, %s184
      %p196 = scmp.eq.s32.totalorder %s27, 1
      %p197 = por %p195, %p196
      %p199 = scmp.ne.s32.totalorder %s184, %s198
      %p200 = scmp.eq.s32.totalorder %s27, 0
      %p201 = por %p199, %p200
      %s203 = sadd.s32 %s202, 1
      %p206 = scmp.eq.s32.totalorder %s21, 1
      %p207 = scmp.ne.s32.totalorder %s202, %s204
      %p208 = scmp.eq.s32.totalorder %s21, 0
      %p209 = por %p207, %p208
      %p210 = scmp.ne.s32.totalorder %s202, %s204
      %p211 = scmp.eq.s32.totalorder %s26, 1
      %p212 = por %p210, %p211
      %p213 = scmp.ne.s32.totalorder %s204, %s205
      %p214 = scmp.eq.s32.totalorder %s26, 0
      %p215 = por %p213, %p214
      %p216 = scmp.ne.s32.totalorder %s204, %s205
      %p217 = scmp.eq.s32.totalorder %s27, 1
      %p218 = por %p216, %p217
      %p220 = scmp.ne.s32.totalorder %s205, %s219
      %p221 = scmp.eq.s32.totalorder %s27, 0
      %p222 = por %p220, %p221
      %s224 = sadd.s32 %s223, 1
      %p227 = scmp.eq.s32.totalorder %s21, 1
      %p228 = scmp.ne.s32.totalorder %s223, %s225
      %p229 = scmp.eq.s32.totalorder %s21, 0
      %p230 = por %p228, %p229
      %p231 = scmp.ne.s32.totalorder %s223, %s225
      %p232 = scmp.eq.s32.totalorder %s26, 1
      %p233 = por %p231, %p232
      %p234 = scmp.ne.s32.totalorder %s225, %s226
      %p235 = scmp.eq.s32.totalorder %s26, 0
      %p236 = por %p234, %p235
      %p237 = scmp.ne.s32.totalorder %s225, %s226
      %p238 = scmp.eq.s32.totalorder %s27, 1
      %p239 = por %p237, %p238
      %p241 = scmp.ne.s32.totalorder %s226, %s240
      %p242 = scmp.eq.s32.totalorder %s27, 0
      %p243 = por %p241, %p242
      %s245 = sadd.s32 %s244, 1
      %p248 = scmp.eq.s32.totalorder %s21, 1
      %p249 = scmp.ne.s32.totalorder %s244, %s246
      %p250 = scmp.eq.s32.totalorder %s21, 0
      %p251 = por %p249, %p250
      %p252 = scmp.ne.s32.totalorder %s244, %s246
      %p253 = scmp.eq.s32.totalorder %s26, 1
      %p254 = por %p252, %p253
      %p255 = scmp.ne.s32.totalorder %s246, %s247
      %p256 = scmp.eq.s32.totalorder %s26, 0
      %p257 = por %p255, %p256
      %p258 = scmp.ne.s32.totalorder %s246, %s247
      %p259 = scmp.eq.s32.totalorder %s27, 1
      %p260 = por %p258, %p259
      %p262 = scmp.ne.s32.totalorder %s247, %s261
      %p263 = scmp.eq.s32.totalorder %s27, 0
      %p264 = por %p262, %p263
      %s266 = sadd.s32 %s265, 1
      %p269 = scmp.eq.s32.totalorder %s21, 1
      %p270 = scmp.ne.s32.totalorder %s265, %s267
      %p271 = scmp.eq.s32.totalorder %s21, 0
      %p272 = por %p270, %p271
      %p273 = scmp.ne.s32.totalorder %s265, %s267
      %p274 = scmp.eq.s32.totalorder %s26, 1
      %p275 = por %p273, %p274
      %p276 = scmp.ne.s32.totalorder %s267, %s268
      %p277 = scmp.eq.s32.totalorder %s26, 0
      %p278 = por %p276, %p277
      %p279 = scmp.ne.s32.totalorder %s267, %s268
      %p280 = scmp.eq.s32.totalorder %s27, 1
      %p281 = por %p279, %p280
      %p283 = scmp.ne.s32.totalorder %s268, %s282
      %p284 = scmp.eq.s32.totalorder %s27, 0
      %p285 = por %p283, %p284
      %s286 = ssub.s32 %s21, %s28
      %p287 = scmp.eq.s32.totalorder %s286, 0
      %s289 = sadd.s32 %s288, 1
      %s290 = scalar_select %p287, %s288, %s289
      %p293 = pneg %p287
      %p294 = scmp.eq.s32.totalorder %s21, 1
      %p295 = por %p293, %p294
      %p296 = scmp.ne.s32.totalorder %s288, %s291
      %p297 = scmp.eq.s32.totalorder %s21, 0
      %p298 = por %p296, %p297
      %p299 = scmp.ne.s32.totalorder %s288, %s291
      %p300 = scmp.eq.s32.totalorder %s26, 1
      %p301 = por %p299, %p300
      %p302 = scmp.ne.s32.totalorder %s291, %s292
      %p303 = scmp.eq.s32.totalorder %s26, 0
      %p304 = por %p302, %p303
      %p305 = scmp.ne.s32.totalorder %s291, %s292
      %p306 = scmp.eq.s32.totalorder %s27, 1
      %p307 = por %p305, %p306
      %p309 = scmp.ne.s32.totalorder %s292, %s308
      %p310 = scmp.eq.s32.totalorder %s27, 0
      %p311 = por %p309, %p310
      %p312 = scmp.le.s32.totalorder 1, %s21
      %p313 = scmp.lt.s32.totalorder %s21, 3
      %p314 = pnand %p312, %p313
      %p315 = pneg %p314
      // Predicated region
      $region9: #{kernelnn_forward.1} parent=5 // pred_check
        _
      $region10: #{kernelnn_forward.1} parent=5 // pred_check_branch
        %317 = sbr.rel (%p314) target = $region12
      $region11: #{kernelnn_forward.1} parent=5 // pred_region
        %s318 = ssub.s32 %s21, 1
        // Predicated region
        $region13: #{kernelnn_forward.1} parent=11 // pred_check
          %p319 = pneg %p42
        $region14: #{kernelnn_forward.1} parent=11 // pred_check_branch
          %321 = sbr.rel (%p319) target = $region16
        $region15: #{kernelnn_forward.1} parent=11 // pred_region
          %s323 = ssub.s32 16, 16
          %324 = vsyncadd [#allocation4], %s323
          %s326 = sshll.u32 %s0, 4
          %s327 = int_to_ptr.vmem [resolvable:$true] %s326
          %329 = dma.vmem_to_smem %s327, 16, [#allocation3], [#allocation4]
        $region16: #{kernelnn_forward.1} parent=11 // pred_fallthru
          _
        // Predicated region
        $region17: #{kernelnn_forward.1} parent=11 // pred_check
          %p330 = pneg %p89
        $region18: #{kernelnn_forward.1} parent=11 // pred_check_branch
          %332 = sbr.rel (%p330) target = $region20
        $region19: #{kernelnn_forward.1} parent=11 // pred_region
          _
        $region20: #{kernelnn_forward.1} parent=11 // pred_fallthru
          _
        // Predicated region
        $region21: #{kernelnn_forward.1} parent=11 // pred_check
          %p333 = pneg %p110
        $region22: #{kernelnn_forward.1} parent=11 // pred_check_branch
          %335 = sbr.rel (%p333) target = $region24
        $region23: #{kernelnn_forward.1} parent=11 // pred_region
          _
        $region24: #{kernelnn_forward.1} parent=11 // pred_fallthru
          _
        // Predicated region
        $region25: #{kernelnn_forward.1} parent=11 // pred_check
          %p336 = pneg %p131
        $region26: #{kernelnn_forward.1} parent=11 // pred_check_branch
          %338 = sbr.rel (%p336) target = $region28
        $region27: #{kernelnn_forward.1} parent=11 // pred_region
          _
        $region28: #{kernelnn_forward.1} parent=11 // pred_fallthru
          _
        // Predicated region
        $region29: #{kernelnn_forward.1} parent=11 // pred_check
          %p339 = pneg %p152
        $region30: #{kernelnn_forward.1} parent=11 // pred_check_branch
          %341 = sbr.rel (%p339) target = $region32
        $region31: #{kernelnn_forward.1} parent=11 // pred_region
          _
        $region32: #{kernelnn_forward.1} parent=11 // pred_fallthru
          _
        // Predicated region
        $region33: #{kernelnn_forward.1} parent=11 // pred_check
          %p342 = pneg %p173
        $region34: #{kernelnn_forward.1} parent=11 // pred_check_branch
          %344 = sbr.rel (%p342) target = $region36
        $region35: #{kernelnn_forward.1} parent=11 // pred_region
          _
        $region36: #{kernelnn_forward.1} parent=11 // pred_fallthru
          _
        // Predicated region
        $region37: #{kernelnn_forward.1} parent=11 // pred_check
          %p345 = pneg %p194
        $region38: #{kernelnn_forward.1} parent=11 // pred_check_branch
          %347 = sbr.rel (%p345) target = $region40
        $region39: #{kernelnn_forward.1} parent=11 // pred_region
          _
        $region40: #{kernelnn_forward.1} parent=11 // pred_fallthru
          _
        // Predicated region
        $region41: #{kernelnn_forward.1} parent=11 // pred_check
          %p348 = pneg %p215
        $region42: #{kernelnn_forward.1} parent=11 // pred_check_branch
          %350 = sbr.rel (%p348) target = $region44
        $region43: #{kernelnn_forward.1} parent=11 // pred_region
          _
        $region44: #{kernelnn_forward.1} parent=11 // pred_fallthru
          _
        // Predicated region
        $region45: #{kernelnn_forward.1} parent=11 // pred_check
          %p351 = pneg %p236
        $region46: #{kernelnn_forward.1} parent=11 // pred_check_branch
          %353 = sbr.rel (%p351) target = $region48
        $region47: #{kernelnn_forward.1} parent=11 // pred_region
          _
        $region48: #{kernelnn_forward.1} parent=11 // pred_fallthru
          _
        // Predicated region
        $region49: #{kernelnn_forward.1} parent=11 // pred_check
          %p354 = pneg %p257
        $region50: #{kernelnn_forward.1} parent=11 // pred_check_branch
          %356 = sbr.rel (%p354) target = $region52
        $region51: #{kernelnn_forward.1} parent=11 // pred_region
          _
        $region52: #{kernelnn_forward.1} parent=11 // pred_fallthru
          _
        // Predicated region
        $region53: #{kernelnn_forward.1} parent=11 // pred_check
          %p357 = pneg %p278
        $region54: #{kernelnn_forward.1} parent=11 // pred_check_branch
          %359 = sbr.rel (%p357) target = $region56
        $region55: #{kernelnn_forward.1} parent=11 // pred_region
          _
        $region56: #{kernelnn_forward.1} parent=11 // pred_fallthru
          _
      $region12: #{kernelnn_forward.1} parent=5 // pred_fallthru
        _
      %p360 = scmp.lt.s32.totalorder %s21, 2
      // Predicated region
      $region57: #{kernelnn_forward.1} parent=5 // pred_check
        %p361 = pneg %p360
      $region58: #{kernelnn_forward.1} parent=5 // pred_check_branch
        %363 = sbr.rel (%p361) target = $region60
      $region59: #{kernelnn_forward.1} parent=5 // pred_region
        // Predicated region
        $region61: #{kernelnn_forward.1} parent=59 // pred_check
          %p364 = pneg %p62
        $region62: #{kernelnn_forward.1} parent=59 // pred_check_branch
          %366 = sbr.rel (%p364) target = $region64
        $region63: #{kernelnn_forward.1} parent=59 // pred_region
          %s367 = smul.u32 4, %s21
          %p368 = scmp.lt.s32.totalorder %s367, 7
          %s369 = scalar_select %p368, %s367, 7
          %s370 = smul.addr %s369, 4
          %s371 = scalar_lea.vmem %s1, %s370
          %s372 = smul.u32 4, %s21
        $region64: #{kernelnn_forward.1} parent=59 // pred_fallthru
          _
      $region60: #{kernelnn_forward.1} parent=5 // pred_fallthru
        _
      %p373 = scmp.le.s32.totalorder 1, %s21
      %p374 = scmp.lt.s32.totalorder %s21, 3
      %p375 = pnand %p373, %p374
      %p376 = pneg %p375
      // Predicated region
      $region65: #{kernelnn_forward.1} parent=5 // pred_check
        _
      $region66: #{kernelnn_forward.1} parent=5 // pred_check_branch
        %378 = sbr.rel (%p375) target = $region68
      $region67: #{kernelnn_forward.1} parent=5 // pred_region
        %s379 = ssub.s32 %s21, 1
        // Predicated region
        $region69: #{kernelnn_forward.1} parent=67 // pred_check
          %p380 = pneg %p42
        $region70: #{kernelnn_forward.1} parent=67 // pred_check_branch
          %382 = sbr.rel (%p380) target = $region72
        $region71: #{kernelnn_forward.1} parent=67 // pred_region
          %383 = dma.done [#allocation4], 16
        $region72: #{kernelnn_forward.1} parent=67 // pred_fallthru
          _
        %384 = sfence
        %p385 = pneg %p42
        %p386 = pneg %p39
        %s387 = smul.u32 4, %s26
        %p388 = scmp.lt.s32.totalorder %s387, 7
        %s389 = scalar_select %p388, %s387, 7
        %s390 = smul.addr %s389, 4
        %s391 = scalar_lea.vmem %s1, %s390
        %p392 = pneg %p68
        %p393 = pneg %p65
        %p394 = pneg %p89
        %p395 = pneg %p86
        %p396 = pneg %p110
        %p397 = pneg %p107
        %p398 = pneg %p131
        %p399 = pneg %p128
        %p400 = pneg %p152
        %p401 = pneg %p149
        %p402 = pneg %p173
        %p403 = pneg %p170
        %p404 = pneg %p194
        %p405 = pneg %p191
        %p406 = pneg %p215
        %p407 = pneg %p212
        %p408 = pneg %p236
        %p409 = pneg %p233
        %p410 = pneg %p257
        %p411 = pneg %p254
        %p412 = pneg %p278
        %p413 = pneg %p275
        %p414 = pneg %p304
        %p415 = pneg %p301
        %s416 = smul.u32 4, %s26
        %p417 = scmp.lt.s32.totalorder %s416, 7
        %s418 = scalar_select %p417, %s416, 7
        %s419 = scalar_lea.vmem %s12, %s418
        %s420 = smul.u32 4, %s26
        %p421 = scmp.lt.s32.totalorder %s420, 7
        %s422 = scalar_select %p421, %s420, 7
        %s423 = smul.addr %s422, 4
        %s424 = scalar_lea.vmem %s1, %s423
        %s425 = smul.u32 4, %s26
        %s426 = smul.u32 4, %s26
        %p427 = scmp.lt.s32.totalorder %s426, 7
        %s428 = scalar_select %p427, %s426, 7
        %s429 = scalar_lea.vmem %s12, %s428
        %s430 = smul.u32 4, %s26
        %s431 = sld [smem:[#allocation3]]
        %s432 = sld [smem:[#allocation3 + $0x1]]
        %s433 = sld [smem:[#allocation3 + $0x2]]
        %s434 = sld [smem:[#allocation3 + $0x3]]
        %v435 = vld [vmem:[%s424] sm:$0x77]
        %v436 = vld [vmem:[%s424 + $0x8] sm:$0x77]
        %v437 = vld [vmem:[%s2] sm:$0xff]
        %v438 = vld [vmem:[%s2 + $0x8] sm:$0xff]
        %v439 = vld [vmem:[%s2 + $0x10] sm:$0xff]
        %v440 = vld [vmem:[%s2 + $0x18] sm:$0xff]
        %v441 = vld [vmem:[%s2 + $0x20] sm:$0xff]
        %v442 = vld [vmem:[%s2 + $0x28] sm:$0xff]
        %v443 = vld [vmem:[%s2 + $0x30] sm:$0xff]
        %v444 = vld [vmem:[%s2 + $0x38] sm:$0xff]
        %v445 = vld [vmem:[%s2 + $0x40] sm:$0xff]
        %v446 = vld [vmem:[%s2 + $0x48] sm:$0xff]
        %v447 = vld [vmem:[%s2 + $0x50] sm:$0xff]
        %v448 = vld [vmem:[%s2 + $0x58] sm:$0xff]
        %v449 = vld [vmem:[%s2 + $0x60] sm:$0xff]
        %v450 = vld [vmem:[%s2 + $0x68] sm:$0xff]
        %v451 = vld [vmem:[%s2 + $0x70] sm:$0xff]
        %v452 = vld [vmem:[%s2 + $0x78] sm:$0xff]
        %v453 = vld [vmem:[%s2 + $0x80] sm:$0xff]
        %v454 = vld [vmem:[%s2 + $0x88] sm:$0xff]
        %v455 = vld [vmem:[%s2 + $0x90] sm:$0xff]
        %v456 = vld [vmem:[%s2 + $0x98] sm:$0xff]
        %v457 = vld [vmem:[%s2 + $0xa0] sm:$0xff]
        %v458 = vld [vmem:[%s2 + $0xa8] sm:$0xff]
        %v459 = vld [vmem:[%s2 + $0xb0] sm:$0xff]
        %v460 = vld [vmem:[%s2 + $0xb8] sm:$0xff]
        %v461 = vld [vmem:[%s2 + $0xc0] sm:$0xff]
        %v462 = vld [vmem:[%s2 + $0xc8] sm:$0xff]
        %v463 = vld [vmem:[%s2 + $0xd0] sm:$0xff]
        %v464 = vld [vmem:[%s2 + $0xd8] sm:$0xff]
        %v465 = vld [vmem:[%s2 + $0xe0] sm:$0xff]
        %v466 = vld [vmem:[%s2 + $0xe8] sm:$0xff]
        %v467 = vld [vmem:[%s2 + $0xf0] sm:$0xff]
        %v468 = vld [vmem:[%s2 + $0xf8] sm:$0xff]
        %470 = vset.pattern.permute.xlu0 0
        %471 = vperm.xlu0 %470, %v437
        %v472 = vpop.permute.xlu0 %471
        %475 = vset.pattern.permute.xlu0 0
        %476 = vperm.xlu0 %475, %v438
        %v477 = vpop.permute.xlu0 %476
        %480 = vset.pattern.permute.xlu0 0
        %481 = vperm.xlu0 %480, %v439
        %v482 = vpop.permute.xlu0 %481
        %485 = vset.pattern.permute.xlu0 0
        %486 = vperm.xlu0 %485, %v440
        %v487 = vpop.permute.xlu0 %486
        %490 = vset.pattern.permute.xlu0 0
        %491 = vperm.xlu0 %490, %v441
        %v492 = vpop.permute.xlu0 %491
        %495 = vset.pattern.permute.xlu0 0
        %496 = vperm.xlu0 %495, %v442
        %v497 = vpop.permute.xlu0 %496
        %500 = vset.pattern.permute.xlu0 0
        %501 = vperm.xlu0 %500, %v443
        %v502 = vpop.permute.xlu0 %501
        %505 = vset.pattern.permute.xlu0 0
        %506 = vperm.xlu0 %505, %v444
        %v507 = vpop.permute.xlu0 %506
        %510 = vset.pattern.permute.xlu0 0
        %511 = vperm.xlu0 %510, %v445
        %v512 = vpop.permute.xlu0 %511
        %515 = vset.pattern.permute.xlu0 0
        %516 = vperm.xlu0 %515, %v446
        %v517 = vpop.permute.xlu0 %516
        %520 = vset.pattern.permute.xlu0 0
        %521 = vperm.xlu0 %520, %v447
        %v522 = vpop.permute.xlu0 %521
        %525 = vset.pattern.permute.xlu0 0
        %526 = vperm.xlu0 %525, %v448
        %v527 = vpop.permute.xlu0 %526
        %530 = vset.pattern.permute.xlu0 0
        %531 = vperm.xlu0 %530, %v449
        %v532 = vpop.permute.xlu0 %531
        %535 = vset.pattern.permute.xlu0 0
        %536 = vperm.xlu0 %535, %v450
        %v537 = vpop.permute.xlu0 %536
        %540 = vset.pattern.permute.xlu0 0
        %541 = vperm.xlu0 %540, %v451
        %v542 = vpop.permute.xlu0 %541
        %545 = vset.pattern.permute.xlu0 0
        %546 = vperm.xlu0 %545, %v452
        %v547 = vpop.permute.xlu0 %546
        %550 = vset.pattern.permute.xlu0 0
        %551 = vperm.xlu0 %550, %v453
        %v552 = vpop.permute.xlu0 %551
        %555 = vset.pattern.permute.xlu0 0
        %556 = vperm.xlu0 %555, %v454
        %v557 = vpop.permute.xlu0 %556
        %560 = vset.pattern.permute.xlu0 0
        %561 = vperm.xlu0 %560, %v455
        %v562 = vpop.permute.xlu0 %561
        %565 = vset.pattern.permute.xlu0 0
        %566 = vperm.xlu0 %565, %v456
        %v567 = vpop.permute.xlu0 %566
        %570 = vset.pattern.permute.xlu0 0
        %571 = vperm.xlu0 %570, %v457
        %v572 = vpop.permute.xlu0 %571
        %575 = vset.pattern.permute.xlu0 0
        %576 = vperm.xlu0 %575, %v458
        %v577 = vpop.permute.xlu0 %576
        %580 = vset.pattern.permute.xlu0 0
        %581 = vperm.xlu0 %580, %v459
        %v582 = vpop.permute.xlu0 %581
        %585 = vset.pattern.permute.xlu0 0
        %586 = vperm.xlu0 %585, %v460
        %v587 = vpop.permute.xlu0 %586
        %590 = vset.pattern.permute.xlu0 0
        %591 = vperm.xlu0 %590, %v461
        %v592 = vpop.permute.xlu0 %591
        %595 = vset.pattern.permute.xlu0 0
        %596 = vperm.xlu0 %595, %v462
        %v597 = vpop.permute.xlu0 %596
        %600 = vset.pattern.permute.xlu0 0
        %601 = vperm.xlu0 %600, %v463
        %v602 = vpop.permute.xlu0 %601
        %605 = vset.pattern.permute.xlu0 0
        %606 = vperm.xlu0 %605, %v464
        %v607 = vpop.permute.xlu0 %606
        %610 = vset.pattern.permute.xlu0 0
        %611 = vperm.xlu0 %610, %v465
        %v612 = vpop.permute.xlu0 %611
        %615 = vset.pattern.permute.xlu0 0
        %616 = vperm.xlu0 %615, %v466
        %v617 = vpop.permute.xlu0 %616
        %620 = vset.pattern.permute.xlu0 0
        %621 = vperm.xlu0 %620, %v467
        %v622 = vpop.permute.xlu0 %621
        %625 = vset.pattern.permute.xlu0 0
        %626 = vperm.xlu0 %625, %v468
        %v627 = vpop.permute.xlu0 %626
        %v631 = vlaneseq
        %v632 = vshrl.u32 %v631, 7
        %v633 = vsub.s32 0, %v632
        %v634 = vrot.slane %v435, %v633
        %v635 = vlaneseq
        %v636 = vshrl.u32 %v635, 7
        %v637 = vsub.s32 4, %v636
        %v638 = vrot.slane %v435, %v637
        %v639 = vlaneseq
        %v640 = vshrl.u32 %v639, 7
        %v641 = vsub.s32 0, %v640
        %v642 = vrot.slane %v436, %v641
        %v643 = vlaneseq
        %v644 = vshrl.u32 %v643, 7
        %v645 = vsub.s32 4, %v644
        %v646 = vrot.slane %v436, %v645
        %v651 = vlaneseq
        %v652 = vshrl.u32 %v651, 7
        %v653 = vsub.s32 0, %v652
        %v654 = vrot.slane %v634, %v653
        %v655 = vlaneseq
        %v656 = vshrl.u32 %v655, 7
        %v657 = vsub.s32 0, %v656
        %v658 = vrot.slane %v638, %v657
        %v659 = vlaneseq
        %v660 = vshrl.u32 %v659, 7
        %v661 = vsub.s32 0, %v660
        %v662 = vrot.slane %v642, %v661
        %v663 = vlaneseq
        %v664 = vshrl.u32 %v663, 7
        %v665 = vsub.s32 0, %v664
        %v666 = vrot.slane %v646, %v665
        %v667 = vmul.f32 %v472, %v654
        %v668 = vmul.f32 %v472, %v658
        %v669 = vmul.f32 %v472, %v662
        %v670 = vmul.f32 %v472, %v666
        %v671 = vmul.f32 %v477, %v654
        %v672 = vmul.f32 %v477, %v658
        %v673 = vmul.f32 %v477, %v662
        %v674 = vmul.f32 %v477, %v666
        %v675 = vmul.f32 %v482, %v654
        %v676 = vmul.f32 %v482, %v658
        %v677 = vmul.f32 %v482, %v662
        %v678 = vmul.f32 %v482, %v666
        %v679 = vmul.f32 %v487, %v654
        %v680 = vmul.f32 %v487, %v658
        %v681 = vmul.f32 %v487, %v662
        %v682 = vmul.f32 %v487, %v666
        %v683 = vmul.f32 %v492, %v654
        %v684 = vmul.f32 %v492, %v658
        %v685 = vmul.f32 %v492, %v662
        %v686 = vmul.f32 %v492, %v666
        %v687 = vmul.f32 %v497, %v654
        %v688 = vmul.f32 %v497, %v658
        %v689 = vmul.f32 %v497, %v662
        %v690 = vmul.f32 %v497, %v666
        %v691 = vmul.f32 %v502, %v654
        %v692 = vmul.f32 %v502, %v658
        %v693 = vmul.f32 %v502, %v662
        %v694 = vmul.f32 %v502, %v666
        %v695 = vmul.f32 %v507, %v654
        %v696 = vmul.f32 %v507, %v658
        %v697 = vmul.f32 %v507, %v662
        %v698 = vmul.f32 %v507, %v666
        %v699 = vmul.f32 %v512, %v654
        %v700 = vmul.f32 %v512, %v658
        %v701 = vmul.f32 %v512, %v662
        %v702 = vmul.f32 %v512, %v666
        %v703 = vmul.f32 %v517, %v654
        %v704 = vmul.f32 %v517, %v658
        %v705 = vmul.f32 %v517, %v662
        %v706 = vmul.f32 %v517, %v666
        %v707 = vmul.f32 %v522, %v654
        %v708 = vmul.f32 %v522, %v658
        %v709 = vmul.f32 %v522, %v662
        %v710 = vmul.f32 %v522, %v666
        %v711 = vmul.f32 %v527, %v654
        %v712 = vmul.f32 %v527, %v658
        %v713 = vmul.f32 %v527, %v662
        %v714 = vmul.f32 %v527, %v666
        %v715 = vmul.f32 %v532, %v654
        %v716 = vmul.f32 %v532, %v658
        %v717 = vmul.f32 %v532, %v662
        %v718 = vmul.f32 %v532, %v666
        %v719 = vmul.f32 %v537, %v654
        %v720 = vmul.f32 %v537, %v658
        %v721 = vmul.f32 %v537, %v662
        %v722 = vmul.f32 %v537, %v666
        %v723 = vmul.f32 %v542, %v654
        %v724 = vmul.f32 %v542, %v658
        %v725 = vmul.f32 %v542, %v662
        %v726 = vmul.f32 %v542, %v666
        %v727 = vmul.f32 %v547, %v654
        %v728 = vmul.f32 %v547, %v658
        %v729 = vmul.f32 %v547, %v662
        %v730 = vmul.f32 %v547, %v666
        %v731 = vmul.f32 %v552, %v654
        %v732 = vmul.f32 %v552, %v658
        %v733 = vmul.f32 %v552, %v662
        %v734 = vmul.f32 %v552, %v666
        %v735 = vmul.f32 %v557, %v654
        %v736 = vmul.f32 %v557, %v658
        %v737 = vmul.f32 %v557, %v662
        %v738 = vmul.f32 %v557, %v666
        %v739 = vmul.f32 %v562, %v654
        %v740 = vmul.f32 %v562, %v658
        %v741 = vmul.f32 %v562, %v662
        %v742 = vmul.f32 %v562, %v666
        %v743 = vmul.f32 %v567, %v654
        %v744 = vmul.f32 %v567, %v658
        %v745 = vmul.f32 %v567, %v662
        %v746 = vmul.f32 %v567, %v666
        %v747 = vmul.f32 %v572, %v654
        %v748 = vmul.f32 %v572, %v658
        %v749 = vmul.f32 %v572, %v662
        %v750 = vmul.f32 %v572, %v666
        %v751 = vmul.f32 %v577, %v654
        %v752 = vmul.f32 %v577, %v658
        %v753 = vmul.f32 %v577, %v662
        %v754 = vmul.f32 %v577, %v666
        %v755 = vmul.f32 %v582, %v654
        %v756 = vmul.f32 %v582, %v658
        %v757 = vmul.f32 %v582, %v662
        %v758 = vmul.f32 %v582, %v666
        %v759 = vmul.f32 %v587, %v654
        %v760 = vmul.f32 %v587, %v658
        %v761 = vmul.f32 %v587, %v662
        %v762 = vmul.f32 %v587, %v666
        %v763 = vmul.f32 %v592, %v654
        %v764 = vmul.f32 %v592, %v658
        %v765 = vmul.f32 %v592, %v662
        %v766 = vmul.f32 %v592, %v666
        %v767 = vmul.f32 %v597, %v654
        %v768 = vmul.f32 %v597, %v658
        %v769 = vmul.f32 %v597, %v662
        %v770 = vmul.f32 %v597, %v666
        %v771 = vmul.f32 %v602, %v654
        %v772 = vmul.f32 %v602, %v658
        %v773 = vmul.f32 %v602, %v662
        %v774 = vmul.f32 %v602, %v666
        %v775 = vmul.f32 %v607, %v654
        %v776 = vmul.f32 %v607, %v658
        %v777 = vmul.f32 %v607, %v662
        %v778 = vmul.f32 %v607, %v666
        %v779 = vmul.f32 %v612, %v654
        %v780 = vmul.f32 %v612, %v658
        %v781 = vmul.f32 %v612, %v662
        %v782 = vmul.f32 %v612, %v666
        %v783 = vmul.f32 %v617, %v654
        %v784 = vmul.f32 %v617, %v658
        %v785 = vmul.f32 %v617, %v662
        %v786 = vmul.f32 %v617, %v666
        %v787 = vmul.f32 %v622, %v654
        %v788 = vmul.f32 %v622, %v658
        %v789 = vmul.f32 %v622, %v662
        %v790 = vmul.f32 %v622, %v666
        %v791 = vmul.f32 %v627, %v654
        %v792 = vmul.f32 %v627, %v658
        %v793 = vmul.f32 %v627, %v662
        %v794 = vmul.f32 %v627, %v666
        %795 = vset.pattern.permute.xlu0 1
        %796 = vperm.xlu0 %795, %v437
        %v797 = vpop.permute.xlu0 %796
        %799 = vset.pattern.permute.xlu0 1
        %800 = vperm.xlu0 %799, %v438
        %v801 = vpop.permute.xlu0 %800
        %803 = vset.pattern.permute.xlu0 1
        %804 = vperm.xlu0 %803, %v439
        %v805 = vpop.permute.xlu0 %804
        %807 = vset.pattern.permute.xlu0 1
        %808 = vperm.xlu0 %807, %v440
        %v809 = vpop.permute.xlu0 %808
        %811 = vset.pattern.permute.xlu0 1
        %812 = vperm.xlu0 %811, %v441
        %v813 = vpop.permute.xlu0 %812
        %815 = vset.pattern.permute.xlu0 1
        %816 = vperm.xlu0 %815, %v442
        %v817 = vpop.permute.xlu0 %816
        %819 = vset.pattern.permute.xlu0 1
        %820 = vperm.xlu0 %819, %v443
        %v821 = vpop.permute.xlu0 %820
        %823 = vset.pattern.permute.xlu0 1
        %824 = vperm.xlu0 %823, %v444
        %v825 = vpop.permute.xlu0 %824
        %827 = vset.pattern.permute.xlu0 1
        %828 = vperm.xlu0 %827, %v445
        %v829 = vpop.permute.xlu0 %828
        %831 = vset.pattern.permute.xlu0 1
        %832 = vperm.xlu0 %831, %v446
        %v833 = vpop.permute.xlu0 %832
        %835 = vset.pattern.permute.xlu0 1
        %836 = vperm.xlu0 %835, %v447
        %v837 = vpop.permute.xlu0 %836
        %839 = vset.pattern.permute.xlu0 1
        %840 = vperm.xlu0 %839, %v448
        %v841 = vpop.permute.xlu0 %840
        %843 = vset.pattern.permute.xlu0 1
        %844 = vperm.xlu0 %843, %v449
        %v845 = vpop.permute.xlu0 %844
        %847 = vset.pattern.permute.xlu0 1
        %848 = vperm.xlu0 %847, %v450
        %v849 = vpop.permute.xlu0 %848
        %851 = vset.pattern.permute.xlu0 1
        %852 = vperm.xlu0 %851, %v451
        %v853 = vpop.permute.xlu0 %852
        %855 = vset.pattern.permute.xlu0 1
        %856 = vperm.xlu0 %855, %v452
        %v857 = vpop.permute.xlu0 %856
        %859 = vset.pattern.permute.xlu0 1
        %860 = vperm.xlu0 %859, %v453
        %v861 = vpop.permute.xlu0 %860
        %863 = vset.pattern.permute.xlu0 1
        %864 = vperm.xlu0 %863, %v454
        %v865 = vpop.permute.xlu0 %864
        %867 = vset.pattern.permute.xlu0 1
        %868 = vperm.xlu0 %867, %v455
        %v869 = vpop.permute.xlu0 %868
        %871 = vset.pattern.permute.xlu0 1
        %872 = vperm.xlu0 %871, %v456
        %v873 = vpop.permute.xlu0 %872
        %875 = vset.pattern.permute.xlu0 1
        %876 = vperm.xlu0 %875, %v457
        %v877 = vpop.permute.xlu0 %876
        %879 = vset.pattern.permute.xlu0 1
        %880 = vperm.xlu0 %879, %v458
        %v881 = vpop.permute.xlu0 %880
        %883 = vset.pattern.permute.xlu0 1
        %884 = vperm.xlu0 %883, %v459
        %v885 = vpop.permute.xlu0 %884
        %887 = vset.pattern.permute.xlu0 1
        %888 = vperm.xlu0 %887, %v460
        %v889 = vpop.permute.xlu0 %888
        %891 = vset.pattern.permute.xlu0 1
        %892 = vperm.xlu0 %891, %v461
        %v893 = vpop.permute.xlu0 %892
        %895 = vset.pattern.permute.xlu0 1
        %896 = vperm.xlu0 %895, %v462
        %v897 = vpop.permute.xlu0 %896
        %899 = vset.pattern.permute.xlu0 1
        %900 = vperm.xlu0 %899, %v463
        %v901 = vpop.permute.xlu0 %900
        %903 = vset.pattern.permute.xlu0 1
        %904 = vperm.xlu0 %903, %v464
        %v905 = vpop.permute.xlu0 %904
        %907 = vset.pattern.permute.xlu0 1
        %908 = vperm.xlu0 %907, %v465
        %v909 = vpop.permute.xlu0 %908
        %911 = vset.pattern.permute.xlu0 1
        %912 = vperm.xlu0 %911, %v466
        %v913 = vpop.permute.xlu0 %912
        %915 = vset.pattern.permute.xlu0 1
        %916 = vperm.xlu0 %915, %v467
        %v917 = vpop.permute.xlu0 %916
        %919 = vset.pattern.permute.xlu0 1
        %920 = vperm.xlu0 %919, %v468
        %v921 = vpop.permute.xlu0 %920
        %v923 = vlaneseq
        %v924 = vshrl.u32 %v923, 7
        %v925 = vsub.s32 1, %v924
        %v926 = vrot.slane %v435, %v925
        %v927 = vlaneseq
        %v928 = vshrl.u32 %v927, 7
        %v929 = vsub.s32 5, %v928
        %v930 = vrot.slane %v435, %v929
        %v931 = vlaneseq
        %v932 = vshrl.u32 %v931, 7
        %v933 = vsub.s32 1, %v932
        %v934 = vrot.slane %v436, %v933
        %v935 = vlaneseq
        %v936 = vshrl.u32 %v935, 7
        %v937 = vsub.s32 5, %v936
        %v938 = vrot.slane %v436, %v937
        %v943 = vlaneseq
        %v944 = vshrl.u32 %v943, 7
        %v945 = vsub.s32 1, %v944
        %v946 = vrot.slane %v926, %v945
        %v947 = vlaneseq
        %v948 = vshrl.u32 %v947, 7
        %v949 = vsub.s32 1, %v948
        %v950 = vrot.slane %v930, %v949
        %v951 = vlaneseq
        %v952 = vshrl.u32 %v951, 7
        %v953 = vsub.s32 1, %v952
        %v954 = vrot.slane %v934, %v953
        %v955 = vlaneseq
        %v956 = vshrl.u32 %v955, 7
        %v957 = vsub.s32 1, %v956
        %v958 = vrot.slane %v938, %v957
        %v959 = vmul.f32 %v797, %v946
        %v960 = vmul.f32 %v797, %v950
        %v961 = vmul.f32 %v797, %v954
        %v962 = vmul.f32 %v797, %v958
        %v963 = vmul.f32 %v801, %v946
        %v964 = vmul.f32 %v801, %v950
        %v965 = vmul.f32 %v801, %v954
        %v966 = vmul.f32 %v801, %v958
        %v967 = vmul.f32 %v805, %v946
        %v968 = vmul.f32 %v805, %v950
        %v969 = vmul.f32 %v805, %v954
        %v970 = vmul.f32 %v805, %v958
        %v971 = vmul.f32 %v809, %v946
        %v972 = vmul.f32 %v809, %v950
        %v973 = vmul.f32 %v809, %v954
        %v974 = vmul.f32 %v809, %v958
        %v975 = vmul.f32 %v813, %v946
        %v976 = vmul.f32 %v813, %v950
        %v977 = vmul.f32 %v813, %v954
        %v978 = vmul.f32 %v813, %v958
        %v979 = vmul.f32 %v817, %v946
        %v980 = vmul.f32 %v817, %v950
        %v981 = vmul.f32 %v817, %v954
        %v982 = vmul.f32 %v817, %v958
        %v983 = vmul.f32 %v821, %v946
        %v984 = vmul.f32 %v821, %v950
        %v985 = vmul.f32 %v821, %v954
        %v986 = vmul.f32 %v821, %v958
        %v987 = vmul.f32 %v825, %v946
        %v988 = vmul.f32 %v825, %v950
        %v989 = vmul.f32 %v825, %v954
        %v990 = vmul.f32 %v825, %v958
        %v991 = vmul.f32 %v829, %v946
        %v992 = vmul.f32 %v829, %v950
        %v993 = vmul.f32 %v829, %v954
        %v994 = vmul.f32 %v829, %v958
        %v995 = vmul.f32 %v833, %v946
        %v996 = vmul.f32 %v833, %v950
        %v997 = vmul.f32 %v833, %v954
        %v998 = vmul.f32 %v833, %v958
        %v999 = vmul.f32 %v837, %v946
        %v1000 = vmul.f32 %v837, %v950
        %v1001 = vmul.f32 %v837, %v954
        %v1002 = vmul.f32 %v837, %v958
        %v1003 = vmul.f32 %v841, %v946
        %v1004 = vmul.f32 %v841, %v950
        %v1005 = vmul.f32 %v841, %v954
        %v1006 = vmul.f32 %v841, %v958
        %v1007 = vmul.f32 %v845, %v946
        %v1008 = vmul.f32 %v845, %v950
        %v1009 = vmul.f32 %v845, %v954
        %v1010 = vmul.f32 %v845, %v958
        %v1011 = vmul.f32 %v849, %v946
        %v1012 = vmul.f32 %v849, %v950
        %v1013 = vmul.f32 %v849, %v954
        %v1014 = vmul.f32 %v849, %v958
        %v1015 = vmul.f32 %v853, %v946
        %v1016 = vmul.f32 %v853, %v950
        %v1017 = vmul.f32 %v853, %v954
        %v1018 = vmul.f32 %v853, %v958
        %v1019 = vmul.f32 %v857, %v946
        %v1020 = vmul.f32 %v857, %v950
        %v1021 = vmul.f32 %v857, %v954
        %v1022 = vmul.f32 %v857, %v958
        %v1023 = vmul.f32 %v861, %v946
        %v1024 = vmul.f32 %v861, %v950
        %v1025 = vmul.f32 %v861, %v954
        %v1026 = vmul.f32 %v861, %v958
        %v1027 = vmul.f32 %v865, %v946
        %v1028 = vmul.f32 %v865, %v950
        %v1029 = vmul.f32 %v865, %v954
        %v1030 = vmul.f32 %v865, %v958
        %v1031 = vmul.f32 %v869, %v946
        %v1032 = vmul.f32 %v869, %v950
        %v1033 = vmul.f32 %v869, %v954
        %v1034 = vmul.f32 %v869, %v958
        %v1035 = vmul.f32 %v873, %v946
        %v1036 = vmul.f32 %v873, %v950
        %v1037 = vmul.f32 %v873, %v954
        %v1038 = vmul.f32 %v873, %v958
        %v1039 = vmul.f32 %v877, %v946
        %v1040 = vmul.f32 %v877, %v950
        %v1041 = vmul.f32 %v877, %v954
        %v1042 = vmul.f32 %v877, %v958
        %v1043 = vmul.f32 %v881, %v946
        %v1044 = vmul.f32 %v881, %v950
        %v1045 = vmul.f32 %v881, %v954
        %v1046 = vmul.f32 %v881, %v958
        %v1047 = vmul.f32 %v885, %v946
        %v1048 = vmul.f32 %v885, %v950
        %v1049 = vmul.f32 %v885, %v954
        %v1050 = vmul.f32 %v885, %v958
        %v1051 = vmul.f32 %v889, %v946
        %v1052 = vmul.f32 %v889, %v950
        %v1053 = vmul.f32 %v889, %v954
        %v1054 = vmul.f32 %v889, %v958
        %v1055 = vmul.f32 %v893, %v946
        %v1056 = vmul.f32 %v893, %v950
        %v1057 = vmul.f32 %v893, %v954
        %v1058 = vmul.f32 %v893, %v958
        %v1059 = vmul.f32 %v897, %v946
        %v1060 = vmul.f32 %v897, %v950
        %v1061 = vmul.f32 %v897, %v954
        %v1062 = vmul.f32 %v897, %v958
        %v1063 = vmul.f32 %v901, %v946
        %v1064 = vmul.f32 %v901, %v950
        %v1065 = vmul.f32 %v901, %v954
        %v1066 = vmul.f32 %v901, %v958
        %v1067 = vmul.f32 %v905, %v946
        %v1068 = vmul.f32 %v905, %v950
        %v1069 = vmul.f32 %v905, %v954
        %v1070 = vmul.f32 %v905, %v958
        %v1071 = vmul.f32 %v909, %v946
        %v1072 = vmul.f32 %v909, %v950
        %v1073 = vmul.f32 %v909, %v954
        %v1074 = vmul.f32 %v909, %v958
        %v1075 = vmul.f32 %v913, %v946
        %v1076 = vmul.f32 %v913, %v950
        %v1077 = vmul.f32 %v913, %v954
        %v1078 = vmul.f32 %v913, %v958
        %v1079 = vmul.f32 %v917, %v946
        %v1080 = vmul.f32 %v917, %v950
        %v1081 = vmul.f32 %v917, %v954
        %v1082 = vmul.f32 %v917, %v958
        %v1083 = vmul.f32 %v921, %v946
        %v1084 = vmul.f32 %v921, %v950
        %v1085 = vmul.f32 %v921, %v954
        %v1086 = vmul.f32 %v921, %v958
        %v1087 = vadd.f32 %v667, %v959
        %v1088 = vadd.f32 %v668, %v960
        %v1089 = vadd.f32 %v669, %v961
        %v1090 = vadd.f32 %v670, %v962
        %v1091 = vadd.f32 %v671, %v963
        %v1092 = vadd.f32 %v672, %v964
        %v1093 = vadd.f32 %v673, %v965
        %v1094 = vadd.f32 %v674, %v966
        %v1095 = vadd.f32 %v675, %v967
        %v1096 = vadd.f32 %v676, %v968
        %v1097 = vadd.f32 %v677, %v969
        %v1098 = vadd.f32 %v678, %v970
        %v1099 = vadd.f32 %v679, %v971
        %v1100 = vadd.f32 %v680, %v972
        %v1101 = vadd.f32 %v681, %v973
        %v1102 = vadd.f32 %v682, %v974
        %v1103 = vadd.f32 %v683, %v975
        %v1104 = vadd.f32 %v684, %v976
        %v1105 = vadd.f32 %v685, %v977
        %v1106 = vadd.f32 %v686, %v978
        %v1107 = vadd.f32 %v687, %v979
        %v1108 = vadd.f32 %v688, %v980
        %v1109 = vadd.f32 %v689, %v981
        %v1110 = vadd.f32 %v690, %v982
        %v1111 = vadd.f32 %v691, %v983
        %v1112 = vadd.f32 %v692, %v984
        %v1113 = vadd.f32 %v693, %v985
        %v1114 = vadd.f32 %v694, %v986
        %v1115 = vadd.f32 %v695, %v987
        %v1116 = vadd.f32 %v696, %v988
        %v1117 = vadd.f32 %v697, %v989
        %v1118 = vadd.f32 %v698, %v990
        %v1119 = vadd.f32 %v699, %v991
        %v1120 = vadd.f32 %v700, %v992
        %v1121 = vadd.f32 %v701, %v993
        %v1122 = vadd.f32 %v702, %v994
        %v1123 = vadd.f32 %v703, %v995
        %v1124 = vadd.f32 %v704, %v996
        %v1125 = vadd.f32 %v705, %v997
        %v1126 = vadd.f32 %v706, %v998
        %v1127 = vadd.f32 %v707, %v999
        %v1128 = vadd.f32 %v708, %v1000
        %v1129 = vadd.f32 %v709, %v1001
        %v1130 = vadd.f32 %v710, %v1002
        %v1131 = vadd.f32 %v711, %v1003
        %v1132 = vadd.f32 %v712, %v1004
        %v1133 = vadd.f32 %v713, %v1005
        %v1134 = vadd.f32 %v714, %v1006
        %v1135 = vadd.f32 %v715, %v1007
        %v1136 = vadd.f32 %v716, %v1008
        %v1137 = vadd.f32 %v717, %v1009
        %v1138 = vadd.f32 %v718, %v1010
        %v1139 = vadd.f32 %v719, %v1011
        %v1140 = vadd.f32 %v720, %v1012
        %v1141 = vadd.f32 %v721, %v1013
        %v1142 = vadd.f32 %v722, %v1014
        %v1143 = vadd.f32 %v723, %v1015
        %v1144 = vadd.f32 %v724, %v1016
        %v1145 = vadd.f32 %v725, %v1017
        %v1146 = vadd.f32 %v726, %v1018
        %v1147 = vadd.f32 %v727, %v1019
        %v1148 = vadd.f32 %v728, %v1020
        %v1149 = vadd.f32 %v729, %v1021
        %v1150 = vadd.f32 %v730, %v1022
        %v1151 = vadd.f32 %v731, %v1023
        %v1152 = vadd.f32 %v732, %v1024
        %v1153 = vadd.f32 %v733, %v1025
        %v1154 = vadd.f32 %v734, %v1026
        %v1155 = vadd.f32 %v735, %v1027
        %v1156 = vadd.f32 %v736, %v1028
        %v1157 = vadd.f32 %v737, %v1029
        %v1158 = vadd.f32 %v738, %v1030
        %v1159 = vadd.f32 %v739, %v1031
        %v1160 = vadd.f32 %v740, %v1032
        %v1161 = vadd.f32 %v741, %v1033
        %v1162 = vadd.f32 %v742, %v1034
        %v1163 = vadd.f32 %v743, %v1035
        %v1164 = vadd.f32 %v744, %v1036
        %v1165 = vadd.f32 %v745, %v1037
        %v1166 = vadd.f32 %v746, %v1038
        %v1167 = vadd.f32 %v747, %v1039
        %v1168 = vadd.f32 %v748, %v1040
        %v1169 = vadd.f32 %v749, %v1041
        %v1170 = vadd.f32 %v750, %v1042
        %v1171 = vadd.f32 %v751, %v1043
        %v1172 = vadd.f32 %v752, %v1044
        %v1173 = vadd.f32 %v753, %v1045
        %v1174 = vadd.f32 %v754, %v1046
        %v1175 = vadd.f32 %v755, %v1047
        %v1176 = vadd.f32 %v756, %v1048
        %v1177 = vadd.f32 %v757, %v1049
        %v1178 = vadd.f32 %v758, %v1050
        %v1179 = vadd.f32 %v759, %v1051
        %v1180 = vadd.f32 %v760, %v1052
        %v1181 = vadd.f32 %v761, %v1053
        %v1182 = vadd.f32 %v762, %v1054
        %v1183 = vadd.f32 %v763, %v1055
        %v1184 = vadd.f32 %v764, %v1056
        %v1185 = vadd.f32 %v765, %v1057
        %v1186 = vadd.f32 %v766, %v1058
        %v1187 = vadd.f32 %v767, %v1059
        %v1188 = vadd.f32 %v768, %v1060
        %v1189 = vadd.f32 %v769, %v1061
        %v1190 = vadd.f32 %v770, %v1062
        %v1191 = vadd.f32 %v771, %v1063
        %v1192 = vadd.f32 %v772, %v1064
        %v1193 = vadd.f32 %v773, %v1065
        %v1194 = vadd.f32 %v774, %v1066
        %v1195 = vadd.f32 %v775, %v1067
        %v1196 = vadd.f32 %v776, %v1068
        %v1197 = vadd.f32 %v777, %v1069
        %v1198 = vadd.f32 %v778, %v1070
        %v1199 = vadd.f32 %v779, %v1071
        %v1200 = vadd.f32 %v780, %v1072
        %v1201 = vadd.f32 %v781, %v1073
        %v1202 = vadd.f32 %v782, %v1074
        %v1203 = vadd.f32 %v783, %v1075
        %v1204 = vadd.f32 %v784, %v1076
        %v1205 = vadd.f32 %v785, %v1077
        %v1206 = vadd.f32 %v786, %v1078
        %v1207 = vadd.f32 %v787, %v1079
        %v1208 = vadd.f32 %v788, %v1080
        %v1209 = vadd.f32 %v789, %v1081
        %v1210 = vadd.f32 %v790, %v1082
        %v1211 = vadd.f32 %v791, %v1083
        %v1212 = vadd.f32 %v792, %v1084
        %v1213 = vadd.f32 %v793, %v1085
        %v1214 = vadd.f32 %v794, %v1086
        %1215 = vset.pattern.permute.xlu0 2
        %1216 = vperm.xlu0 %1215, %v437
        %v1217 = vpop.permute.xlu0 %1216
        %1219 = vset.pattern.permute.xlu0 2
        %1220 = vperm.xlu0 %1219, %v438
        %v1221 = vpop.permute.xlu0 %1220
        %1223 = vset.pattern.permute.xlu0 2
        %1224 = vperm.xlu0 %1223, %v439
        %v1225 = vpop.permute.xlu0 %1224
        %1227 = vset.pattern.permute.xlu0 2
        %1228 = vperm.xlu0 %1227, %v440
        %v1229 = vpop.permute.xlu0 %1228
        %1231 = vset.pattern.permute.xlu0 2
        %1232 = vperm.xlu0 %1231, %v441
        %v1233 = vpop.permute.xlu0 %1232
        %1235 = vset.pattern.permute.xlu0 2
        %1236 = vperm.xlu0 %1235, %v442
        %v1237 = vpop.permute.xlu0 %1236
        %1239 = vset.pattern.permute.xlu0 2
        %1240 = vperm.xlu0 %1239, %v443
        %v1241 = vpop.permute.xlu0 %1240
        %1243 = vset.pattern.permute.xlu0 2
        %1244 = vperm.xlu0 %1243, %v444
        %v1245 = vpop.permute.xlu0 %1244
        %1247 = vset.pattern.permute.xlu0 2
        %1248 = vperm.xlu0 %1247, %v445
        %v1249 = vpop.permute.xlu0 %1248
        %1251 = vset.pattern.permute.xlu0 2
        %1252 = vperm.xlu0 %1251, %v446
        %v1253 = vpop.permute.xlu0 %1252
        %1255 = vset.pattern.permute.xlu0 2
        %1256 = vperm.xlu0 %1255, %v447
        %v1257 = vpop.permute.xlu0 %1256
        %1259 = vset.pattern.permute.xlu0 2
        %1260 = vperm.xlu0 %1259, %v448
        %v1261 = vpop.permute.xlu0 %1260
        %1263 = vset.pattern.permute.xlu0 2
        %1264 = vperm.xlu0 %1263, %v449
        %v1265 = vpop.permute.xlu0 %1264
        %1267 = vset.pattern.permute.xlu0 2
        %1268 = vperm.xlu0 %1267, %v450
        %v1269 = vpop.permute.xlu0 %1268
        %1271 = vset.pattern.permute.xlu0 2
        %1272 = vperm.xlu0 %1271, %v451
        %v1273 = vpop.permute.xlu0 %1272
        %1275 = vset.pattern.permute.xlu0 2
        %1276 = vperm.xlu0 %1275, %v452
        %v1277 = vpop.permute.xlu0 %1276
        %1279 = vset.pattern.permute.xlu0 2
        %1280 = vperm.xlu0 %1279, %v453
        %v1281 = vpop.permute.xlu0 %1280
        %1283 = vset.pattern.permute.xlu0 2
        %1284 = vperm.xlu0 %1283, %v454
        %v1285 = vpop.permute.xlu0 %1284
        %1287 = vset.pattern.permute.xlu0 2
        %1288 = vperm.xlu0 %1287, %v455
        %v1289 = vpop.permute.xlu0 %1288
        %1291 = vset.pattern.permute.xlu0 2
        %1292 = vperm.xlu0 %1291, %v456
        %v1293 = vpop.permute.xlu0 %1292
        %1295 = vset.pattern.permute.xlu0 2
        %1296 = vperm.xlu0 %1295, %v457
        %v1297 = vpop.permute.xlu0 %1296
        %1299 = vset.pattern.permute.xlu0 2
        %1300 = vperm.xlu0 %1299, %v458
        %v1301 = vpop.permute.xlu0 %1300
        %1303 = vset.pattern.permute.xlu0 2
        %1304 = vperm.xlu0 %1303, %v459
        %v1305 = vpop.permute.xlu0 %1304
        %1307 = vset.pattern.permute.xlu0 2
        %1308 = vperm.xlu0 %1307, %v460
        %v1309 = vpop.permute.xlu0 %1308
        %1311 = vset.pattern.permute.xlu0 2
        %1312 = vperm.xlu0 %1311, %v461
        %v1313 = vpop.permute.xlu0 %1312
        %1315 = vset.pattern.permute.xlu0 2
        %1316 = vperm.xlu0 %1315, %v462
        %v1317 = vpop.permute.xlu0 %1316
        %1319 = vset.pattern.permute.xlu0 2
        %1320 = vperm.xlu0 %1319, %v463
        %v1321 = vpop.permute.xlu0 %1320
        %1323 = vset.pattern.permute.xlu0 2
        %1324 = vperm.xlu0 %1323, %v464
        %v1325 = vpop.permute.xlu0 %1324
        %1327 = vset.pattern.permute.xlu0 2
        %1328 = vperm.xlu0 %1327, %v465
        %v1329 = vpop.permute.xlu0 %1328
        %1331 = vset.pattern.permute.xlu0 2
        %1332 = vperm.xlu0 %1331, %v466
        %v1333 = vpop.permute.xlu0 %1332
        %1335 = vset.pattern.permute.xlu0 2
        %1336 = vperm.xlu0 %1335, %v467
        %v1337 = vpop.permute.xlu0 %1336
        %1339 = vset.pattern.permute.xlu0 2
        %1340 = vperm.xlu0 %1339, %v468
        %v1341 = vpop.permute.xlu0 %1340
        %v1343 = vlaneseq
        %v1344 = vshrl.u32 %v1343, 7
        %v1345 = vsub.s32 2, %v1344
        %v1346 = vrot.slane %v435, %v1345
        %v1347 = vlaneseq
        %v1348 = vshrl.u32 %v1347, 7
        %v1349 = vsub.s32 6, %v1348
        %v1350 = vrot.slane %v435, %v1349
        %v1351 = vlaneseq
        %v1352 = vshrl.u32 %v1351, 7
        %v1353 = vsub.s32 2, %v1352
        %v1354 = vrot.slane %v436, %v1353
        %v1355 = vlaneseq
        %v1356 = vshrl.u32 %v1355, 7
        %v1357 = vsub.s32 6, %v1356
        %v1358 = vrot.slane %v436, %v1357
        %v1363 = vlaneseq
        %v1364 = vshrl.u32 %v1363, 7
        %v1365 = vsub.s32 2, %v1364
        %v1366 = vrot.slane %v1346, %v1365
        %v1367 = vlaneseq
        %v1368 = vshrl.u32 %v1367, 7
        %v1369 = vsub.s32 2, %v1368
        %v1370 = vrot.slane %v1350, %v1369
        %v1371 = vlaneseq
        %v1372 = vshrl.u32 %v1371, 7
        %v1373 = vsub.s32 2, %v1372
        %v1374 = vrot.slane %v1354, %v1373
        %v1375 = vlaneseq
        %v1376 = vshrl.u32 %v1375, 7
        %v1377 = vsub.s32 2, %v1376
        %v1378 = vrot.slane %v1358, %v1377
        %v1379 = vmul.f32 %v1217, %v1366
        %v1380 = vmul.f32 %v1217, %v1370
        %v1381 = vmul.f32 %v1217, %v1374
        %v1382 = vmul.f32 %v1217, %v1378
        %v1383 = vmul.f32 %v1221, %v1366
        %v1384 = vmul.f32 %v1221, %v1370
        %v1385 = vmul.f32 %v1221, %v1374
        %v1386 = vmul.f32 %v1221, %v1378
        %v1387 = vmul.f32 %v1225, %v1366
        %v1388 = vmul.f32 %v1225, %v1370
        %v1389 = vmul.f32 %v1225, %v1374
        %v1390 = vmul.f32 %v1225, %v1378
        %v1391 = vmul.f32 %v1229, %v1366
        %v1392 = vmul.f32 %v1229, %v1370
        %v1393 = vmul.f32 %v1229, %v1374
        %v1394 = vmul.f32 %v1229, %v1378
        %v1395 = vmul.f32 %v1233, %v1366
        %v1396 = vmul.f32 %v1233, %v1370
        %v1397 = vmul.f32 %v1233, %v1374
        %v1398 = vmul.f32 %v1233, %v1378
        %v1399 = vmul.f32 %v1237, %v1366
        %v1400 = vmul.f32 %v1237, %v1370
        %v1401 = vmul.f32 %v1237, %v1374
        %v1402 = vmul.f32 %v1237, %v1378
        %v1403 = vmul.f32 %v1241, %v1366
        %v1404 = vmul.f32 %v1241, %v1370
        %v1405 = vmul.f32 %v1241, %v1374
        %v1406 = vmul.f32 %v1241, %v1378
        %v1407 = vmul.f32 %v1245, %v1366
        %v1408 = vmul.f32 %v1245, %v1370
        %v1409 = vmul.f32 %v1245, %v1374
        %v1410 = vmul.f32 %v1245, %v1378
        %v1411 = vmul.f32 %v1249, %v1366
        %v1412 = vmul.f32 %v1249, %v1370
        %v1413 = vmul.f32 %v1249, %v1374
        %v1414 = vmul.f32 %v1249, %v1378
        %v1415 = vmul.f32 %v1253, %v1366
        %v1416 = vmul.f32 %v1253, %v1370
        %v1417 = vmul.f32 %v1253, %v1374
        %v1418 = vmul.f32 %v1253, %v1378
        %v1419 = vmul.f32 %v1257, %v1366
        %v1420 = vmul.f32 %v1257, %v1370
        %v1421 = vmul.f32 %v1257, %v1374
        %v1422 = vmul.f32 %v1257, %v1378
        %v1423 = vmul.f32 %v1261, %v1366
        %v1424 = vmul.f32 %v1261, %v1370
        %v1425 = vmul.f32 %v1261, %v1374
        %v1426 = vmul.f32 %v1261, %v1378
        %v1427 = vmul.f32 %v1265, %v1366
        %v1428 = vmul.f32 %v1265, %v1370
        %v1429 = vmul.f32 %v1265, %v1374
        %v1430 = vmul.f32 %v1265, %v1378
        %v1431 = vmul.f32 %v1269, %v1366
        %v1432 = vmul.f32 %v1269, %v1370
        %v1433 = vmul.f32 %v1269, %v1374
        %v1434 = vmul.f32 %v1269, %v1378
        %v1435 = vmul.f32 %v1273, %v1366
        %v1436 = vmul.f32 %v1273, %v1370
        %v1437 = vmul.f32 %v1273, %v1374
        %v1438 = vmul.f32 %v1273, %v1378
        %v1439 = vmul.f32 %v1277, %v1366
        %v1440 = vmul.f32 %v1277, %v1370
        %v1441 = vmul.f32 %v1277, %v1374
        %v1442 = vmul.f32 %v1277, %v1378
        %v1443 = vmul.f32 %v1281, %v1366
        %v1444 = vmul.f32 %v1281, %v1370
        %v1445 = vmul.f32 %v1281, %v1374
        %v1446 = vmul.f32 %v1281, %v1378
        %v1447 = vmul.f32 %v1285, %v1366
        %v1448 = vmul.f32 %v1285, %v1370
        %v1449 = vmul.f32 %v1285, %v1374
        %v1450 = vmul.f32 %v1285, %v1378
        %v1451 = vmul.f32 %v1289, %v1366
        %v1452 = vmul.f32 %v1289, %v1370
        %v1453 = vmul.f32 %v1289, %v1374
        %v1454 = vmul.f32 %v1289, %v1378
        %v1455 = vmul.f32 %v1293, %v1366
        %v1456 = vmul.f32 %v1293, %v1370
        %v1457 = vmul.f32 %v1293, %v1374
        %v1458 = vmul.f32 %v1293, %v1378
        %v1459 = vmul.f32 %v1297, %v1366
        %v1460 = vmul.f32 %v1297, %v1370
        %v1461 = vmul.f32 %v1297, %v1374
        %v1462 = vmul.f32 %v1297, %v1378
        %v1463 = vmul.f32 %v1301, %v1366
        %v1464 = vmul.f32 %v1301, %v1370
        %v1465 = vmul.f32 %v1301, %v1374
        %v1466 = vmul.f32 %v1301, %v1378
        %v1467 = vmul.f32 %v1305, %v1366
        %v1468 = vmul.f32 %v1305, %v1370
        %v1469 = vmul.f32 %v1305, %v1374
        %v1470 = vmul.f32 %v1305, %v1378
        %v1471 = vmul.f32 %v1309, %v1366
        %v1472 = vmul.f32 %v1309, %v1370
        %v1473 = vmul.f32 %v1309, %v1374
        %v1474 = vmul.f32 %v1309, %v1378
        %v1475 = vmul.f32 %v1313, %v1366
        %v1476 = vmul.f32 %v1313, %v1370
        %v1477 = vmul.f32 %v1313, %v1374
        %v1478 = vmul.f32 %v1313, %v1378
        %v1479 = vmul.f32 %v1317, %v1366
        %v1480 = vmul.f32 %v1317, %v1370
        %v1481 = vmul.f32 %v1317, %v1374
        %v1482 = vmul.f32 %v1317, %v1378
        %v1483 = vmul.f32 %v1321, %v1366
        %v1484 = vmul.f32 %v1321, %v1370
        %v1485 = vmul.f32 %v1321, %v1374
        %v1486 = vmul.f32 %v1321, %v1378
        %v1487 = vmul.f32 %v1325, %v1366
        %v1488 = vmul.f32 %v1325, %v1370
        %v1489 = vmul.f32 %v1325, %v1374
        %v1490 = vmul.f32 %v1325, %v1378
        %v1491 = vmul.f32 %v1329, %v1366
        %v1492 = vmul.f32 %v1329, %v1370
        %v1493 = vmul.f32 %v1329, %v1374
        %v1494 = vmul.f32 %v1329, %v1378
        %v1495 = vmul.f32 %v1333, %v1366
        %v1496 = vmul.f32 %v1333, %v1370
        %v1497 = vmul.f32 %v1333, %v1374
        %v1498 = vmul.f32 %v1333, %v1378
        %v1499 = vmul.f32 %v1337, %v1366
        %v1500 = vmul.f32 %v1337, %v1370
        %v1501 = vmul.f32 %v1337, %v1374
        %v1502 = vmul.f32 %v1337, %v1378
        %v1503 = vmul.f32 %v1341, %v1366
        %v1504 = vmul.f32 %v1341, %v1370
        %v1505 = vmul.f32 %v1341, %v1374
        %v1506 = vmul.f32 %v1341, %v1378
        %v1507 = vadd.f32 %v1087, %v1379
        %v1508 = vadd.f32 %v1088, %v1380
        %v1509 = vadd.f32 %v1089, %v1381
        %v1510 = vadd.f32 %v1090, %v1382
        %v1511 = vadd.f32 %v1091, %v1383
        %v1512 = vadd.f32 %v1092, %v1384
        %v1513 = vadd.f32 %v1093, %v1385
        %v1514 = vadd.f32 %v1094, %v1386
        %v1515 = vadd.f32 %v1095, %v1387
        %v1516 = vadd.f32 %v1096, %v1388
        %v1517 = vadd.f32 %v1097, %v1389
        %v1518 = vadd.f32 %v1098, %v1390
        %v1519 = vadd.f32 %v1099, %v1391
        %v1520 = vadd.f32 %v1100, %v1392
        %v1521 = vadd.f32 %v1101, %v1393
        %v1522 = vadd.f32 %v1102, %v1394
        %v1523 = vadd.f32 %v1103, %v1395
        %v1524 = vadd.f32 %v1104, %v1396
        %v1525 = vadd.f32 %v1105, %v1397
        %v1526 = vadd.f32 %v1106, %v1398
        %v1527 = vadd.f32 %v1107, %v1399
        %v1528 = vadd.f32 %v1108, %v1400
        %v1529 = vadd.f32 %v1109, %v1401
        %v1530 = vadd.f32 %v1110, %v1402
        %v1531 = vadd.f32 %v1111, %v1403
        %v1532 = vadd.f32 %v1112, %v1404
        %v1533 = vadd.f32 %v1113, %v1405
        %v1534 = vadd.f32 %v1114, %v1406
        %v1535 = vadd.f32 %v1115, %v1407
        %v1536 = vadd.f32 %v1116, %v1408
        %v1537 = vadd.f32 %v1117, %v1409
        %v1538 = vadd.f32 %v1118, %v1410
        %v1539 = vadd.f32 %v1119, %v1411
        %v1540 = vadd.f32 %v1120, %v1412
        %v1541 = vadd.f32 %v1121, %v1413
        %v1542 = vadd.f32 %v1122, %v1414
        %v1543 = vadd.f32 %v1123, %v1415
        %v1544 = vadd.f32 %v1124, %v1416
        %v1545 = vadd.f32 %v1125, %v1417
        %v1546 = vadd.f32 %v1126, %v1418
        %v1547 = vadd.f32 %v1127, %v1419
        %v1548 = vadd.f32 %v1128, %v1420
        %v1549 = vadd.f32 %v1129, %v1421
        %v1550 = vadd.f32 %v1130, %v1422
        %v1551 = vadd.f32 %v1131, %v1423
        %v1552 = vadd.f32 %v1132, %v1424
        %v1553 = vadd.f32 %v1133, %v1425
        %v1554 = vadd.f32 %v1134, %v1426
        %v1555 = vadd.f32 %v1135, %v1427
        %v1556 = vadd.f32 %v1136, %v1428
        %v1557 = vadd.f32 %v1137, %v1429
        %v1558 = vadd.f32 %v1138, %v1430
        %v1559 = vadd.f32 %v1139, %v1431
        %v1560 = vadd.f32 %v1140, %v1432
        %v1561 = vadd.f32 %v1141, %v1433
        %v1562 = vadd.f32 %v1142, %v1434
        %v1563 = vadd.f32 %v1143, %v1435
        %v1564 = vadd.f32 %v1144, %v1436
        %v1565 = vadd.f32 %v1145, %v1437
        %v1566 = vadd.f32 %v1146, %v1438
        %v1567 = vadd.f32 %v1147, %v1439
        %v1568 = vadd.f32 %v1148, %v1440
        %v1569 = vadd.f32 %v1149, %v1441
        %v1570 = vadd.f32 %v1150, %v1442
        %v1571 = vadd.f32 %v1151, %v1443
        %v1572 = vadd.f32 %v1152, %v1444
        %v1573 = vadd.f32 %v1153, %v1445
        %v1574 = vadd.f32 %v1154, %v1446
        %v1575 = vadd.f32 %v1155, %v1447
        %v1576 = vadd.f32 %v1156, %v1448
        %v1577 = vadd.f32 %v1157, %v1449
        %v1578 = vadd.f32 %v1158, %v1450
        %v1579 = vadd.f32 %v1159, %v1451
        %v1580 = vadd.f32 %v1160, %v1452
        %v1581 = vadd.f32 %v1161, %v1453
        %v1582 = vadd.f32 %v1162, %v1454
        %v1583 = vadd.f32 %v1163, %v1455
        %v1584 = vadd.f32 %v1164, %v1456
        %v1585 = vadd.f32 %v1165, %v1457
        %v1586 = vadd.f32 %v1166, %v1458
        %v1587 = vadd.f32 %v1167, %v1459
        %v1588 = vadd.f32 %v1168, %v1460
        %v1589 = vadd.f32 %v1169, %v1461
        %v1590 = vadd.f32 %v1170, %v1462
        %v1591 = vadd.f32 %v1171, %v1463
        %v1592 = vadd.f32 %v1172, %v1464
        %v1593 = vadd.f32 %v1173, %v1465
        %v1594 = vadd.f32 %v1174, %v1466
        %v1595 = vadd.f32 %v1175, %v1467
        %v1596 = vadd.f32 %v1176, %v1468
        %v1597 = vadd.f32 %v1177, %v1469
        %v1598 = vadd.f32 %v1178, %v1470
        %v1599 = vadd.f32 %v1179, %v1471
        %v1600 = vadd.f32 %v1180, %v1472
        %v1601 = vadd.f32 %v1181, %v1473
        %v1602 = vadd.f32 %v1182, %v1474
        %v1603 = vadd.f32 %v1183, %v1475
        %v1604 = vadd.f32 %v1184, %v1476
        %v1605 = vadd.f32 %v1185, %v1477
        %v1606 = vadd.f32 %v1186, %v1478
        %v1607 = vadd.f32 %v1187, %v1479
        %v1608 = vadd.f32 %v1188, %v1480
        %v1609 = vadd.f32 %v1189, %v1481
        %v1610 = vadd.f32 %v1190, %v1482
        %v1611 = vadd.f32 %v1191, %v1483
        %v1612 = vadd.f32 %v1192, %v1484
        %v1613 = vadd.f32 %v1193, %v1485
        %v1614 = vadd.f32 %v1194, %v1486
        %v1615 = vadd.f32 %v1195, %v1487
        %v1616 = vadd.f32 %v1196, %v1488
        %v1617 = vadd.f32 %v1197, %v1489
        %v1618 = vadd.f32 %v1198, %v1490
        %v1619 = vadd.f32 %v1199, %v1491
        %v1620 = vadd.f32 %v1200, %v1492
        %v1621 = vadd.f32 %v1201, %v1493
        %v1622 = vadd.f32 %v1202, %v1494
        %v1623 = vadd.f32 %v1203, %v1495
        %v1624 = vadd.f32 %v1204, %v1496
        %v1625 = vadd.f32 %v1205, %v1497
        %v1626 = vadd.f32 %v1206, %v1498
        %v1627 = vadd.f32 %v1207, %v1499
        %v1628 = vadd.f32 %v1208, %v1500
        %v1629 = vadd.f32 %v1209, %v1501
        %v1630 = vadd.f32 %v1210, %v1502
        %v1631 = vadd.f32 %v1211, %v1503
        %v1632 = vadd.f32 %v1212, %v1504
        %v1633 = vadd.f32 %v1213, %v1505
        %v1634 = vadd.f32 %v1214, %v1506
        %v1635 = vld [vmem:[%s3] sm:$0xff]
        %v1636 = vld [vmem:[%s3 + $0x8] sm:$0xff]
        %v1637 = vld [vmem:[%s3 + $0x10] sm:$0xff]
        %v1638 = vld [vmem:[%s3 + $0x18] sm:$0xff]
        %v1639 = vld [vmem:[%s3 + $0x20] sm:$0xff]
        %v1640 = vld [vmem:[%s3 + $0x28] sm:$0xff]
        %v1641 = vld [vmem:[%s3 + $0x30] sm:$0xff]
        %v1642 = vld [vmem:[%s3 + $0x38] sm:$0xff]
        %v1643 = vld [vmem:[%s3 + $0x40] sm:$0xff]
        %v1644 = vld [vmem:[%s3 + $0x48] sm:$0xff]
        %v1645 = vld [vmem:[%s3 + $0x50] sm:$0xff]
        %v1646 = vld [vmem:[%s3 + $0x58] sm:$0xff]
        %v1647 = vld [vmem:[%s3 + $0x60] sm:$0xff]
        %v1648 = vld [vmem:[%s3 + $0x68] sm:$0xff]
        %v1649 = vld [vmem:[%s3 + $0x70] sm:$0xff]
        %v1650 = vld [vmem:[%s3 + $0x78] sm:$0xff]
        %v1651 = vld [vmem:[%s3 + $0x80] sm:$0xff]
        %v1652 = vld [vmem:[%s3 + $0x88] sm:$0xff]
        %v1653 = vld [vmem:[%s3 + $0x90] sm:$0xff]
        %v1654 = vld [vmem:[%s3 + $0x98] sm:$0xff]
        %v1655 = vld [vmem:[%s3 + $0xa0] sm:$0xff]
        %v1656 = vld [vmem:[%s3 + $0xa8] sm:$0xff]
        %v1657 = vld [vmem:[%s3 + $0xb0] sm:$0xff]
        %v1658 = vld [vmem:[%s3 + $0xb8] sm:$0xff]
        %v1659 = vld [vmem:[%s3 + $0xc0] sm:$0xff]
        %v1660 = vld [vmem:[%s3 + $0xc8] sm:$0xff]
        %v1661 = vld [vmem:[%s3 + $0xd0] sm:$0xff]
        %v1662 = vld [vmem:[%s3 + $0xd8] sm:$0xff]
        %v1663 = vld [vmem:[%s3 + $0xe0] sm:$0xff]
        %v1664 = vld [vmem:[%s3 + $0xe8] sm:$0xff]
        %v1665 = vld [vmem:[%s3 + $0xf0] sm:$0xff]
        %v1666 = vld [vmem:[%s3 + $0xf8] sm:$0xff]
        %1668 = vset.pattern.permute.xlu0 0
        %1669 = vperm.xlu0 %1668, %v1635
        %v1670 = vpop.permute.xlu0 %1669
        %1673 = vset.pattern.permute.xlu0 0
        %1674 = vperm.xlu0 %1673, %v1636
        %v1675 = vpop.permute.xlu0 %1674
        %1678 = vset.pattern.permute.xlu0 0
        %1679 = vperm.xlu0 %1678, %v1637
        %v1680 = vpop.permute.xlu0 %1679
        %1683 = vset.pattern.permute.xlu0 0
        %1684 = vperm.xlu0 %1683, %v1638
        %v1685 = vpop.permute.xlu0 %1684
        %1688 = vset.pattern.permute.xlu0 0
        %1689 = vperm.xlu0 %1688, %v1639
        %v1690 = vpop.permute.xlu0 %1689
        %1693 = vset.pattern.permute.xlu0 0
        %1694 = vperm.xlu0 %1693, %v1640
        %v1695 = vpop.permute.xlu0 %1694
        %1698 = vset.pattern.permute.xlu0 0
        %1699 = vperm.xlu0 %1698, %v1641
        %v1700 = vpop.permute.xlu0 %1699
        %1703 = vset.pattern.permute.xlu0 0
        %1704 = vperm.xlu0 %1703, %v1642
        %v1705 = vpop.permute.xlu0 %1704
        %1708 = vset.pattern.permute.xlu0 0
        %1709 = vperm.xlu0 %1708, %v1643
        %v1710 = vpop.permute.xlu0 %1709
        %1713 = vset.pattern.permute.xlu0 0
        %1714 = vperm.xlu0 %1713, %v1644
        %v1715 = vpop.permute.xlu0 %1714
        %1718 = vset.pattern.permute.xlu0 0
        %1719 = vperm.xlu0 %1718, %v1645
        %v1720 = vpop.permute.xlu0 %1719
        %1723 = vset.pattern.permute.xlu0 0
        %1724 = vperm.xlu0 %1723, %v1646
        %v1725 = vpop.permute.xlu0 %1724
        %1728 = vset.pattern.permute.xlu0 0
        %1729 = vperm.xlu0 %1728, %v1647
        %v1730 = vpop.permute.xlu0 %1729
        %1733 = vset.pattern.permute.xlu0 0
        %1734 = vperm.xlu0 %1733, %v1648
        %v1735 = vpop.permute.xlu0 %1734
        %1738 = vset.pattern.permute.xlu0 0
        %1739 = vperm.xlu0 %1738, %v1649
        %v1740 = vpop.permute.xlu0 %1739
        %1743 = vset.pattern.permute.xlu0 0
        %1744 = vperm.xlu0 %1743, %v1650
        %v1745 = vpop.permute.xlu0 %1744
        %1748 = vset.pattern.permute.xlu0 0
        %1749 = vperm.xlu0 %1748, %v1651
        %v1750 = vpop.permute.xlu0 %1749
        %1753 = vset.pattern.permute.xlu0 0
        %1754 = vperm.xlu0 %1753, %v1652
        %v1755 = vpop.permute.xlu0 %1754
        %1758 = vset.pattern.permute.xlu0 0
        %1759 = vperm.xlu0 %1758, %v1653
        %v1760 = vpop.permute.xlu0 %1759
        %1763 = vset.pattern.permute.xlu0 0
        %1764 = vperm.xlu0 %1763, %v1654
        %v1765 = vpop.permute.xlu0 %1764
        %1768 = vset.pattern.permute.xlu0 0
        %1769 = vperm.xlu0 %1768, %v1655
        %v1770 = vpop.permute.xlu0 %1769
        %1773 = vset.pattern.permute.xlu0 0
        %1774 = vperm.xlu0 %1773, %v1656
        %v1775 = vpop.permute.xlu0 %1774
        %1778 = vset.pattern.permute.xlu0 0
        %1779 = vperm.xlu0 %1778, %v1657
        %v1780 = vpop.permute.xlu0 %1779
        %1783 = vset.pattern.permute.xlu0 0
        %1784 = vperm.xlu0 %1783, %v1658
        %v1785 = vpop.permute.xlu0 %1784
        %1788 = vset.pattern.permute.xlu0 0
        %1789 = vperm.xlu0 %1788, %v1659
        %v1790 = vpop.permute.xlu0 %1789
        %1793 = vset.pattern.permute.xlu0 0
        %1794 = vperm.xlu0 %1793, %v1660
        %v1795 = vpop.permute.xlu0 %1794
        %1798 = vset.pattern.permute.xlu0 0
        %1799 = vperm.xlu0 %1798, %v1661
        %v1800 = vpop.permute.xlu0 %1799
        %1803 = vset.pattern.permute.xlu0 0
        %1804 = vperm.xlu0 %1803, %v1662
        %v1805 = vpop.permute.xlu0 %1804
        %1808 = vset.pattern.permute.xlu0 0
        %1809 = vperm.xlu0 %1808, %v1663
        %v1810 = vpop.permute.xlu0 %1809
        %1813 = vset.pattern.permute.xlu0 0
        %1814 = vperm.xlu0 %1813, %v1664
        %v1815 = vpop.permute.xlu0 %1814
        %1818 = vset.pattern.permute.xlu0 0
        %1819 = vperm.xlu0 %1818, %v1665
        %v1820 = vpop.permute.xlu0 %1819
        %1823 = vset.pattern.permute.xlu0 0
        %1824 = vperm.xlu0 %1823, %v1666
        %v1825 = vpop.permute.xlu0 %1824
        %v1827 = vadd.f32 %v1507, %v1670
        %v1828 = vadd.f32 %v1508, %v1670
        %v1829 = vadd.f32 %v1509, %v1670
        %v1830 = vadd.f32 %v1510, %v1670
        %v1831 = vadd.f32 %v1511, %v1675
        %v1832 = vadd.f32 %v1512, %v1675
        %v1833 = vadd.f32 %v1513, %v1675
        %v1834 = vadd.f32 %v1514, %v1675
        %v1835 = vadd.f32 %v1515, %v1680
        %v1836 = vadd.f32 %v1516, %v1680
        %v1837 = vadd.f32 %v1517, %v1680
        %v1838 = vadd.f32 %v1518, %v1680
        %v1839 = vadd.f32 %v1519, %v1685
        %v1840 = vadd.f32 %v1520, %v1685
        %v1841 = vadd.f32 %v1521, %v1685
        %v1842 = vadd.f32 %v1522, %v1685
        %v1843 = vadd.f32 %v1523, %v1690
        %v1844 = vadd.f32 %v1524, %v1690
        %v1845 = vadd.f32 %v1525, %v1690
        %v1846 = vadd.f32 %v1526, %v1690
        %v1847 = vadd.f32 %v1527, %v1695
        %v1848 = vadd.f32 %v1528, %v1695
        %v1849 = vadd.f32 %v1529, %v1695
        %v1850 = vadd.f32 %v1530, %v1695
        %v1851 = vadd.f32 %v1531, %v1700
        %v1852 = vadd.f32 %v1532, %v1700
        %v1853 = vadd.f32 %v1533, %v1700
        %v1854 = vadd.f32 %v1534, %v1700
        %v1855 = vadd.f32 %v1535, %v1705
        %v1856 = vadd.f32 %v1536, %v1705
        %v1857 = vadd.f32 %v1537, %v1705
        %v1858 = vadd.f32 %v1538, %v1705
        %v1859 = vadd.f32 %v1539, %v1710
        %v1860 = vadd.f32 %v1540, %v1710
        %v1861 = vadd.f32 %v1541, %v1710
        %v1862 = vadd.f32 %v1542, %v1710
        %v1863 = vadd.f32 %v1543, %v1715
        %v1864 = vadd.f32 %v1544, %v1715
        %v1865 = vadd.f32 %v1545, %v1715
        %v1866 = vadd.f32 %v1546, %v1715
        %v1867 = vadd.f32 %v1547, %v1720
        %v1868 = vadd.f32 %v1548, %v1720
        %v1869 = vadd.f32 %v1549, %v1720
        %v1870 = vadd.f32 %v1550, %v1720
        %v1871 = vadd.f32 %v1551, %v1725
        %v1872 = vadd.f32 %v1552, %v1725
        %v1873 = vadd.f32 %v1553, %v1725
        %v1874 = vadd.f32 %v1554, %v1725
        %v1875 = vadd.f32 %v1555, %v1730
        %v1876 = vadd.f32 %v1556, %v1730
        %v1877 = vadd.f32 %v1557, %v1730
        %v1878 = vadd.f32 %v1558, %v1730
        %v1879 = vadd.f32 %v1559, %v1735
        %v1880 = vadd.f32 %v1560, %v1735
        %v1881 = vadd.f32 %v1561, %v1735
        %v1882 = vadd.f32 %v1562, %v1735
        %v1883 = vadd.f32 %v1563, %v1740
        %v1884 = vadd.f32 %v1564, %v1740
        %v1885 = vadd.f32 %v1565, %v1740
        %v1886 = vadd.f32 %v1566, %v1740
        %v1887 = vadd.f32 %v1567, %v1745
        %v1888 = vadd.f32 %v1568, %v1745
        %v1889 = vadd.f32 %v1569, %v1745
        %v1890 = vadd.f32 %v1570, %v1745
        %v1891 = vadd.f32 %v1571, %v1750
        %v1892 = vadd.f32 %v1572, %v1750
        %v1893 = vadd.f32 %v1573, %v1750
        %v1894 = vadd.f32 %v1574, %v1750
        %v1895 = vadd.f32 %v1575, %v1755
        %v1896 = vadd.f32 %v1576, %v1755
        %v1897 = vadd.f32 %v1577, %v1755
        %v1898 = vadd.f32 %v1578, %v1755
        %v1899 = vadd.f32 %v1579, %v1760
        %v1900 = vadd.f32 %v1580, %v1760
        %v1901 = vadd.f32 %v1581, %v1760
        %v1902 = vadd.f32 %v1582, %v1760
        %v1903 = vadd.f32 %v1583, %v1765
        %v1904 = vadd.f32 %v1584, %v1765
        %v1905 = vadd.f32 %v1585, %v1765
        %v1906 = vadd.f32 %v1586, %v1765
        %v1907 = vadd.f32 %v1587, %v1770
        %v1908 = vadd.f32 %v1588, %v1770
        %v1909 = vadd.f32 %v1589, %v1770
        %v1910 = vadd.f32 %v1590, %v1770
        %v1911 = vadd.f32 %v1591, %v1775
        %v1912 = vadd.f32 %v1592, %v1775
        %v1913 = vadd.f32 %v1593, %v1775
        %v1914 = vadd.f32 %v1594, %v1775
        %v1915 = vadd.f32 %v1595, %v1780
        %v1916 = vadd.f32 %v1596, %v1780
        %v1917 = vadd.f32 %v1597, %v1780
        %v1918 = vadd.f32 %v1598, %v1780
        %v1919 = vadd.f32 %v1599, %v1785
        %v1920 = vadd.f32 %v1600, %v1785
        %v1921 = vadd.f32 %v1601, %v1785
        %v1922 = vadd.f32 %v1602, %v1785
        %v1923 = vadd.f32 %v1603, %v1790
        %v1924 = vadd.f32 %v1604, %v1790
        %v1925 = vadd.f32 %v1605, %v1790
        %v1926 = vadd.f32 %v1606, %v1790
        %v1927 = vadd.f32 %v1607, %v1795
        %v1928 = vadd.f32 %v1608, %v1795
        %v1929 = vadd.f32 %v1609, %v1795
        %v1930 = vadd.f32 %v1610, %v1795
        %v1931 = vadd.f32 %v1611, %v1800
        %v1932 = vadd.f32 %v1612, %v1800
        %v1933 = vadd.f32 %v1613, %v1800
        %v1934 = vadd.f32 %v1614, %v1800
        %v1935 = vadd.f32 %v1615, %v1805
        %v1936 = vadd.f32 %v1616, %v1805
        %v1937 = vadd.f32 %v1617, %v1805
        %v1938 = vadd.f32 %v1618, %v1805
        %v1939 = vadd.f32 %v1619, %v1810
        %v1940 = vadd.f32 %v1620, %v1810
        %v1941 = vadd.f32 %v1621, %v1810
        %v1942 = vadd.f32 %v1622, %v1810
        %v1943 = vadd.f32 %v1623, %v1815
        %v1944 = vadd.f32 %v1624, %v1815
        %v1945 = vadd.f32 %v1625, %v1815
        %v1946 = vadd.f32 %v1626, %v1815
        %v1947 = vadd.f32 %v1627, %v1820
        %v1948 = vadd.f32 %v1628, %v1820
        %v1949 = vadd.f32 %v1629, %v1820
        %v1950 = vadd.f32 %v1630, %v1820
        %v1951 = vadd.f32 %v1631, %v1825
        %v1952 = vadd.f32 %v1632, %v1825
        %v1953 = vadd.f32 %v1633, %v1825
        %v1954 = vadd.f32 %v1634, %v1825
        %vm1955 = vcmp.ge.f32.partialorder %v1827, 0.0
        %vm1956 = vcmp.ge.f32.partialorder %v1828, 0.0
        %vm1957 = vcmp.ge.f32.partialorder %v1829, 0.0
        %vm1958 = vcmp.ge.f32.partialorder %v1830, 0.0
        %vm1959 = vcmp.ge.f32.partialorder %v1831, 0.0
        %vm1960 = vcmp.ge.f32.partialorder %v1832, 0.0
        %vm1961 = vcmp.ge.f32.partialorder %v1833, 0.0
        %vm1962 = vcmp.ge.f32.partialorder %v1834, 0.0
        %vm1963 = vcmp.ge.f32.partialorder %v1835, 0.0
        %vm1964 = vcmp.ge.f32.partialorder %v1836, 0.0
        %vm1965 = vcmp.ge.f32.partialorder %v1837, 0.0
        %vm1966 = vcmp.ge.f32.partialorder %v1838, 0.0
        %vm1967 = vcmp.ge.f32.partialorder %v1839, 0.0
        %vm1968 = vcmp.ge.f32.partialorder %v1840, 0.0
        %vm1969 = vcmp.ge.f32.partialorder %v1841, 0.0
        %vm1970 = vcmp.ge.f32.partialorder %v1842, 0.0
        %vm1971 = vcmp.ge.f32.partialorder %v1843, 0.0
        %vm1972 = vcmp.ge.f32.partialorder %v1844, 0.0
        %vm1973 = vcmp.ge.f32.partialorder %v1845, 0.0
        %vm1974 = vcmp.ge.f32.partialorder %v1846, 0.0
        %vm1975 = vcmp.ge.f32.partialorder %v1847, 0.0
        %vm1976 = vcmp.ge.f32.partialorder %v1848, 0.0
        %vm1977 = vcmp.ge.f32.partialorder %v1849, 0.0
        %vm1978 = vcmp.ge.f32.partialorder %v1850, 0.0
        %vm1979 = vcmp.ge.f32.partialorder %v1851, 0.0
        %vm1980 = vcmp.ge.f32.partialorder %v1852, 0.0
        %vm1981 = vcmp.ge.f32.partialorder %v1853, 0.0
        %vm1982 = vcmp.ge.f32.partialorder %v1854, 0.0
        %vm1983 = vcmp.ge.f32.partialorder %v1855, 0.0
        %vm1984 = vcmp.ge.f32.partialorder %v1856, 0.0
        %vm1985 = vcmp.ge.f32.partialorder %v1857, 0.0
        %vm1986 = vcmp.ge.f32.partialorder %v1858, 0.0
        %vm1987 = vcmp.ge.f32.partialorder %v1859, 0.0
        %vm1988 = vcmp.ge.f32.partialorder %v1860, 0.0
        %vm1989 = vcmp.ge.f32.partialorder %v1861, 0.0
        %vm1990 = vcmp.ge.f32.partialorder %v1862, 0.0
        %vm1991 = vcmp.ge.f32.partialorder %v1863, 0.0
        %vm1992 = vcmp.ge.f32.partialorder %v1864, 0.0
        %vm1993 = vcmp.ge.f32.partialorder %v1865, 0.0
        %vm1994 = vcmp.ge.f32.partialorder %v1866, 0.0
        %vm1995 = vcmp.ge.f32.partialorder %v1867, 0.0
        %vm1996 = vcmp.ge.f32.partialorder %v1868, 0.0
        %vm1997 = vcmp.ge.f32.partialorder %v1869, 0.0
        %vm1998 = vcmp.ge.f32.partialorder %v1870, 0.0
        %vm1999 = vcmp.ge.f32.partialorder %v1871, 0.0
        %vm2000 = vcmp.ge.f32.partialorder %v1872, 0.0
        %vm2001 = vcmp.ge.f32.partialorder %v1873, 0.0
        %vm2002 = vcmp.ge.f32.partialorder %v1874, 0.0
        %vm2003 = vcmp.ge.f32.partialorder %v1875, 0.0
        %vm2004 = vcmp.ge.f32.partialorder %v1876, 0.0
        %vm2005 = vcmp.ge.f32.partialorder %v1877, 0.0
        %vm2006 = vcmp.ge.f32.partialorder %v1878, 0.0
        %vm2007 = vcmp.ge.f32.partialorder %v1879, 0.0
        %vm2008 = vcmp.ge.f32.partialorder %v1880, 0.0
        %vm2009 = vcmp.ge.f32.partialorder %v1881, 0.0
        %vm2010 = vcmp.ge.f32.partialorder %v1882, 0.0
        %vm2011 = vcmp.ge.f32.partialorder %v1883, 0.0
        %vm2012 = vcmp.ge.f32.partialorder %v1884, 0.0
        %vm2013 = vcmp.ge.f32.partialorder %v1885, 0.0
        %vm2014 = vcmp.ge.f32.partialorder %v1886, 0.0
        %vm2015 = vcmp.ge.f32.partialorder %v1887, 0.0
        %vm2016 = vcmp.ge.f32.partialorder %v1888, 0.0
        %vm2017 = vcmp.ge.f32.partialorder %v1889, 0.0
        %vm2018 = vcmp.ge.f32.partialorder %v1890, 0.0
        %vm2019 = vcmp.ge.f32.partialorder %v1891, 0.0
        %vm2020 = vcmp.ge.f32.partialorder %v1892, 0.0
        %vm2021 = vcmp.ge.f32.partialorder %v1893, 0.0
        %vm2022 = vcmp.ge.f32.partialorder %v1894, 0.0
        %vm2023 = vcmp.ge.f32.partialorder %v1895, 0.0
        %vm2024 = vcmp.ge.f32.partialorder %v1896, 0.0
        %vm2025 = vcmp.ge.f32.partialorder %v1897, 0.0
        %vm2026 = vcmp.ge.f32.partialorder %v1898, 0.0
        %vm2027 = vcmp.ge.f32.partialorder %v1899, 0.0
        %vm2028 = vcmp.ge.f32.partialorder %v1900, 0.0
        %vm2029 = vcmp.ge.f32.partialorder %v1901, 0.0
        %vm2030 = vcmp.ge.f32.partialorder %v1902, 0.0
        %vm2031 = vcmp.ge.f32.partialorder %v1903, 0.0
        %vm2032 = vcmp.ge.f32.partialorder %v1904, 0.0
        %vm2033 = vcmp.ge.f32.partialorder %v1905, 0.0
        %vm2034 = vcmp.ge.f32.partialorder %v1906, 0.0
        %vm2035 = vcmp.ge.f32.partialorder %v1907, 0.0
        %vm2036 = vcmp.ge.f32.partialorder %v1908, 0.0
        %vm2037 = vcmp.ge.f32.partialorder %v1909, 0.0
        %vm2038 = vcmp.ge.f32.partialorder %v1910, 0.0
        %vm2039 = vcmp.ge.f32.partialorder %v1911, 0.0
        %vm2040 = vcmp.ge.f32.partialorder %v1912, 0.0
        %vm2041 = vcmp.ge.f32.partialorder %v1913, 0.0
        %vm2042 = vcmp.ge.f32.partialorder %v1914, 0.0
        %vm2043 = vcmp.ge.f32.partialorder %v1915, 0.0
        %vm2044 = vcmp.ge.f32.partialorder %v1916, 0.0
        %vm2045 = vcmp.ge.f32.partialorder %v1917, 0.0
        %vm2046 = vcmp.ge.f32.partialorder %v1918, 0.0
        %vm2047 = vcmp.ge.f32.partialorder %v1919, 0.0
        %vm2048 = vcmp.ge.f32.partialorder %v1920, 0.0
        %vm2049 = vcmp.ge.f32.partialorder %v1921, 0.0
        %vm2050 = vcmp.ge.f32.partialorder %v1922, 0.0
        %vm2051 = vcmp.ge.f32.partialorder %v1923, 0.0
        %vm2052 = vcmp.ge.f32.partialorder %v1924, 0.0
        %vm2053 = vcmp.ge.f32.partialorder %v1925, 0.0
        %vm2054 = vcmp.ge.f32.partialorder %v1926, 0.0
        %vm2055 = vcmp.ge.f32.partialorder %v1927, 0.0
        %vm2056 = vcmp.ge.f32.partialorder %v1928, 0.0
        %vm2057 = vcmp.ge.f32.partialorder %v1929, 0.0
        %vm2058 = vcmp.ge.f32.partialorder %v1930, 0.0
        %vm2059 = vcmp.ge.f32.partialorder %v1931, 0.0
        %vm2060 = vcmp.ge.f32.partialorder %v1932, 0.0
        %vm2061 = vcmp.ge.f32.partialorder %v1933, 0.0
        %vm2062 = vcmp.ge.f32.partialorder %v1934, 0.0
        %vm2063 = vcmp.ge.f32.partialorder %v1935, 0.0
        %vm2064 = vcmp.ge.f32.partialorder %v1936, 0.0
        %vm2065 = vcmp.ge.f32.partialorder %v1937, 0.0
        %vm2066 = vcmp.ge.f32.partialorder %v1938, 0.0
        %vm2067 = vcmp.ge.f32.partialorder %v1939, 0.0
        %vm2068 = vcmp.ge.f32.partialorder %v1940, 0.0
        %vm2069 = vcmp.ge.f32.partialorder %v1941, 0.0
        %vm2070 = vcmp.ge.f32.partialorder %v1942, 0.0
        %vm2071 = vcmp.ge.f32.partialorder %v1943, 0.0
        %vm2072 = vcmp.ge.f32.partialorder %v1944, 0.0
        %vm2073 = vcmp.ge.f32.partialorder %v1945, 0.0
        %vm2074 = vcmp.ge.f32.partialorder %v1946, 0.0
        %vm2075 = vcmp.ge.f32.partialorder %v1947, 0.0
        %vm2076 = vcmp.ge.f32.partialorder %v1948, 0.0
        %vm2077 = vcmp.ge.f32.partialorder %v1949, 0.0
        %vm2078 = vcmp.ge.f32.partialorder %v1950, 0.0
        %vm2079 = vcmp.ge.f32.partialorder %v1951, 0.0
        %vm2080 = vcmp.ge.f32.partialorder %v1952, 0.0
        %vm2081 = vcmp.ge.f32.partialorder %v1953, 0.0
        %vm2082 = vcmp.ge.f32.partialorder %v1954, 0.0
        %v2083 = vstv %s431
        %v2084 = vmul.f32 %v2083, %v1827
        %v2085 = vmul.f32 %v2083, %v1828
        %v2086 = vmul.f32 %v2083, %v1829
        %v2087 = vmul.f32 %v2083, %v1830
        %v2088 = vmul.f32 %v2083, %v1831
        %v2089 = vmul.f32 %v2083, %v1832
        %v2090 = vmul.f32 %v2083, %v1833
        %v2091 = vmul.f32 %v2083, %v1834
        %v2092 = vmul.f32 %v2083, %v1835
        %v2093 = vmul.f32 %v2083, %v1836
        %v2094 = vmul.f32 %v2083, %v1837
        %v2095 = vmul.f32 %v2083, %v1838
        %v2096 = vmul.f32 %v2083, %v1839
        %v2097 = vmul.f32 %v2083, %v1840
        %v2098 = vmul.f32 %v2083, %v1841
        %v2099 = vmul.f32 %v2083, %v1842
        %v2100 = vmul.f32 %v2083, %v1843
        %v2101 = vmul.f32 %v2083, %v1844
        %v2102 = vmul.f32 %v2083, %v1845
        %v2103 = vmul.f32 %v2083, %v1846
        %v2104 = vmul.f32 %v2083, %v1847
        %v2105 = vmul.f32 %v2083, %v1848
        %v2106 = vmul.f32 %v2083, %v1849
        %v2107 = vmul.f32 %v2083, %v1850
        %v2108 = vmul.f32 %v2083, %v1851
        %v2109 = vmul.f32 %v2083, %v1852
        %v2110 = vmul.f32 %v2083, %v1853
        %v2111 = vmul.f32 %v2083, %v1854
        %v2112 = vmul.f32 %v2083, %v1855
        %v2113 = vmul.f32 %v2083, %v1856
        %v2114 = vmul.f32 %v2083, %v1857
        %v2115 = vmul.f32 %v2083, %v1858
        %v2116 = vmul.f32 %v2083, %v1859
        %v2117 = vmul.f32 %v2083, %v1860
        %v2118 = vmul.f32 %v2083, %v1861
        %v2119 = vmul.f32 %v2083, %v1862
        %v2120 = vmul.f32 %v2083, %v1863
        %v2121 = vmul.f32 %v2083, %v1864
        %v2122 = vmul.f32 %v2083, %v1865
        %v2123 = vmul.f32 %v2083, %v1866
        %v2124 = vmul.f32 %v2083, %v1867
        %v2125 = vmul.f32 %v2083, %v1868
        %v2126 = vmul.f32 %v2083, %v1869
        %v2127 = vmul.f32 %v2083, %v1870
        %v2128 = vmul.f32 %v2083, %v1871
        %v2129 = vmul.f32 %v2083, %v1872
        %v2130 = vmul.f32 %v2083, %v1873
        %v2131 = vmul.f32 %v2083, %v1874
        %v2132 = vmul.f32 %v2083, %v1875
        %v2133 = vmul.f32 %v2083, %v1876
        %v2134 = vmul.f32 %v2083, %v1877
        %v2135 = vmul.f32 %v2083, %v1878
        %v2136 = vmul.f32 %v2083, %v1879
        %v2137 = vmul.f32 %v2083, %v1880
        %v2138 = vmul.f32 %v2083, %v1881
        %v2139 = vmul.f32 %v2083, %v1882
        %v2140 = vmul.f32 %v2083, %v1883
        %v2141 = vmul.f32 %v2083, %v1884
        %v2142 = vmul.f32 %v2083, %v1885
        %v2143 = vmul.f32 %v2083, %v1886
        %v2144 = vmul.f32 %v2083, %v1887
        %v2145 = vmul.f32 %v2083, %v1888
        %v2146 = vmul.f32 %v2083, %v1889
        %v2147 = vmul.f32 %v2083, %v1890
        %v2148 = vmul.f32 %v2083, %v1891
        %v2149 = vmul.f32 %v2083, %v1892
        %v2150 = vmul.f32 %v2083, %v1893
        %v2151 = vmul.f32 %v2083, %v1894
        %v2152 = vmul.f32 %v2083, %v1895
        %v2153 = vmul.f32 %v2083, %v1896
        %v2154 = vmul.f32 %v2083, %v1897
        %v2155 = vmul.f32 %v2083, %v1898
        %v2156 = vmul.f32 %v2083, %v1899
        %v2157 = vmul.f32 %v2083, %v1900
        %v2158 = vmul.f32 %v2083, %v1901
        %v2159 = vmul.f32 %v2083, %v1902
        %v2160 = vmul.f32 %v2083, %v1903
        %v2161 = vmul.f32 %v2083, %v1904
        %v2162 = vmul.f32 %v2083, %v1905
        %v2163 = vmul.f32 %v2083, %v1906
        %v2164 = vmul.f32 %v2083, %v1907
        %v2165 = vmul.f32 %v2083, %v1908
        %v2166 = vmul.f32 %v2083, %v1909
        %v2167 = vmul.f32 %v2083, %v1910
        %v2168 = vmul.f32 %v2083, %v1911
        %v2169 = vmul.f32 %v2083, %v1912
        %v2170 = vmul.f32 %v2083, %v1913
        %v2171 = vmul.f32 %v2083, %v1914
        %v2172 = vmul.f32 %v2083, %v1915
        %v2173 = vmul.f32 %v2083, %v1916
        %v2174 = vmul.f32 %v2083, %v1917
        %v2175 = vmul.f32 %v2083, %v1918
        %v2176 = vmul.f32 %v2083, %v1919
        %v2177 = vmul.f32 %v2083, %v1920
        %v2178 = vmul.f32 %v2083, %v1921
        %v2179 = vmul.f32 %v2083, %v1922
        %v2180 = vmul.f32 %v2083, %v1923
        %v2181 = vmul.f32 %v2083, %v1924
        %v2182 = vmul.f32 %v2083, %v1925
        %v2183 = vmul.f32 %v2083, %v1926
        %v2184 = vmul.f32 %v2083, %v1927
        %v2185 = vmul.f32 %v2083, %v1928
        %v2186 = vmul.f32 %v2083, %v1929
        %v2187 = vmul.f32 %v2083, %v1930
        %v2188 = vmul.f32 %v2083, %v1931
        %v2189 = vmul.f32 %v2083, %v1932
        %v2190 = vmul.f32 %v2083, %v1933
        %v2191 = vmul.f32 %v2083, %v1934
        %v2192 = vmul.f32 %v2083, %v1935
        %v2193 = vmul.f32 %v2083, %v1936
        %v2194 = vmul.f32 %v2083, %v1937
        %v2195 = vmul.f32 %v2083, %v1938
        %v2196 = vmul.f32 %v2083, %v1939
        %v2197 = vmul.f32 %v2083, %v1940
        %v2198 = vmul.f32 %v2083, %v1941
        %v2199 = vmul.f32 %v2083, %v1942
        %v2200 = vmul.f32 %v2083, %v1943
        %v2201 = vmul.f32 %v2083, %v1944
        %v2202 = vmul.f32 %v2083, %v1945
        %v2203 = vmul.f32 %v2083, %v1946
        %v2204 = vmul.f32 %v2083, %v1947
        %v2205 = vmul.f32 %v2083, %v1948
        %v2206 = vmul.f32 %v2083, %v1949
        %v2207 = vmul.f32 %v2083, %v1950
        %v2208 = vmul.f32 %v2083, %v1951
        %v2209 = vmul.f32 %v2083, %v1952
        %v2210 = vmul.f32 %v2083, %v1953
        %v2211 = vmul.f32 %v2083, %v1954
        %v2212 = vsel %vm1955, %v1827, %v2084
        %v2213 = vsel %vm1956, %v1828, %v2085
        %v2214 = vsel %vm1957, %v1829, %v2086
        %v2215 = vsel %vm1958, %v1830, %v2087
        %v2216 = vsel %vm1959, %v1831, %v2088
        %v2217 = vsel %vm1960, %v1832, %v2089
        %v2218 = vsel %vm1961, %v1833, %v2090
        %v2219 = vsel %vm1962, %v1834, %v2091
        %v2220 = vsel %vm1963, %v1835, %v2092
        %v2221 = vsel %vm1964, %v1836, %v2093
        %v2222 = vsel %vm1965, %v1837, %v2094
        %v2223 = vsel %vm1966, %v1838, %v2095
        %v2224 = vsel %vm1967, %v1839, %v2096
        %v2225 = vsel %vm1968, %v1840, %v2097
        %v2226 = vsel %vm1969, %v1841, %v2098
        %v2227 = vsel %vm1970, %v1842, %v2099
        %v2228 = vsel %vm1971, %v1843, %v2100
        %v2229 = vsel %vm1972, %v1844, %v2101
        %v2230 = vsel %vm1973, %v1845, %v2102
        %v2231 = vsel %vm1974, %v1846, %v2103
        %v2232 = vsel %vm1975, %v1847, %v2104
        %v2233 = vsel %vm1976, %v1848, %v2105
        %v2234 = vsel %vm1977, %v1849, %v2106
        %v2235 = vsel %vm1978, %v1850, %v2107
        %v2236 = vsel %vm1979, %v1851, %v2108
        %v2237 = vsel %vm1980, %v1852, %v2109
        %v2238 = vsel %vm1981, %v1853, %v2110
        %v2239 = vsel %vm1982, %v1854, %v2111
        %v2240 = vsel %vm1983, %v1855, %v2112
        %v2241 = vsel %vm1984, %v1856, %v2113
        %v2242 = vsel %vm1985, %v1857, %v2114
        %v2243 = vsel %vm1986, %v1858, %v2115
        %v2244 = vsel %vm1987, %v1859, %v2116
        %v2245 = vsel %vm1988, %v1860, %v2117
        %v2246 = vsel %vm1989, %v1861, %v2118
        %v2247 = vsel %vm1990, %v1862, %v2119
        %v2248 = vsel %vm1991, %v1863, %v2120
        %v2249 = vsel %vm1992, %v1864, %v2121
        %v2250 = vsel %vm1993, %v1865, %v2122
        %v2251 = vsel %vm1994, %v1866, %v2123
        %v2252 = vsel %vm1995, %v1867, %v2124
        %v2253 = vsel %vm1996, %v1868, %v2125
        %v2254 = vsel %vm1997, %v1869, %v2126
        %v2255 = vsel %vm1998, %v1870, %v2127
        %v2256 = vsel %vm1999, %v1871, %v2128
        %v2257 = vsel %vm2000, %v1872, %v2129
        %v2258 = vsel %vm2001, %v1873, %v2130
        %v2259 = vsel %vm2002, %v1874, %v2131
        %v2260 = vsel %vm2003, %v1875, %v2132
        %v2261 = vsel %vm2004, %v1876, %v2133
        %v2262 = vsel %vm2005, %v1877, %v2134
        %v2263 = vsel %vm2006, %v1878, %v2135
        %v2264 = vsel %vm2007, %v1879, %v2136
        %v2265 = vsel %vm2008, %v1880, %v2137
        %v2266 = vsel %vm2009, %v1881, %v2138
        %v2267 = vsel %vm2010, %v1882, %v2139
        %v2268 = vsel %vm2011, %v1883, %v2140
        %v2269 = vsel %vm2012, %v1884, %v2141
        %v2270 = vsel %vm2013, %v1885, %v2142
        %v2271 = vsel %vm2014, %v1886, %v2143
        %v2272 = vsel %vm2015, %v1887, %v2144
        %v2273 = vsel %vm2016, %v1888, %v2145
        %v2274 = vsel %vm2017, %v1889, %v2146
        %v2275 = vsel %vm2018, %v1890, %v2147
        %v2276 = vsel %vm2019, %v1891, %v2148
        %v2277 = vsel %vm2020, %v1892, %v2149
        %v2278 = vsel %vm2021, %v1893, %v2150
        %v2279 = vsel %vm2022, %v1894, %v2151
        %v2280 = vsel %vm2023, %v1895, %v2152
        %v2281 = vsel %vm2024, %v1896, %v2153
        %v2282 = vsel %vm2025, %v1897, %v2154
        %v2283 = vsel %vm2026, %v1898, %v2155
        %v2284 = vsel %vm2027, %v1899, %v2156
        %v2285 = vsel %vm2028, %v1900, %v2157
        %v2286 = vsel %vm2029, %v1901, %v2158
        %v2287 = vsel %vm2030, %v1902, %v2159
        %v2288 = vsel %vm2031, %v1903, %v2160
        %v2289 = vsel %vm2032, %v1904, %v2161
        %v2290 = vsel %vm2033, %v1905, %v2162
        %v2291 = vsel %vm2034, %v1906, %v2163
        %v2292 = vsel %vm2035, %v1907, %v2164
        %v2293 = vsel %vm2036, %v1908, %v2165
        %v2294 = vsel %vm2037, %v1909, %v2166
        %v2295 = vsel %vm2038, %v1910, %v2167
        %v2296 = vsel %vm2039, %v1911, %v2168
        %v2297 = vsel %vm2040, %v1912, %v2169
        %v2298 = vsel %vm2041, %v1913, %v2170
        %v2299 = vsel %vm2042, %v1914, %v2171
        %v2300 = vsel %vm2043, %v1915, %v2172
        %v2301 = vsel %vm2044, %v1916, %v2173
        %v2302 = vsel %vm2045, %v1917, %v2174
        %v2303 = vsel %vm2046, %v1918, %v2175
        %v2304 = vsel %vm2047, %v1919, %v2176
        %v2305 = vsel %vm2048, %v1920, %v2177
        %v2306 = vsel %vm2049, %v1921, %v2178
        %v2307 = vsel %vm2050, %v1922, %v2179
        %v2308 = vsel %vm2051, %v1923, %v2180
        %v2309 = vsel %vm2052, %v1924, %v2181
        %v2310 = vsel %vm2053, %v1925, %v2182
        %v2311 = vsel %vm2054, %v1926, %v2183
        %v2312 = vsel %vm2055, %v1927, %v2184
        %v2313 = vsel %vm2056, %v1928, %v2185
        %v2314 = vsel %vm2057, %v1929, %v2186
        %v2315 = vsel %vm2058, %v1930, %v2187
        %v2316 = vsel %vm2059, %v1931, %v2188
        %v2317 = vsel %vm2060, %v1932, %v2189
        %v2318 = vsel %vm2061, %v1933, %v2190
        %v2319 = vsel %vm2062, %v1934, %v2191
        %v2320 = vsel %vm2063, %v1935, %v2192
        %v2321 = vsel %vm2064, %v1936, %v2193
        %v2322 = vsel %vm2065, %v1937, %v2194
        %v2323 = vsel %vm2066, %v1938, %v2195
        %v2324 = vsel %vm2067, %v1939, %v2196
        %v2325 = vsel %vm2068, %v1940, %v2197
        %v2326 = vsel %vm2069, %v1941, %v2198
        %v2327 = vsel %vm2070, %v1942, %v2199
        %v2328 = vsel %vm2071, %v1943, %v2200
        %v2329 = vsel %vm2072, %v1944, %v2201
        %v2330 = vsel %vm2073, %v1945, %v2202
        %v2331 = vsel %vm2074, %v1946, %v2203
        %v2332 = vsel %vm2075, %v1947, %v2204
        %v2333 = vsel %vm2076, %v1948, %v2205
        %v2334 = vsel %vm2077, %v1949, %v2206
        %v2335 = vsel %vm2078, %v1950, %v2207
        %v2336 = vsel %vm2079, %v1951, %v2208
        %v2337 = vsel %vm2080, %v1952, %v2209
        %v2338 = vsel %vm2081, %v1953, %v2210
        %v2339 = vsel %vm2082, %v1954, %v2211
        %v2340 = vpack.c.bf16 %v2216, %v2212
        %v2341 = vpack.c.bf16 %v2217, %v2213
        %v2342 = vpack.c.bf16 %v2218, %v2214
        %v2343 = vpack.c.bf16 %v2219, %v2215
        %v2344 = vpack.c.bf16 %v2224, %v2220
        %v2345 = vpack.c.bf16 %v2225, %v2221
        %v2346 = vpack.c.bf16 %v2226, %v2222
        %v2347 = vpack.c.bf16 %v2227, %v2223
        %v2348 = vpack.c.bf16 %v2232, %v2228
        %v2349 = vpack.c.bf16 %v2233, %v2229
        %v2350 = vpack.c.bf16 %v2234, %v2230
        %v2351 = vpack.c.bf16 %v2235, %v2231
        %v2352 = vpack.c.bf16 %v2240, %v2236
        %v2353 = vpack.c.bf16 %v2241, %v2237
        %v2354 = vpack.c.bf16 %v2242, %v2238
        %v2355 = vpack.c.bf16 %v2243, %v2239
        %v2356 = vpack.c.bf16 %v2248, %v2244
        %v2357 = vpack.c.bf16 %v2249, %v2245
        %v2358 = vpack.c.bf16 %v2250, %v2246
        %v2359 = vpack.c.bf16 %v2251, %v2247
        %v2360 = vpack.c.bf16 %v2256, %v2252
        %v2361 = vpack.c.bf16 %v2257, %v2253
        %v2362 = vpack.c.bf16 %v2258, %v2254
        %v2363 = vpack.c.bf16 %v2259, %v2255
        %v2364 = vpack.c.bf16 %v2264, %v2260
        %v2365 = vpack.c.bf16 %v2265, %v2261
        %v2366 = vpack.c.bf16 %v2266, %v2262
        %v2367 = vpack.c.bf16 %v2267, %v2263
        %v2368 = vpack.c.bf16 %v2272, %v2268
        %v2369 = vpack.c.bf16 %v2273, %v2269
        %v2370 = vpack.c.bf16 %v2274, %v2270
        %v2371 = vpack.c.bf16 %v2275, %v2271
        %v2372 = vpack.c.bf16 %v2280, %v2276
        %v2373 = vpack.c.bf16 %v2281, %v2277
        %v2374 = vpack.c.bf16 %v2282, %v2278
        %v2375 = vpack.c.bf16 %v2283, %v2279
        %v2376 = vpack.c.bf16 %v2288, %v2284
        %v2377 = vpack.c.bf16 %v2289, %v2285
        %v2378 = vpack.c.bf16 %v2290, %v2286
        %v2379 = vpack.c.bf16 %v2291, %v2287
        %v2380 = vpack.c.bf16 %v2296, %v2292
        %v2381 = vpack.c.bf16 %v2297, %v2293
        %v2382 = vpack.c.bf16 %v2298, %v2294
        %v2383 = vpack.c.bf16 %v2299, %v2295
        %v2384 = vpack.c.bf16 %v2304, %v2300
        %v2385 = vpack.c.bf16 %v2305, %v2301
        %v2386 = vpack.c.bf16 %v2306, %v2302
        %v2387 = vpack.c.bf16 %v2307, %v2303
        %v2388 = vpack.c.bf16 %v2312, %v2308
        %v2389 = vpack.c.bf16 %v2313, %v2309
        %v2390 = vpack.c.bf16 %v2314, %v2310
        %v2391 = vpack.c.bf16 %v2315, %v2311
        %v2392 = vpack.c.bf16 %v2320, %v2316
        %v2393 = vpack.c.bf16 %v2321, %v2317
        %v2394 = vpack.c.bf16 %v2322, %v2318
        %v2395 = vpack.c.bf16 %v2323, %v2319
        %v2396 = vpack.c.bf16 %v2328, %v2324
        %v2397 = vpack.c.bf16 %v2329, %v2325
        %v2398 = vpack.c.bf16 %v2330, %v2326
        %v2399 = vpack.c.bf16 %v2331, %v2327
        %v2400 = vpack.c.bf16 %v2336, %v2332
        %v2401 = vpack.c.bf16 %v2337, %v2333
        %v2402 = vpack.c.bf16 %v2338, %v2334
        %v2403 = vpack.c.bf16 %v2339, %v2335
        %v2404 = vld [vmem:[%s4] sm:$0xff]
        %v2405 = vld [vmem:[%s4 + $0x8] sm:$0xff]
        %v2406 = vld [vmem:[%s4 + $0x10] sm:$0xff]
        %v2407 = vld [vmem:[%s4 + $0x18] sm:$0xff]
        %v2408 = vld [vmem:[%s4 + $0x20] sm:$0xff]
        %v2409 = vld [vmem:[%s4 + $0x28] sm:$0xff]
        %v2410 = vld [vmem:[%s4 + $0x30] sm:$0xff]
        %v2411 = vld [vmem:[%s4 + $0x38] sm:$0xff]
        %v2412 = vld [vmem:[%s4 + $0x40] sm:$0xff]
        %v2413 = vld [vmem:[%s4 + $0x48] sm:$0xff]
        %v2414 = vld [vmem:[%s4 + $0x50] sm:$0xff]
        %v2415 = vld [vmem:[%s4 + $0x58] sm:$0xff]
        %v2416 = vld [vmem:[%s4 + $0x60] sm:$0xff]
        %v2417 = vld [vmem:[%s4 + $0x68] sm:$0xff]
        %v2418 = vld [vmem:[%s4 + $0x70] sm:$0xff]
        %v2419 = vld [vmem:[%s4 + $0x78] sm:$0xff]
        %v2420 = vld [vmem:[%s4 + $0x80] sm:$0xff]
        %v2421 = vld [vmem:[%s4 + $0x88] sm:$0xff]
        %v2422 = vld [vmem:[%s4 + $0x90] sm:$0xff]
        %v2423 = vld [vmem:[%s4 + $0x98] sm:$0xff]
        %v2424 = vld [vmem:[%s4 + $0xa0] sm:$0xff]
        %v2425 = vld [vmem:[%s4 + $0xa8] sm:$0xff]
        %v2426 = vld [vmem:[%s4 + $0xb0] sm:$0xff]
        %v2427 = vld [vmem:[%s4 + $0xb8] sm:$0xff]
        %v2428 = vld [vmem:[%s4 + $0xc0] sm:$0xff]
        %v2429 = vld [vmem:[%s4 + $0xc8] sm:$0xff]
        %v2430 = vld [vmem:[%s4 + $0xd0] sm:$0xff]
        %v2431 = vld [vmem:[%s4 + $0xd8] sm:$0xff]
        %v2432 = vld [vmem:[%s4 + $0xe0] sm:$0xff]
        %v2433 = vld [vmem:[%s4 + $0xe8] sm:$0xff]
        %v2434 = vld [vmem:[%s4 + $0xf0] sm:$0xff]
        %v2435 = vld [vmem:[%s4 + $0xf8] sm:$0xff]
        %v2436 = vld [vmem:[%s5] sm:$0xff]
        %v2437 = vld [vmem:[%s5 + $0x8] sm:$0xff]
        %v2438 = vld [vmem:[%s5 + $0x10] sm:$0xff]
        %v2439 = vld [vmem:[%s5 + $0x18] sm:$0xff]
        %v2440 = vld [vmem:[%s5 + $0x20] sm:$0xff]
        %v2441 = vld [vmem:[%s5 + $0x28] sm:$0xff]
        %v2442 = vld [vmem:[%s5 + $0x30] sm:$0xff]
        %v2443 = vld [vmem:[%s5 + $0x38] sm:$0xff]
        %v2444 = vld [vmem:[%s5 + $0x40] sm:$0xff]
        %v2445 = vld [vmem:[%s5 + $0x48] sm:$0xff]
        %v2446 = vld [vmem:[%s5 + $0x50] sm:$0xff]
        %v2447 = vld [vmem:[%s5 + $0x58] sm:$0xff]
        %v2448 = vld [vmem:[%s5 + $0x60] sm:$0xff]
        %v2449 = vld [vmem:[%s5 + $0x68] sm:$0xff]
        %v2450 = vld [vmem:[%s5 + $0x70] sm:$0xff]
        %v2451 = vld [vmem:[%s5 + $0x78] sm:$0xff]
        %v2452 = vld [vmem:[%s5 + $0x80] sm:$0xff]
        %v2453 = vld [vmem:[%s5 + $0x88] sm:$0xff]
        %v2454 = vld [vmem:[%s5 + $0x90] sm:$0xff]
        %v2455 = vld [vmem:[%s5 + $0x98] sm:$0xff]
        %v2456 = vld [vmem:[%s5 + $0xa0] sm:$0xff]
        %v2457 = vld [vmem:[%s5 + $0xa8] sm:$0xff]
        %v2458 = vld [vmem:[%s5 + $0xb0] sm:$0xff]
        %v2459 = vld [vmem:[%s5 + $0xb8] sm:$0xff]
        %v2460 = vld [vmem:[%s5 + $0xc0] sm:$0xff]
        %v2461 = vld [vmem:[%s5 + $0xc8] sm:$0xff]
        %v2462 = vld [vmem:[%s5 + $0xd0] sm:$0xff]
        %v2463 = vld [vmem:[%s5 + $0xd8] sm:$0xff]
        %v2464 = vld [vmem:[%s5 + $0xe0] sm:$0xff]
        %v2465 = vld [vmem:[%s5 + $0xe8] sm:$0xff]
        %v2466 = vld [vmem:[%s5 + $0xf0] sm:$0xff]
        %v2467 = vld [vmem:[%s5 + $0xf8] sm:$0xff]
        %2469 = vset.pattern.permute.xlu0 0
        %2470 = vperm.xlu0 %2469, %v2436
        %v2471 = vpop.permute.xlu0 %2470
        %2474 = vset.pattern.permute.xlu0 0
        %2475 = vperm.xlu0 %2474, %v2437
        %v2476 = vpop.permute.xlu0 %2475
        %2479 = vset.pattern.permute.xlu0 0
        %2480 = vperm.xlu0 %2479, %v2438
        %v2481 = vpop.permute.xlu0 %2480
        %2484 = vset.pattern.permute.xlu0 0
        %2485 = vperm.xlu0 %2484, %v2439
        %v2486 = vpop.permute.xlu0 %2485
        %2489 = vset.pattern.permute.xlu0 0
        %2490 = vperm.xlu0 %2489, %v2440
        %v2491 = vpop.permute.xlu0 %2490
        %2494 = vset.pattern.permute.xlu0 0
        %2495 = vperm.xlu0 %2494, %v2441
        %v2496 = vpop.permute.xlu0 %2495
        %2499 = vset.pattern.permute.xlu0 0
        %2500 = vperm.xlu0 %2499, %v2442
        %v2501 = vpop.permute.xlu0 %2500
        %2504 = vset.pattern.permute.xlu0 0
        %2505 = vperm.xlu0 %2504, %v2443
        %v2506 = vpop.permute.xlu0 %2505
        %2509 = vset.pattern.permute.xlu0 0
        %2510 = vperm.xlu0 %2509, %v2444
        %v2511 = vpop.permute.xlu0 %2510
        %2514 = vset.pattern.permute.xlu0 0
        %2515 = vperm.xlu0 %2514, %v2445
        %v2516 = vpop.permute.xlu0 %2515
        %2519 = vset.pattern.permute.xlu0 0
        %2520 = vperm.xlu0 %2519, %v2446
        %v2521 = vpop.permute.xlu0 %2520
        %2524 = vset.pattern.permute.xlu0 0
        %2525 = vperm.xlu0 %2524, %v2447
        %v2526 = vpop.permute.xlu0 %2525
        %2529 = vset.pattern.permute.xlu0 0
        %2530 = vperm.xlu0 %2529, %v2448
        %v2531 = vpop.permute.xlu0 %2530
        %2534 = vset.pattern.permute.xlu0 0
        %2535 = vperm.xlu0 %2534, %v2449
        %v2536 = vpop.permute.xlu0 %2535
        %2539 = vset.pattern.permute.xlu0 0
        %2540 = vperm.xlu0 %2539, %v2450
        %v2541 = vpop.permute.xlu0 %2540
        %2544 = vset.pattern.permute.xlu0 0
        %2545 = vperm.xlu0 %2544, %v2451
        %v2546 = vpop.permute.xlu0 %2545
        %2549 = vset.pattern.permute.xlu0 0
        %2550 = vperm.xlu0 %2549, %v2452
        %v2551 = vpop.permute.xlu0 %2550
        %2554 = vset.pattern.permute.xlu0 0
        %2555 = vperm.xlu0 %2554, %v2453
        %v2556 = vpop.permute.xlu0 %2555
        %2559 = vset.pattern.permute.xlu0 0
        %2560 = vperm.xlu0 %2559, %v2454
        %v2561 = vpop.permute.xlu0 %2560
        %2564 = vset.pattern.permute.xlu0 0
        %2565 = vperm.xlu0 %2564, %v2455
        %v2566 = vpop.permute.xlu0 %2565
        %2569 = vset.pattern.permute.xlu0 0
        %2570 = vperm.xlu0 %2569, %v2456
        %v2571 = vpop.permute.xlu0 %2570
        %2574 = vset.pattern.permute.xlu0 0
        %2575 = vperm.xlu0 %2574, %v2457
        %v2576 = vpop.permute.xlu0 %2575
        %2579 = vset.pattern.permute.xlu0 0
        %2580 = vperm.xlu0 %2579, %v2458
        %v2581 = vpop.permute.xlu0 %2580
        %2584 = vset.pattern.permute.xlu0 0
        %2585 = vperm.xlu0 %2584, %v2459
        %v2586 = vpop.permute.xlu0 %2585
        %2589 = vset.pattern.permute.xlu0 0
        %2590 = vperm.xlu0 %2589, %v2460
        %v2591 = vpop.permute.xlu0 %2590
        %2594 = vset.pattern.permute.xlu0 0
        %2595 = vperm.xlu0 %2594, %v2461
        %v2596 = vpop.permute.xlu0 %2595
        %2599 = vset.pattern.permute.xlu0 0
        %2600 = vperm.xlu0 %2599, %v2462
        %v2601 = vpop.permute.xlu0 %2600
        %2604 = vset.pattern.permute.xlu0 0
        %2605 = vperm.xlu0 %2604, %v2463
        %v2606 = vpop.permute.xlu0 %2605
        %2609 = vset.pattern.permute.xlu0 0
        %2610 = vperm.xlu0 %2609, %v2464
        %v2611 = vpop.permute.xlu0 %2610
        %2614 = vset.pattern.permute.xlu0 0
        %2615 = vperm.xlu0 %2614, %v2465
        %v2616 = vpop.permute.xlu0 %2615
        %2619 = vset.pattern.permute.xlu0 0
        %2620 = vperm.xlu0 %2619, %v2466
        %v2621 = vpop.permute.xlu0 %2620
        %2624 = vset.pattern.permute.xlu0 0
        %2625 = vperm.xlu0 %2624, %v2467
        %v2626 = vpop.permute.xlu0 %2625
        %v2660 = vunpack.c.l.b16 %v2404
        %v2661 = vunpack.c.h.b16 %v2404
        %v2662 = vunpack.c.l.b16 %v2405
        %v2663 = vunpack.c.h.b16 %v2405
        %v2664 = vunpack.c.l.b16 %v2406
        %v2665 = vunpack.c.h.b16 %v2406
        %v2666 = vunpack.c.l.b16 %v2407
        %v2667 = vunpack.c.h.b16 %v2407
        %v2668 = vunpack.c.l.b16 %v2408
        %v2669 = vunpack.c.h.b16 %v2408
        %v2670 = vunpack.c.l.b16 %v2409
        %v2671 = vunpack.c.h.b16 %v2409
        %v2672 = vunpack.c.l.b16 %v2410
        %v2673 = vunpack.c.h.b16 %v2410
        %v2674 = vunpack.c.l.b16 %v2411
        %v2675 = vunpack.c.h.b16 %v2411
        %v2676 = vunpack.c.l.b16 %v2412
        %v2677 = vunpack.c.h.b16 %v2412
        %v2678 = vunpack.c.l.b16 %v2413
        %v2679 = vunpack.c.h.b16 %v2413
        %v2680 = vunpack.c.l.b16 %v2414
        %v2681 = vunpack.c.h.b16 %v2414
        %v2682 = vunpack.c.l.b16 %v2415
        %v2683 = vunpack.c.h.b16 %v2415
        %v2684 = vunpack.c.l.b16 %v2416
        %v2685 = vunpack.c.h.b16 %v2416
        %v2686 = vunpack.c.l.b16 %v2417
        %v2687 = vunpack.c.h.b16 %v2417
        %v2688 = vunpack.c.l.b16 %v2418
        %v2689 = vunpack.c.h.b16 %v2418
        %v2690 = vunpack.c.l.b16 %v2419
        %v2691 = vunpack.c.h.b16 %v2419
        %v2692 = vunpack.c.l.b16 %v2420
        %v2693 = vunpack.c.h.b16 %v2420
        %v2694 = vunpack.c.l.b16 %v2421
        %v2695 = vunpack.c.h.b16 %v2421
        %v2696 = vunpack.c.l.b16 %v2422
        %v2697 = vunpack.c.h.b16 %v2422
        %v2698 = vunpack.c.l.b16 %v2423
        %v2699 = vunpack.c.h.b16 %v2423
        %v2700 = vunpack.c.l.b16 %v2424
        %v2701 = vunpack.c.h.b16 %v2424
        %v2702 = vunpack.c.l.b16 %v2425
        %v2703 = vunpack.c.h.b16 %v2425
        %v2704 = vunpack.c.l.b16 %v2426
        %v2705 = vunpack.c.h.b16 %v2426
        %v2706 = vunpack.c.l.b16 %v2427
        %v2707 = vunpack.c.h.b16 %v2427
        %v2708 = vunpack.c.l.b16 %v2428
        %v2709 = vunpack.c.h.b16 %v2428
        %v2710 = vunpack.c.l.b16 %v2429
        %v2711 = vunpack.c.h.b16 %v2429
        %v2712 = vunpack.c.l.b16 %v2430
        %v2713 = vunpack.c.h.b16 %v2430
        %v2714 = vunpack.c.l.b16 %v2431
        %v2715 = vunpack.c.h.b16 %v2431
        %v2716 = vunpack.c.l.b16 %v2432
        %v2717 = vunpack.c.h.b16 %v2432
        %v2718 = vunpack.c.l.b16 %v2433
        %v2719 = vunpack.c.h.b16 %v2433
        %v2720 = vunpack.c.l.b16 %v2434
        %v2721 = vunpack.c.h.b16 %v2434
        %v2722 = vunpack.c.l.b16 %v2435
        %v2723 = vunpack.c.h.b16 %v2435
        %v2724 = vpack.c.b16 %v2662, %v2660
        %v2725 = vpack.c.b16 %v2663, %v2661
        %v2726 = vpack.c.b16 %v2666, %v2664
        %v2727 = vpack.c.b16 %v2667, %v2665
        %v2728 = vpack.c.b16 %v2670, %v2668
        %v2729 = vpack.c.b16 %v2671, %v2669
        %v2730 = vpack.c.b16 %v2674, %v2672
        %v2731 = vpack.c.b16 %v2675, %v2673
        %v2732 = vpack.c.b16 %v2678, %v2676
        %v2733 = vpack.c.b16 %v2679, %v2677
        %v2734 = vpack.c.b16 %v2682, %v2680
        %v2735 = vpack.c.b16 %v2683, %v2681
        %v2736 = vpack.c.b16 %v2686, %v2684
        %v2737 = vpack.c.b16 %v2687, %v2685
        %v2738 = vpack.c.b16 %v2690, %v2688
        %v2739 = vpack.c.b16 %v2691, %v2689
        %v2740 = vpack.c.b16 %v2694, %v2692
        %v2741 = vpack.c.b16 %v2695, %v2693
        %v2742 = vpack.c.b16 %v2698, %v2696
        %v2743 = vpack.c.b16 %v2699, %v2697
        %v2744 = vpack.c.b16 %v2702, %v2700
        %v2745 = vpack.c.b16 %v2703, %v2701
        %v2746 = vpack.c.b16 %v2706, %v2704
        %v2747 = vpack.c.b16 %v2707, %v2705
        %v2748 = vpack.c.b16 %v2710, %v2708
        %v2749 = vpack.c.b16 %v2711, %v2709
        %v2750 = vpack.c.b16 %v2714, %v2712
        %v2751 = vpack.c.b16 %v2715, %v2713
        %v2752 = vpack.c.b16 %v2718, %v2716
        %v2753 = vpack.c.b16 %v2719, %v2717
        %v2754 = vpack.c.b16 %v2722, %v2720
        %v2755 = vpack.c.b16 %v2723, %v2721
        %2788 = vmatprep.subr.bf16.mxu0 %v2341
        %2789 = vmatpush1.bf16.msra.mxu0 %v2340
        %2790 = vmatprep.subr.bf16.mxu0 %v2345
        %2791 = vmatpush1.bf16.msra.mxu0 %v2344
        %2792 = vmatprep.subr.bf16.mxu0 %v2349
        %2793 = vmatpush1.bf16.msra.mxu0 %v2348
        %2794 = vmatprep.subr.bf16.mxu0 %v2353
        %2795 = vmatpush1.bf16.msra.mxu0 %v2352
        %2796 = vmatprep.subr.bf16.mxu0 %v2357
        %2797 = vmatpush1.bf16.msra.mxu0 %v2356
        %2798 = vmatprep.subr.bf16.mxu0 %v2361
        %2799 = vmatpush1.bf16.msra.mxu0 %v2360
        %2800 = vmatprep.subr.bf16.mxu0 %v2365
        %2801 = vmatpush1.bf16.msra.mxu0 %v2364
        %2802 = vmatprep.subr.bf16.mxu0 %v2369
        %2803 = vmatpush1.bf16.msra.mxu0 %v2368
        %2804 = vmatprep.subr.bf16.mxu0 %v2373
        %2805 = vmatpush1.bf16.msra.mxu0 %v2372
        %2806 = vmatprep.subr.bf16.mxu0 %v2377
        %2807 = vmatpush1.bf16.msra.mxu0 %v2376
        %2808 = vmatprep.subr.bf16.mxu0 %v2381
        %2809 = vmatpush1.bf16.msra.mxu0 %v2380
        %2810 = vmatprep.subr.bf16.mxu0 %v2385
        %2811 = vmatpush1.bf16.msra.mxu0 %v2384
        %2812 = vmatprep.subr.bf16.mxu0 %v2389
        %2813 = vmatpush1.bf16.msra.mxu0 %v2388
        %2814 = vmatprep.subr.bf16.mxu0 %v2393
        %2815 = vmatpush1.bf16.msra.mxu0 %v2392
        %2816 = vmatprep.subr.bf16.mxu0 %v2397
        %2817 = vmatpush1.bf16.msra.mxu0 %v2396
        %2818 = vmatprep.subr.bf16.mxu0 %v2401
        %2819 = vmatpush1.bf16.msra.mxu0 %v2400
        %2820 = vmatprep.mubr.bf16.mxu0 %v2725
        %2821 = vmatmul.mubr.bf16.gmra.mrb[0].mxu0 %v2724
        %v2822 = vpop.f32.mrb[0].mxu0
        %v2823 = vadd.f32 %v2471, %v2822
        %v2824 = vpop.f32.mrb[0].mxu0
        %v2825 = vadd.f32 %v2471, %v2824
        %v2826 = vpop.f32.mrb[0].mxu0
        %v2827 = vadd.f32 %v2476, %v2826
        %v2828 = vpop.f32.mrb[0].mxu0
        %v2829 = vadd.f32 %v2476, %v2828
        %2830 = vmatprep.mubr.bf16.mxu0 %v2727
        %2831 = vmatmul.mubr.bf16.gmra.mrb[0].mxu0 %v2726
        %v2832 = vpop.f32.mrb[0].mxu0
        %v2833 = vadd.f32 %v2481, %v2832
        %v2834 = vpop.f32.mrb[0].mxu0
        %v2835 = vadd.f32 %v2481, %v2834
        %v2836 = vpop.f32.mrb[0].mxu0
        %v2837 = vadd.f32 %v2486, %v2836
        %v2838 = vpop.f32.mrb[0].mxu0
        %v2839 = vadd.f32 %v2486, %v2838
        %2840 = vmatprep.mubr.bf16.mxu0 %v2729
        %2841 = vmatmul.mubr.bf16.gmra.mrb[0].mxu0 %v2728
        %v2842 = vpop.f32.mrb[0].mxu0
        %v2843 = vadd.f32 %v2491, %v2842
        %v2844 = vpop.f32.mrb[0].mxu0
        %v2845 = vadd.f32 %v2491, %v2844
        %v2846 = vpop.f32.mrb[0].mxu0
        %v2847 = vadd.f32 %v2496, %v2846
        %v2848 = vpop.f32.mrb[0].mxu0
        %v2849 = vadd.f32 %v2496, %v2848
        %2850 = vmatprep.mubr.bf16.mxu0 %v2731
        %2851 = vmatmul.mubr.bf16.gmra.mrb[0].mxu0 %v2730
        %v2852 = vpop.f32.mrb[0].mxu0
        %v2853 = vadd.f32 %v2501, %v2852
        %v2854 = vpop.f32.mrb[0].mxu0
        %v2855 = vadd.f32 %v2501, %v2854
        %v2856 = vpop.f32.mrb[0].mxu0
        %v2857 = vadd.f32 %v2506, %v2856
        %v2858 = vpop.f32.mrb[0].mxu0
        %v2859 = vadd.f32 %v2506, %v2858
        %2860 = vmatprep.mubr.bf16.mxu0 %v2733
        %2861 = vmatmul.mubr.bf16.gmra.mrb[0].mxu0 %v2732
        %v2862 = vpop.f32.mrb[0].mxu0
        %v2863 = vadd.f32 %v2511, %v2862
        %v2864 = vpop.f32.mrb[0].mxu0
        %v2865 = vadd.f32 %v2511, %v2864
        %v2866 = vpop.f32.mrb[0].mxu0
        %v2867 = vadd.f32 %v2516, %v2866
        %v2868 = vpop.f32.mrb[0].mxu0
        %v2869 = vadd.f32 %v2516, %v2868
        %2870 = vmatprep.mubr.bf16.mxu0 %v2735
        %2871 = vmatmul.mubr.bf16.gmra.mrb[0].mxu0 %v2734
        %v2872 = vpop.f32.mrb[0].mxu0
        %v2873 = vadd.f32 %v2521, %v2872
        %v2874 = vpop.f32.mrb[0].mxu0
        %v2875 = vadd.f32 %v2521, %v2874
        %v2876 = vpop.f32.mrb[0].mxu0
        %v2877 = vadd.f32 %v2526, %v2876
        %v2878 = vpop.f32.mrb[0].mxu0
        %v2879 = vadd.f32 %v2526, %v2878
        %2880 = vmatprep.mubr.bf16.mxu0 %v2737
        %2881 = vmatmul.mubr.bf16.gmra.mrb[0].mxu0 %v2736
        %v2882 = vpop.f32.mrb[0].mxu0
        %v2883 = vadd.f32 %v2531, %v2882
        %v2884 = vpop.f32.mrb[0].mxu0
        %v2885 = vadd.f32 %v2531, %v2884
        %v2886 = vpop.f32.mrb[0].mxu0
        %v2887 = vadd.f32 %v2536, %v2886
        %v2888 = vpop.f32.mrb[0].mxu0
        %v2889 = vadd.f32 %v2536, %v2888
        %2890 = vmatprep.mubr.bf16.mxu0 %v2739
        %2891 = vmatmul.mubr.bf16.gmra.mrb[0].mxu0 %v2738
        %v2892 = vpop.f32.mrb[0].mxu0
        %v2893 = vadd.f32 %v2541, %v2892
        %v2894 = vpop.f32.mrb[0].mxu0
        %v2895 = vadd.f32 %v2541, %v2894
        %v2896 = vpop.f32.mrb[0].mxu0
        %v2897 = vadd.f32 %v2546, %v2896
        %v2898 = vpop.f32.mrb[0].mxu0
        %v2899 = vadd.f32 %v2546, %v2898
        %2900 = vmatprep.mubr.bf16.mxu0 %v2741
        %2901 = vmatmul.mubr.bf16.gmra.mrb[0].mxu0 %v2740
        %v2902 = vpop.f32.mrb[0].mxu0
        %v2903 = vadd.f32 %v2551, %v2902
        %v2904 = vpop.f32.mrb[0].mxu0
        %v2905 = vadd.f32 %v2551, %v2904
        %v2906 = vpop.f32.mrb[0].mxu0
        %v2907 = vadd.f32 %v2556, %v2906
        %v2908 = vpop.f32.mrb[0].mxu0
        %v2909 = vadd.f32 %v2556, %v2908
        %2910 = vmatprep.mubr.bf16.mxu0 %v2743
        %2911 = vmatmul.mubr.bf16.gmra.mrb[0].mxu0 %v2742
        %v2912 = vpop.f32.mrb[0].mxu0
        %v2913 = vadd.f32 %v2561, %v2912
        %v2914 = vpop.f32.mrb[0].mxu0
        %v2915 = vadd.f32 %v2561, %v2914
        %v2916 = vpop.f32.mrb[0].mxu0
        %v2917 = vadd.f32 %v2566, %v2916
        %v2918 = vpop.f32.mrb[0].mxu0
        %v2919 = vadd.f32 %v2566, %v2918
        %2920 = vmatprep.mubr.bf16.mxu0 %v2745
        %2921 = vmatmul.mubr.bf16.gmra.mrb[0].mxu0 %v2744
        %v2922 = vpop.f32.mrb[0].mxu0
        %v2923 = vadd.f32 %v2571, %v2922
        %v2924 = vpop.f32.mrb[0].mxu0
        %v2925 = vadd.f32 %v2571, %v2924
        %v2926 = vpop.f32.mrb[0].mxu0
        %v2927 = vadd.f32 %v2576, %v2926
        %v2928 = vpop.f32.mrb[0].mxu0
        %v2929 = vadd.f32 %v2576, %v2928
        %2930 = vmatprep.mubr.bf16.mxu0 %v2747
        %2931 = vmatmul.mubr.bf16.gmra.mrb[0].mxu0 %v2746
        %v2932 = vpop.f32.mrb[0].mxu0
        %v2933 = vadd.f32 %v2581, %v2932
        %v2934 = vpop.f32.mrb[0].mxu0
        %v2935 = vadd.f32 %v2581, %v2934
        %v2936 = vpop.f32.mrb[0].mxu0
        %v2937 = vadd.f32 %v2586, %v2936
        %v2938 = vpop.f32.mrb[0].mxu0
        %v2939 = vadd.f32 %v2586, %v2938
        %2940 = vmatprep.mubr.bf16.mxu0 %v2749
        %2941 = vmatmul.mubr.bf16.gmra.mrb[0].mxu0 %v2748
        %v2942 = vpop.f32.mrb[0].mxu0
        %v2943 = vadd.f32 %v2591, %v2942
        %v2944 = vpop.f32.mrb[0].mxu0
        %v2945 = vadd.f32 %v2591, %v2944
        %v2946 = vpop.f32.mrb[0].mxu0
        %v2947 = vadd.f32 %v2596, %v2946
        %v2948 = vpop.f32.mrb[0].mxu0
        %v2949 = vadd.f32 %v2596, %v2948
        %2950 = vmatprep.mubr.bf16.mxu0 %v2751
        %2951 = vmatmul.mubr.bf16.gmra.mrb[0].mxu0 %v2750
        %v2952 = vpop.f32.mrb[0].mxu0
        %v2953 = vadd.f32 %v2601, %v2952
        %v2954 = vpop.f32.mrb[0].mxu0
        %v2955 = vadd.f32 %v2601, %v2954
        %v2956 = vpop.f32.mrb[0].mxu0
        %v2957 = vadd.f32 %v2606, %v2956
        %v2958 = vpop.f32.mrb[0].mxu0
        %v2959 = vadd.f32 %v2606, %v2958
        %2960 = vmatprep.mubr.bf16.mxu0 %v2753
        %2961 = vmatmul.mubr.bf16.gmra.mrb[0].mxu0 %v2752
        %v2962 = vpop.f32.mrb[0].mxu0
        %v2963 = vadd.f32 %v2611, %v2962
        %v2964 = vpop.f32.mrb[0].mxu0
        %v2965 = vadd.f32 %v2611, %v2964
        %v2966 = vpop.f32.mrb[0].mxu0
        %v2967 = vadd.f32 %v2616, %v2966
        %v2968 = vpop.f32.mrb[0].mxu0
        %v2969 = vadd.f32 %v2616, %v2968
        %2970 = vmatprep.mubr.bf16.mxu0 %v2755
        %2971 = vmatmul.mubr.bf16.gmra.mrb[0].mxu0 %v2754
        %v2972 = vpop.f32.mrb[0].mxu0
        %v2973 = vadd.f32 %v2621, %v2972
        %v2974 = vpop.f32.mrb[0].mxu0
        %v2975 = vadd.f32 %v2621, %v2974
        %v2976 = vpop.f32.mrb[0].mxu0
        %v2977 = vadd.f32 %v2626, %v2976
        %v2978 = vpop.f32.mrb[0].mxu0
        %v2979 = vadd.f32 %v2626, %v2978
        %2980 = vdwg.mxu0
        %2981 = vmatprep.subr.bf16.mxu0 %v2343
        %2982 = vmatpush1.bf16.msra.mxu0 %v2342
        %2983 = vmatprep.subr.bf16.mxu0 %v2347
        %2984 = vmatpush1.bf16.msra.mxu0 %v2346
        %2985 = vmatprep.subr.bf16.mxu0 %v2351
        %2986 = vmatpush1.bf16.msra.mxu0 %v2350
        %2987 = vmatprep.subr.bf16.mxu0 %v2355
        %2988 = vmatpush1.bf16.msra.mxu0 %v2354
        %2989 = vmatprep.subr.bf16.mxu0 %v2359
        %2990 = vmatpush1.bf16.msra.mxu0 %v2358
        %2991 = vmatprep.subr.bf16.mxu0 %v2363
        %2992 = vmatpush1.bf16.msra.mxu0 %v2362
        %2993 = vmatprep.subr.bf16.mxu0 %v2367
        %2994 = vmatpush1.bf16.msra.mxu0 %v2366
        %2995 = vmatprep.subr.bf16.mxu0 %v2371
        %2996 = vmatpush1.bf16.msra.mxu0 %v2370
        %2997 = vmatprep.subr.bf16.mxu0 %v2375
        %2998 = vmatpush1.bf16.msra.mxu0 %v2374
        %2999 = vmatprep.subr.bf16.mxu0 %v2379
        %3000 = vmatpush1.bf16.msra.mxu0 %v2378
        %3001 = vmatprep.subr.bf16.mxu0 %v2383
        %3002 = vmatpush1.bf16.msra.mxu0 %v2382
        %3003 = vmatprep.subr.bf16.mxu0 %v2387
        %3004 = vmatpush1.bf16.msra.mxu0 %v2386
        %3005 = vmatprep.subr.bf16.mxu0 %v2391
        %3006 = vmatpush1.bf16.msra.mxu0 %v2390
        %3007 = vmatprep.subr.bf16.mxu0 %v2395
        %3008 = vmatpush1.bf16.msra.mxu0 %v2394
        %3009 = vmatprep.subr.bf16.mxu0 %v2399
        %3010 = vmatpush1.bf16.msra.mxu0 %v2398
        %3011 = vmatprep.subr.bf16.mxu0 %v2403
        %3012 = vmatpush1.bf16.msra.mxu0 %v2402
        %3013 = vmatprep.mubr.bf16.mxu0 %v2725
        %3014 = vmatmul.mubr.bf16.gmra.mrb[0].mxu0 %v2724
        %v3015 = vpop.f32.mrb[0].mxu0
        %v3016 = vadd.f32 %v2471, %v3015
        %v3017 = vpop.f32.mrb[0].mxu0
        %v3018 = vadd.f32 %v2471, %v3017
        %v3019 = vpop.f32.mrb[0].mxu0
        %v3020 = vadd.f32 %v2476, %v3019
        %v3021 = vpop.f32.mrb[0].mxu0
        %v3022 = vadd.f32 %v2476, %v3021
        %3023 = vmatprep.mubr.bf16.mxu0 %v2727
        %3024 = vmatmul.mubr.bf16.gmra.mrb[0].mxu0 %v2726
        %v3025 = vpop.f32.mrb[0].mxu0
        %v3026 = vadd.f32 %v2481, %v3025
        %v3027 = vpop.f32.mrb[0].mxu0
        %v3028 = vadd.f32 %v2481, %v3027
        %v3029 = vpop.f32.mrb[0].mxu0
        %v3030 = vadd.f32 %v2486, %v3029
        %v3031 = vpop.f32.mrb[0].mxu0
        %v3032 = vadd.f32 %v2486, %v3031
        %3033 = vmatprep.mubr.bf16.mxu0 %v2729
        %3034 = vmatmul.mubr.bf16.gmra.mrb[0].mxu0 %v2728
        %v3035 = vpop.f32.mrb[0].mxu0
        %v3036 = vadd.f32 %v2491, %v3035
        %v3037 = vpop.f32.mrb[0].mxu0
        %v3038 = vadd.f32 %v2491, %v3037
        %v3039 = vpop.f32.mrb[0].mxu0
        %v3040 = vadd.f32 %v2496, %v3039
        %v3041 = vpop.f32.mrb[0].mxu0
        %v3042 = vadd.f32 %v2496, %v3041
        %3043 = vmatprep.mubr.bf16.mxu0 %v2731
        %3044 = vmatmul.mubr.bf16.gmra.mrb[0].mxu0 %v2730
        %v3045 = vpop.f32.mrb[0].mxu0
        %v3046 = vadd.f32 %v2501, %v3045
        %v3047 = vpop.f32.mrb[0].mxu0
        %v3048 = vadd.f32 %v2501, %v3047
        %v3049 = vpop.f32.mrb[0].mxu0
        %v3050 = vadd.f32 %v2506, %v3049
        %v3051 = vpop.f32.mrb[0].mxu0
        %v3052 = vadd.f32 %v2506, %v3051
        %3053 = vmatprep.mubr.bf16.mxu0 %v2733
        %3054 = vmatmul.mubr.bf16.gmra.mrb[0].mxu0 %v2732
        %v3055 = vpop.f32.mrb[0].mxu0
        %v3056 = vadd.f32 %v2511, %v3055
        %v3057 = vpop.f32.mrb[0].mxu0
        %v3058 = vadd.f32 %v2511, %v3057
        %v3059 = vpop.f32.mrb[0].mxu0
        %v3060 = vadd.f32 %v2516, %v3059
        %v3061 = vpop.f32.mrb[0].mxu0
        %v3062 = vadd.f32 %v2516, %v3061
        %3063 = vmatprep.mubr.bf16.mxu0 %v2735
        %3064 = vmatmul.mubr.bf16.gmra.mrb[0].mxu0 %v2734
        %v3065 = vpop.f32.mrb[0].mxu0
        %v3066 = vadd.f32 %v2521, %v3065
        %v3067 = vpop.f32.mrb[0].mxu0
        %v3068 = vadd.f32 %v2521, %v3067
        %v3069 = vpop.f32.mrb[0].mxu0
        %v3070 = vadd.f32 %v2526, %v3069
        %v3071 = vpop.f32.mrb[0].mxu0
        %v3072 = vadd.f32 %v2526, %v3071
        %3073 = vmatprep.mubr.bf16.mxu0 %v2737
        %3074 = vmatmul.mubr.bf16.gmra.mrb[0].mxu0 %v2736
        %v3075 = vpop.f32.mrb[0].mxu0
        %v3076 = vadd.f32 %v2531, %v3075
        %v3077 = vpop.f32.mrb[0].mxu0
        %v3078 = vadd.f32 %v2531, %v3077
        %v3079 = vpop.f32.mrb[0].mxu0
        %v3080 = vadd.f32 %v2536, %v3079
        %v3081 = vpop.f32.mrb[0].mxu0
        %v3082 = vadd.f32 %v2536, %v3081
        %3083 = vmatprep.mubr.bf16.mxu0 %v2739
        %3084 = vmatmul.mubr.bf16.gmra.mrb[0].mxu0 %v2738
        %v3085 = vpop.f32.mrb[0].mxu0
        %v3086 = vadd.f32 %v2541, %v3085
        %v3087 = vpop.f32.mrb[0].mxu0
        %v3088 = vadd.f32 %v2541, %v3087
        %v3089 = vpop.f32.mrb[0].mxu0
        %v3090 = vadd.f32 %v2546, %v3089
        %v3091 = vpop.f32.mrb[0].mxu0
        %v3092 = vadd.f32 %v2546, %v3091
        %3093 = vmatprep.mubr.bf16.mxu0 %v2741
        %3094 = vmatmul.mubr.bf16.gmra.mrb[0].mxu0 %v2740
        %v3095 = vpop.f32.mrb[0].mxu0
        %v3096 = vadd.f32 %v2551, %v3095
        %v3097 = vpop.f32.mrb[0].mxu0
        %v3098 = vadd.f32 %v2551, %v3097
        %v3099 = vpop.f32.mrb[0].mxu0
        %v3100 = vadd.f32 %v2556, %v3099
        %v3101 = vpop.f32.mrb[0].mxu0
        %v3102 = vadd.f32 %v2556, %v3101
        %3103 = vmatprep.mubr.bf16.mxu0 %v2743
        %3104 = vmatmul.mubr.bf16.gmra.mrb[0].mxu0 %v2742
        %v3105 = vpop.f32.mrb[0].mxu0
        %v3106 = vadd.f32 %v2561, %v3105
        %v3107 = vpop.f32.mrb[0].mxu0
        %v3108 = vadd.f32 %v2561, %v3107
        %v3109 = vpop.f32.mrb[0].mxu0
        %v3110 = vadd.f32 %v2566, %v3109
        %v3111 = vpop.f32.mrb[0].mxu0
        %v3112 = vadd.f32 %v2566, %v3111
        %3113 = vmatprep.mubr.bf16.mxu0 %v2745
        %3114 = vmatmul.mubr.bf16.gmra.mrb[0].mxu0 %v2744
        %v3115 = vpop.f32.mrb[0].mxu0
        %v3116 = vadd.f32 %v2571, %v3115
        %v3117 = vpop.f32.mrb[0].mxu0
        %v3118 = vadd.f32 %v2571, %v3117
        %v3119 = vpop.f32.mrb[0].mxu0
        %v3120 = vadd.f32 %v2576, %v3119
        %v3121 = vpop.f32.mrb[0].mxu0
        %v3122 = vadd.f32 %v2576, %v3121
        %3123 = vmatprep.mubr.bf16.mxu0 %v2747
        %3124 = vmatmul.mubr.bf16.gmra.mrb[0].mxu0 %v2746
        %v3125 = vpop.f32.mrb[0].mxu0
        %v3126 = vadd.f32 %v2581, %v3125
        %v3127 = vpop.f32.mrb[0].mxu0
        %v3128 = vadd.f32 %v2581, %v3127
        %v3129 = vpop.f32.mrb[0].mxu0
        %v3130 = vadd.f32 %v2586, %v3129
        %v3131 = vpop.f32.mrb[0].mxu0
        %v3132 = vadd.f32 %v2586, %v3131
        %3133 = vmatprep.mubr.bf16.mxu0 %v2749
        %3134 = vmatmul.mubr.bf16.gmra.mrb[0].mxu0 %v2748
        %v3135 = vpop.f32.mrb[0].mxu0
        %v3136 = vadd.f32 %v2591, %v3135
        %v3137 = vpop.f32.mrb[0].mxu0
        %v3138 = vadd.f32 %v2591, %v3137
        %v3139 = vpop.f32.mrb[0].mxu0
        %v3140 = vadd.f32 %v2596, %v3139
        %v3141 = vpop.f32.mrb[0].mxu0
        %v3142 = vadd.f32 %v2596, %v3141
        %3143 = vmatprep.mubr.bf16.mxu0 %v2751
        %3144 = vmatmul.mubr.bf16.gmra.mrb[0].mxu0 %v2750
        %v3145 = vpop.f32.mrb[0].mxu0
        %v3146 = vadd.f32 %v2601, %v3145
        %v3147 = vpop.f32.mrb[0].mxu0
        %v3148 = vadd.f32 %v2601, %v3147
        %v3149 = vpop.f32.mrb[0].mxu0
        %v3150 = vadd.f32 %v2606, %v3149
        %v3151 = vpop.f32.mrb[0].mxu0
        %v3152 = vadd.f32 %v2606, %v3151
        %3153 = vmatprep.mubr.bf16.mxu0 %v2753
        %3154 = vmatmul.mubr.bf16.gmra.mrb[0].mxu0 %v2752
        %v3155 = vpop.f32.mrb[0].mxu0
        %v3156 = vadd.f32 %v2611, %v3155
        %v3157 = vpop.f32.mrb[0].mxu0
        %v3158 = vadd.f32 %v2611, %v3157
        %v3159 = vpop.f32.mrb[0].mxu0
        %v3160 = vadd.f32 %v2616, %v3159
        %v3161 = vpop.f32.mrb[0].mxu0
        %v3162 = vadd.f32 %v2616, %v3161
        %3163 = vmatprep.mubr.bf16.mxu0 %v2755
        %3164 = vmatmul.mubr.bf16.gmra.mrb[0].mxu0 %v2754
        %v3165 = vpop.f32.mrb[0].mxu0
        %v3166 = vadd.f32 %v2621, %v3165
        %v3167 = vpop.f32.mrb[0].mxu0
        %v3168 = vadd.f32 %v2621, %v3167
        %v3169 = vpop.f32.mrb[0].mxu0
        %v3170 = vadd.f32 %v2626, %v3169
        %v3171 = vpop.f32.mrb[0].mxu0
        %v3172 = vadd.f32 %v2626, %v3171
        %3173 = vdwg.mxu0
        %vm3174 = vcmp.ge.f32.partialorder %v2823, 0.0
        %vm3175 = vcmp.ge.f32.partialorder %v2825, 0.0
        %vm3176 = vcmp.ge.f32.partialorder %v3016, 0.0
        %vm3177 = vcmp.ge.f32.partialorder %v3018, 0.0
        %vm3178 = vcmp.ge.f32.partialorder %v2827, 0.0
        %vm3179 = vcmp.ge.f32.partialorder %v2829, 0.0
        %vm3180 = vcmp.ge.f32.partialorder %v3020, 0.0
        %vm3181 = vcmp.ge.f32.partialorder %v3022, 0.0
        %vm3182 = vcmp.ge.f32.partialorder %v2833, 0.0
        %vm3183 = vcmp.ge.f32.partialorder %v2835, 0.0
        %vm3184 = vcmp.ge.f32.partialorder %v3026, 0.0
        %vm3185 = vcmp.ge.f32.partialorder %v3028, 0.0
        %vm3186 = vcmp.ge.f32.partialorder %v2837, 0.0
        %vm3187 = vcmp.ge.f32.partialorder %v2839, 0.0
        %vm3188 = vcmp.ge.f32.partialorder %v3030, 0.0
        %vm3189 = vcmp.ge.f32.partialorder %v3032, 0.0
        %vm3190 = vcmp.ge.f32.partialorder %v2843, 0.0
        %vm3191 = vcmp.ge.f32.partialorder %v2845, 0.0
        %vm3192 = vcmp.ge.f32.partialorder %v3036, 0.0
        %vm3193 = vcmp.ge.f32.partialorder %v3038, 0.0
        %vm3194 = vcmp.ge.f32.partialorder %v2847, 0.0
        %vm3195 = vcmp.ge.f32.partialorder %v2849, 0.0
        %vm3196 = vcmp.ge.f32.partialorder %v3040, 0.0
        %vm3197 = vcmp.ge.f32.partialorder %v3042, 0.0
        %vm3198 = vcmp.ge.f32.partialorder %v2853, 0.0
        %vm3199 = vcmp.ge.f32.partialorder %v2855, 0.0
        %vm3200 = vcmp.ge.f32.partialorder %v3046, 0.0
        %vm3201 = vcmp.ge.f32.partialorder %v3048, 0.0
        %vm3202 = vcmp.ge.f32.partialorder %v2857, 0.0
        %vm3203 = vcmp.ge.f32.partialorder %v2859, 0.0
        %vm3204 = vcmp.ge.f32.partialorder %v3050, 0.0
        %vm3205 = vcmp.ge.f32.partialorder %v3052, 0.0
        %vm3206 = vcmp.ge.f32.partialorder %v2863, 0.0
        %vm3207 = vcmp.ge.f32.partialorder %v2865, 0.0
        %vm3208 = vcmp.ge.f32.partialorder %v3056, 0.0
        %vm3209 = vcmp.ge.f32.partialorder %v3058, 0.0
        %vm3210 = vcmp.ge.f32.partialorder %v2867, 0.0
        %vm3211 = vcmp.ge.f32.partialorder %v2869, 0.0
        %vm3212 = vcmp.ge.f32.partialorder %v3060, 0.0
        %vm3213 = vcmp.ge.f32.partialorder %v3062, 0.0
        %vm3214 = vcmp.ge.f32.partialorder %v2873, 0.0
        %vm3215 = vcmp.ge.f32.partialorder %v2875, 0.0
        %vm3216 = vcmp.ge.f32.partialorder %v3066, 0.0
        %vm3217 = vcmp.ge.f32.partialorder %v3068, 0.0
        %vm3218 = vcmp.ge.f32.partialorder %v2877, 0.0
        %vm3219 = vcmp.ge.f32.partialorder %v2879, 0.0
        %vm3220 = vcmp.ge.f32.partialorder %v3070, 0.0
        %vm3221 = vcmp.ge.f32.partialorder %v3072, 0.0
        %vm3222 = vcmp.ge.f32.partialorder %v2883, 0.0
        %vm3223 = vcmp.ge.f32.partialorder %v2885, 0.0
        %vm3224 = vcmp.ge.f32.partialorder %v3076, 0.0
        %vm3225 = vcmp.ge.f32.partialorder %v3078, 0.0
        %vm3226 = vcmp.ge.f32.partialorder %v2887, 0.0
        %vm3227 = vcmp.ge.f32.partialorder %v2889, 0.0
        %vm3228 = vcmp.ge.f32.partialorder %v3080, 0.0
        %vm3229 = vcmp.ge.f32.partialorder %v3082, 0.0
        %vm3230 = vcmp.ge.f32.partialorder %v2893, 0.0
        %vm3231 = vcmp.ge.f32.partialorder %v2895, 0.0
        %vm3232 = vcmp.ge.f32.partialorder %v3086, 0.0
        %vm3233 = vcmp.ge.f32.partialorder %v3088, 0.0
        %vm3234 = vcmp.ge.f32.partialorder %v2897, 0.0
        %vm3235 = vcmp.ge.f32.partialorder %v2899, 0.0
        %vm3236 = vcmp.ge.f32.partialorder %v3090, 0.0
        %vm3237 = vcmp.ge.f32.partialorder %v3092, 0.0
        %vm3238 = vcmp.ge.f32.partialorder %v2903, 0.0
        %vm3239 = vcmp.ge.f32.partialorder %v2905, 0.0
        %vm3240 = vcmp.ge.f32.partialorder %v3096, 0.0
        %vm3241 = vcmp.ge.f32.partialorder %v3098, 0.0
        %vm3242 = vcmp.ge.f32.partialorder %v2907, 0.0
        %vm3243 = vcmp.ge.f32.partialorder %v2909, 0.0
        %vm3244 = vcmp.ge.f32.partialorder %v3100, 0.0
        %vm3245 = vcmp.ge.f32.partialorder %v3102, 0.0
        %vm3246 = vcmp.ge.f32.partialorder %v2913, 0.0
        %vm3247 = vcmp.ge.f32.partialorder %v2915, 0.0
        %vm3248 = vcmp.ge.f32.partialorder %v3106, 0.0
        %vm3249 = vcmp.ge.f32.partialorder %v3108, 0.0
        %vm3250 = vcmp.ge.f32.partialorder %v2917, 0.0
        %vm3251 = vcmp.ge.f32.partialorder %v2919, 0.0
        %vm3252 = vcmp.ge.f32.partialorder %v3110, 0.0
        %vm3253 = vcmp.ge.f32.partialorder %v3112, 0.0
        %vm3254 = vcmp.ge.f32.partialorder %v2923, 0.0
        %vm3255 = vcmp.ge.f32.partialorder %v2925, 0.0
        %vm3256 = vcmp.ge.f32.partialorder %v3116, 0.0
        %vm3257 = vcmp.ge.f32.partialorder %v3118, 0.0
        %vm3258 = vcmp.ge.f32.partialorder %v2927, 0.0
        %vm3259 = vcmp.ge.f32.partialorder %v2929, 0.0
        %vm3260 = vcmp.ge.f32.partialorder %v3120, 0.0
        %vm3261 = vcmp.ge.f32.partialorder %v3122, 0.0
        %vm3262 = vcmp.ge.f32.partialorder %v2933, 0.0
        %vm3263 = vcmp.ge.f32.partialorder %v2935, 0.0
        %vm3264 = vcmp.ge.f32.partialorder %v3126, 0.0
        %vm3265 = vcmp.ge.f32.partialorder %v3128, 0.0
        %vm3266 = vcmp.ge.f32.partialorder %v2937, 0.0
        %vm3267 = vcmp.ge.f32.partialorder %v2939, 0.0
        %vm3268 = vcmp.ge.f32.partialorder %v3130, 0.0
        %vm3269 = vcmp.ge.f32.partialorder %v3132, 0.0
        %vm3270 = vcmp.ge.f32.partialorder %v2943, 0.0
        %vm3271 = vcmp.ge.f32.partialorder %v2945, 0.0
        %vm3272 = vcmp.ge.f32.partialorder %v3136, 0.0
        %vm3273 = vcmp.ge.f32.partialorder %v3138, 0.0
        %vm3274 = vcmp.ge.f32.partialorder %v2947, 0.0
        %vm3275 = vcmp.ge.f32.partialorder %v2949, 0.0
        %vm3276 = vcmp.ge.f32.partialorder %v3140, 0.0
        %vm3277 = vcmp.ge.f32.partialorder %v3142, 0.0
        %vm3278 = vcmp.ge.f32.partialorder %v2953, 0.0
        %vm3279 = vcmp.ge.f32.partialorder %v2955, 0.0
        %vm3280 = vcmp.ge.f32.partialorder %v3146, 0.0
        %vm3281 = vcmp.ge.f32.partialorder %v3148, 0.0
        %vm3282 = vcmp.ge.f32.partialorder %v2957, 0.0
        %vm3283 = vcmp.ge.f32.partialorder %v2959, 0.0
        %vm3284 = vcmp.ge.f32.partialorder %v3150, 0.0
        %vm3285 = vcmp.ge.f32.partialorder %v3152, 0.0
        %vm3286 = vcmp.ge.f32.partialorder %v2963, 0.0
        %vm3287 = vcmp.ge.f32.partialorder %v2965, 0.0
        %vm3288 = vcmp.ge.f32.partialorder %v3156, 0.0
        %vm3289 = vcmp.ge.f32.partialorder %v3158, 0.0
        %vm3290 = vcmp.ge.f32.partialorder %v2967, 0.0
        %vm3291 = vcmp.ge.f32.partialorder %v2969, 0.0
        %vm3292 = vcmp.ge.f32.partialorder %v3160, 0.0
        %vm3293 = vcmp.ge.f32.partialorder %v3162, 0.0
        %vm3294 = vcmp.ge.f32.partialorder %v2973, 0.0
        %vm3295 = vcmp.ge.f32.partialorder %v2975, 0.0
        %vm3296 = vcmp.ge.f32.partialorder %v3166, 0.0
        %vm3297 = vcmp.ge.f32.partialorder %v3168, 0.0
        %vm3298 = vcmp.ge.f32.partialorder %v2977, 0.0
        %vm3299 = vcmp.ge.f32.partialorder %v2979, 0.0
        %vm3300 = vcmp.ge.f32.partialorder %v3170, 0.0
        %vm3301 = vcmp.ge.f32.partialorder %v3172, 0.0
        %v3302 = vstv %s432
        %v3303 = vmul.f32 %v3302, %v2823
        %v3304 = vmul.f32 %v3302, %v2825
        %v3305 = vmul.f32 %v3302, %v3016
        %v3306 = vmul.f32 %v3302, %v3018
        %v3307 = vmul.f32 %v3302, %v2827
        %v3308 = vmul.f32 %v3302, %v2829
        %v3309 = vmul.f32 %v3302, %v3020
        %v3310 = vmul.f32 %v3302, %v3022
        %v3311 = vmul.f32 %v3302, %v2833
        %v3312 = vmul.f32 %v3302, %v2835
        %v3313 = vmul.f32 %v3302, %v3026
        %v3314 = vmul.f32 %v3302, %v3028
        %v3315 = vmul.f32 %v3302, %v2837
        %v3316 = vmul.f32 %v3302, %v2839
        %v3317 = vmul.f32 %v3302, %v3030
        %v3318 = vmul.f32 %v3302, %v3032
        %v3319 = vmul.f32 %v3302, %v2843
        %v3320 = vmul.f32 %v3302, %v2845
        %v3321 = vmul.f32 %v3302, %v3036
        %v3322 = vmul.f32 %v3302, %v3038
        %v3323 = vmul.f32 %v3302, %v2847
        %v3324 = vmul.f32 %v3302, %v2849
        %v3325 = vmul.f32 %v3302, %v3040
        %v3326 = vmul.f32 %v3302, %v3042
        %v3327 = vmul.f32 %v3302, %v2853
        %v3328 = vmul.f32 %v3302, %v2855
        %v3329 = vmul.f32 %v3302, %v3046
        %v3330 = vmul.f32 %v3302, %v3048
        %v3331 = vmul.f32 %v3302, %v2857
        %v3332 = vmul.f32 %v3302, %v2859
        %v3333 = vmul.f32 %v3302, %v3050
        %v3334 = vmul.f32 %v3302, %v3052
        %v3335 = vmul.f32 %v3302, %v2863
        %v3336 = vmul.f32 %v3302, %v2865
        %v3337 = vmul.f32 %v3302, %v3056
        %v3338 = vmul.f32 %v3302, %v3058
        %v3339 = vmul.f32 %v3302, %v2867
        %v3340 = vmul.f32 %v3302, %v2869
        %v3341 = vmul.f32 %v3302, %v3060
        %v3342 = vmul.f32 %v3302, %v3062
        %v3343 = vmul.f32 %v3302, %v2873
        %v3344 = vmul.f32 %v3302, %v2875
        %v3345 = vmul.f32 %v3302, %v3066
        %v3346 = vmul.f32 %v3302, %v3068
        %v3347 = vmul.f32 %v3302, %v2877
        %v3348 = vmul.f32 %v3302, %v2879
        %v3349 = vmul.f32 %v3302, %v3070
        %v3350 = vmul.f32 %v3302, %v3072
        %v3351 = vmul.f32 %v3302, %v2883
        %v3352 = vmul.f32 %v3302, %v2885
        %v3353 = vmul.f32 %v3302, %v3076
        %v3354 = vmul.f32 %v3302, %v3078
        %v3355 = vmul.f32 %v3302, %v2887
        %v3356 = vmul.f32 %v3302, %v2889
        %v3357 = vmul.f32 %v3302, %v3080
        %v3358 = vmul.f32 %v3302, %v3082
        %v3359 = vmul.f32 %v3302, %v2893
        %v3360 = vmul.f32 %v3302, %v2895
        %v3361 = vmul.f32 %v3302, %v3086
        %v3362 = vmul.f32 %v3302, %v3088
        %v3363 = vmul.f32 %v3302, %v2897
        %v3364 = vmul.f32 %v3302, %v2899
        %v3365 = vmul.f32 %v3302, %v3090
        %v3366 = vmul.f32 %v3302, %v3092
        %v3367 = vmul.f32 %v3302, %v2903
        %v3368 = vmul.f32 %v3302, %v2905
        %v3369 = vmul.f32 %v3302, %v3096
        %v3370 = vmul.f32 %v3302, %v3098
        %v3371 = vmul.f32 %v3302, %v2907
        %v3372 = vmul.f32 %v3302, %v2909
        %v3373 = vmul.f32 %v3302, %v3100
        %v3374 = vmul.f32 %v3302, %v3102
        %v3375 = vmul.f32 %v3302, %v2913
        %v3376 = vmul.f32 %v3302, %v2915
        %v3377 = vmul.f32 %v3302, %v3106
        %v3378 = vmul.f32 %v3302, %v3108
        %v3379 = vmul.f32 %v3302, %v2917
        %v3380 = vmul.f32 %v3302, %v2919
        %v3381 = vmul.f32 %v3302, %v3110
        %v3382 = vmul.f32 %v3302, %v3112
        %v3383 = vmul.f32 %v3302, %v2923
        %v3384 = vmul.f32 %v3302, %v2925
        %v3385 = vmul.f32 %v3302, %v3116
        %v3386 = vmul.f32 %v3302, %v3118
        %v3387 = vmul.f32 %v3302, %v2927
        %v3388 = vmul.f32 %v3302, %v2929
        %v3389 = vmul.f32 %v3302, %v3120
        %v3390 = vmul.f32 %v3302, %v3122
        %v3391 = vmul.f32 %v3302, %v2933
        %v3392 = vmul.f32 %v3302, %v2935
        %v3393 = vmul.f32 %v3302, %v3126
        %v3394 = vmul.f32 %v3302, %v3128
        %v3395 = vmul.f32 %v3302, %v2937
        %v3396 = vmul.f32 %v3302, %v2939
        %v3397 = vmul.f32 %v3302, %v3130
        %v3398 = vmul.f32 %v3302, %v3132
        %v3399 = vmul.f32 %v3302, %v2943
        %v3400 = vmul.f32 %v3302, %v2945
        %v3401 = vmul.f32 %v3302, %v3136
        %v3402 = vmul.f32 %v3302, %v3138
        %v3403 = vmul.f32 %v3302, %v2947
        %v3404 = vmul.f32 %v3302, %v2949
        %v3405 = vmul.f32 %v3302, %v3140
        %v3406 = vmul.f32 %v3302, %v3142
        %v3407 = vmul.f32 %v3302, %v2953
        %v3408 = vmul.f32 %v3302, %v2955
        %v3409 = vmul.f32 %v3302, %v3146
        %v3410 = vmul.f32 %v3302, %v3148
        %v3411 = vmul.f32 %v3302, %v2957
        %v3412 = vmul.f32 %v3302, %v2959
        %v3413 = vmul.f32 %v3302, %v3150
        %v3414 = vmul.f32 %v3302, %v3152
        %v3415 = vmul.f32 %v3302, %v2963
        %v3416 = vmul.f32 %v3302, %v2965
        %v3417 = vmul.f32 %v3302, %v3156
        %v3418 = vmul.f32 %v3302, %v3158
        %v3419 = vmul.f32 %v3302, %v2967
        %v3420 = vmul.f32 %v3302, %v2969
        %v3421 = vmul.f32 %v3302, %v3160
        %v3422 = vmul.f32 %v3302, %v3162
        %v3423 = vmul.f32 %v3302, %v2973
        %v3424 = vmul.f32 %v3302, %v2975
        %v3425 = vmul.f32 %v3302, %v3166
        %v3426 = vmul.f32 %v3302, %v3168
        %v3427 = vmul.f32 %v3302, %v2977
        %v3428 = vmul.f32 %v3302, %v2979
        %v3429 = vmul.f32 %v3302, %v3170
        %v3430 = vmul.f32 %v3302, %v3172
        %v3431 = vsel %vm3174, %v2823, %v3303
        %v3432 = vsel %vm3175, %v2825, %v3304
        %v3433 = vsel %vm3176, %v3016, %v3305
        %v3434 = vsel %vm3177, %v3018, %v3306
        %v3435 = vsel %vm3178, %v2827, %v3307
        %v3436 = vsel %vm3179, %v2829, %v3308
        %v3437 = vsel %vm3180, %v3020, %v3309
        %v3438 = vsel %vm3181, %v3022, %v3310
        %v3439 = vsel %vm3182, %v2833, %v3311
        %v3440 = vsel %vm3183, %v2835, %v3312
        %v3441 = vsel %vm3184, %v3026, %v3313
        %v3442 = vsel %vm3185, %v3028, %v3314
        %v3443 = vsel %vm3186, %v2837, %v3315
        %v3444 = vsel %vm3187, %v2839, %v3316
        %v3445 = vsel %vm3188, %v3030, %v3317
        %v3446 = vsel %vm3189, %v3032, %v3318
        %v3447 = vsel %vm3190, %v2843, %v3319
        %v3448 = vsel %vm3191, %v2845, %v3320
        %v3449 = vsel %vm3192, %v3036, %v3321
        %v3450 = vsel %vm3193, %v3038, %v3322
        %v3451 = vsel %vm3194, %v2847, %v3323
        %v3452 = vsel %vm3195, %v2849, %v3324
        %v3453 = vsel %vm3196, %v3040, %v3325
        %v3454 = vsel %vm3197, %v3042, %v3326
        %v3455 = vsel %vm3198, %v2853, %v3327
        %v3456 = vsel %vm3199, %v2855, %v3328
        %v3457 = vsel %vm3200, %v3046, %v3329
        %v3458 = vsel %vm3201, %v3048, %v3330
        %v3459 = vsel %vm3202, %v2857, %v3331
        %v3460 = vsel %vm3203, %v2859, %v3332
        %v3461 = vsel %vm3204, %v3050, %v3333
        %v3462 = vsel %vm3205, %v3052, %v3334
        %v3463 = vsel %vm3206, %v2863, %v3335
        %v3464 = vsel %vm3207, %v2865, %v3336
        %v3465 = vsel %vm3208, %v3056, %v3337
        %v3466 = vsel %vm3209, %v3058, %v3338
        %v3467 = vsel %vm3210, %v2867, %v3339
        %v3468 = vsel %vm3211, %v2869, %v3340
        %v3469 = vsel %vm3212, %v3060, %v3341
        %v3470 = vsel %vm3213, %v3062, %v3342
        %v3471 = vsel %vm3214, %v2873, %v3343
        %v3472 = vsel %vm3215, %v2875, %v3344
        %v3473 = vsel %vm3216, %v3066, %v3345
        %v3474 = vsel %vm3217, %v3068, %v3346
        %v3475 = vsel %vm3218, %v2877, %v3347
        %v3476 = vsel %vm3219, %v2879, %v3348
        %v3477 = vsel %vm3220, %v3070, %v3349
        %v3478 = vsel %vm3221, %v3072, %v3350
        %v3479 = vsel %vm3222, %v2883, %v3351
        %v3480 = vsel %vm3223, %v2885, %v3352
        %v3481 = vsel %vm3224, %v3076, %v3353
        %v3482 = vsel %vm3225, %v3078, %v3354
        %v3483 = vsel %vm3226, %v2887, %v3355
        %v3484 = vsel %vm3227, %v2889, %v3356
        %v3485 = vsel %vm3228, %v3080, %v3357
        %v3486 = vsel %vm3229, %v3082, %v3358
        %v3487 = vsel %vm3230, %v2893, %v3359
        %v3488 = vsel %vm3231, %v2895, %v3360
        %v3489 = vsel %vm3232, %v3086, %v3361
        %v3490 = vsel %vm3233, %v3088, %v3362
        %v3491 = vsel %vm3234, %v2897, %v3363
        %v3492 = vsel %vm3235, %v2899, %v3364
        %v3493 = vsel %vm3236, %v3090, %v3365
        %v3494 = vsel %vm3237, %v3092, %v3366
        %v3495 = vsel %vm3238, %v2903, %v3367
        %v3496 = vsel %vm3239, %v2905, %v3368
        %v3497 = vsel %vm3240, %v3096, %v3369
        %v3498 = vsel %vm3241, %v3098, %v3370
        %v3499 = vsel %vm3242, %v2907, %v3371
        %v3500 = vsel %vm3243, %v2909, %v3372
        %v3501 = vsel %vm3244, %v3100, %v3373
        %v3502 = vsel %vm3245, %v3102, %v3374
        %v3503 = vsel %vm3246, %v2913, %v3375
        %v3504 = vsel %vm3247, %v2915, %v3376
        %v3505 = vsel %vm3248, %v3106, %v3377
        %v3506 = vsel %vm3249, %v3108, %v3378
        %v3507 = vsel %vm3250, %v2917, %v3379
        %v3508 = vsel %vm3251, %v2919, %v3380
        %v3509 = vsel %vm3252, %v3110, %v3381
        %v3510 = vsel %vm3253, %v3112, %v3382
        %v3511 = vsel %vm3254, %v2923, %v3383
        %v3512 = vsel %vm3255, %v2925, %v3384
        %v3513 = vsel %vm3256, %v3116, %v3385
        %v3514 = vsel %vm3257, %v3118, %v3386
        %v3515 = vsel %vm3258, %v2927, %v3387
        %v3516 = vsel %vm3259, %v2929, %v3388
        %v3517 = vsel %vm3260, %v3120, %v3389
        %v3518 = vsel %vm3261, %v3122, %v3390
        %v3519 = vsel %vm3262, %v2933, %v3391
        %v3520 = vsel %vm3263, %v2935, %v3392
        %v3521 = vsel %vm3264, %v3126, %v3393
        %v3522 = vsel %vm3265, %v3128, %v3394
        %v3523 = vsel %vm3266, %v2937, %v3395
        %v3524 = vsel %vm3267, %v2939, %v3396
        %v3525 = vsel %vm3268, %v3130, %v3397
        %v3526 = vsel %vm3269, %v3132, %v3398
        %v3527 = vsel %vm3270, %v2943, %v3399
        %v3528 = vsel %vm3271, %v2945, %v3400
        %v3529 = vsel %vm3272, %v3136, %v3401
        %v3530 = vsel %vm3273, %v3138, %v3402
        %v3531 = vsel %vm3274, %v2947, %v3403
        %v3532 = vsel %vm3275, %v2949, %v3404
        %v3533 = vsel %vm3276, %v3140, %v3405
        %v3534 = vsel %vm3277, %v3142, %v3406
        %v3535 = vsel %vm3278, %v2953, %v3407
        %v3536 = vsel %vm3279, %v2955, %v3408
        %v3537 = vsel %vm3280, %v3146, %v3409
        %v3538 = vsel %vm3281, %v3148, %v3410
        %v3539 = vsel %vm3282, %v2957, %v3411
        %v3540 = vsel %vm3283, %v2959, %v3412
        %v3541 = vsel %vm3284, %v3150, %v3413
        %v3542 = vsel %vm3285, %v3152, %v3414
        %v3543 = vsel %vm3286, %v2963, %v3415
        %v3544 = vsel %vm3287, %v2965, %v3416
        %v3545 = vsel %vm3288, %v3156, %v3417
        %v3546 = vsel %vm3289, %v3158, %v3418
        %v3547 = vsel %vm3290, %v2967, %v3419
        %v3548 = vsel %vm3291, %v2969, %v3420
        %v3549 = vsel %vm3292, %v3160, %v3421
        %v3550 = vsel %vm3293, %v3162, %v3422
        %v3551 = vsel %vm3294, %v2973, %v3423
        %v3552 = vsel %vm3295, %v2975, %v3424
        %v3553 = vsel %vm3296, %v3166, %v3425
        %v3554 = vsel %vm3297, %v3168, %v3426
        %v3555 = vsel %vm3298, %v2977, %v3427
        %v3556 = vsel %vm3299, %v2979, %v3428
        %v3557 = vsel %vm3300, %v3170, %v3429
        %v3558 = vsel %vm3301, %v3172, %v3430
        %v3559 = vpack.c.bf16 %v3435, %v3431
        %v3560 = vpack.c.bf16 %v3436, %v3432
        %v3561 = vpack.c.bf16 %v3437, %v3433
        %v3562 = vpack.c.bf16 %v3438, %v3434
        %v3563 = vpack.c.bf16 %v3443, %v3439
        %v3564 = vpack.c.bf16 %v3444, %v3440
        %v3565 = vpack.c.bf16 %v3445, %v3441
        %v3566 = vpack.c.bf16 %v3446, %v3442
        %v3567 = vpack.c.bf16 %v3451, %v3447
        %v3568 = vpack.c.bf16 %v3452, %v3448
        %v3569 = vpack.c.bf16 %v3453, %v3449
        %v3570 = vpack.c.bf16 %v3454, %v3450
        %v3571 = vpack.c.bf16 %v3459, %v3455
        %v3572 = vpack.c.bf16 %v3460, %v3456
        %v3573 = vpack.c.bf16 %v3461, %v3457
        %v3574 = vpack.c.bf16 %v3462, %v3458
        %v3575 = vpack.c.bf16 %v3467, %v3463
        %v3576 = vpack.c.bf16 %v3468, %v3464
        %v3577 = vpack.c.bf16 %v3469, %v3465
        %v3578 = vpack.c.bf16 %v3470, %v3466
        %v3579 = vpack.c.bf16 %v3475, %v3471
        %v3580 = vpack.c.bf16 %v3476, %v3472
        %v3581 = vpack.c.bf16 %v3477, %v3473
        %v3582 = vpack.c.bf16 %v3478, %v3474
        %v3583 = vpack.c.bf16 %v3483, %v3479
        %v3584 = vpack.c.bf16 %v3484, %v3480
        %v3585 = vpack.c.bf16 %v3485, %v3481
        %v3586 = vpack.c.bf16 %v3486, %v3482
        %v3587 = vpack.c.bf16 %v3491, %v3487
        %v3588 = vpack.c.bf16 %v3492, %v3488
        %v3589 = vpack.c.bf16 %v3493, %v3489
        %v3590 = vpack.c.bf16 %v3494, %v3490
        %v3591 = vpack.c.bf16 %v3499, %v3495
        %v3592 = vpack.c.bf16 %v3500, %v3496
        %v3593 = vpack.c.bf16 %v3501, %v3497
        %v3594 = vpack.c.bf16 %v3502, %v3498
        %v3595 = vpack.c.bf16 %v3507, %v3503
        %v3596 = vpack.c.bf16 %v3508, %v3504
        %v3597 = vpack.c.bf16 %v3509, %v3505
        %v3598 = vpack.c.bf16 %v3510, %v3506
        %v3599 = vpack.c.bf16 %v3515, %v3511
        %v3600 = vpack.c.bf16 %v3516, %v3512
        %v3601 = vpack.c.bf16 %v3517, %v3513
        %v3602 = vpack.c.bf16 %v3518, %v3514
        %v3603 = vpack.c.bf16 %v3523, %v3519
        %v3604 = vpack.c.bf16 %v3524, %v3520
        %v3605 = vpack.c.bf16 %v3525, %v3521
        %v3606 = vpack.c.bf16 %v3526, %v3522
        %v3607 = vpack.c.bf16 %v3531, %v3527
        %v3608 = vpack.c.bf16 %v3532, %v3528
        %v3609 = vpack.c.bf16 %v3533, %v3529
        %v3610 = vpack.c.bf16 %v3534, %v3530
        %v3611 = vpack.c.bf16 %v3539, %v3535
        %v3612 = vpack.c.bf16 %v3540, %v3536
        %v3613 = vpack.c.bf16 %v3541, %v3537
        %v3614 = vpack.c.bf16 %v3542, %v3538
        %v3615 = vpack.c.bf16 %v3547, %v3543
        %v3616 = vpack.c.bf16 %v3548, %v3544
        %v3617 = vpack.c.bf16 %v3549, %v3545
        %v3618 = vpack.c.bf16 %v3550, %v3546
        %v3619 = vpack.c.bf16 %v3555, %v3551
        %v3620 = vpack.c.bf16 %v3556, %v3552
        %v3621 = vpack.c.bf16 %v3557, %v3553
        %v3622 = vpack.c.bf16 %v3558, %v3554
        %v3623 = vld [vmem:[%s6] sm:$0xff]
        %v3624 = vld [vmem:[%s6 + $0x8] sm:$0xff]
        %v3625 = vld [vmem:[%s6 + $0x10] sm:$0xff]
        %v3626 = vld [vmem:[%s6 + $0x18] sm:$0xff]
        %v3627 = vld [vmem:[%s6 + $0x20] sm:$0xff]
        %v3628 = vld [vmem:[%s6 + $0x28] sm:$0xff]
        %v3629 = vld [vmem:[%s6 + $0x30] sm:$0xff]
        %v3630 = vld [vmem:[%s6 + $0x38] sm:$0xff]
        %v3631 = vld [vmem:[%s6 + $0x40] sm:$0xff]
        %v3632 = vld [vmem:[%s6 + $0x48] sm:$0xff]
        %v3633 = vld [vmem:[%s6 + $0x50] sm:$0xff]
        %v3634 = vld [vmem:[%s6 + $0x58] sm:$0xff]
        %v3635 = vld [vmem:[%s6 + $0x60] sm:$0xff]
        %v3636 = vld [vmem:[%s6 + $0x68] sm:$0xff]
        %v3637 = vld [vmem:[%s6 + $0x70] sm:$0xff]
        %v3638 = vld [vmem:[%s6 + $0x78] sm:$0xff]
        %v3639 = vld [vmem:[%s6 + $0x80] sm:$0xff]
        %v3640 = vld [vmem:[%s6 + $0x88] sm:$0xff]
        %v3641 = vld [vmem:[%s6 + $0x90] sm:$0xff]
        %v3642 = vld [vmem:[%s6 + $0x98] sm:$0xff]
        %v3643 = vld [vmem:[%s6 + $0xa0] sm:$0xff]
        %v3644 = vld [vmem:[%s6 + $0xa8] sm:$0xff]
        %v3645 = vld [vmem:[%s6 + $0xb0] sm:$0xff]
        %v3646 = vld [vmem:[%s6 + $0xb8] sm:$0xff]
        %v3647 = vld [vmem:[%s6 + $0xc0] sm:$0xff]
        %v3648 = vld [vmem:[%s6 + $0xc8] sm:$0xff]
        %v3649 = vld [vmem:[%s6 + $0xd0] sm:$0xff]
        %v3650 = vld [vmem:[%s6 + $0xd8] sm:$0xff]
        %v3651 = vld [vmem:[%s6 + $0xe0] sm:$0xff]
        %v3652 = vld [vmem:[%s6 + $0xe8] sm:$0xff]
        %v3653 = vld [vmem:[%s6 + $0xf0] sm:$0xff]
        %v3654 = vld [vmem:[%s6 + $0xf8] sm:$0xff]
        %v3655 = vld [vmem:[%s7] sm:$0xff]
        %v3656 = vld [vmem:[%s7 + $0x8] sm:$0xff]
        %v3657 = vld [vmem:[%s7 + $0x10] sm:$0xff]
        %v3658 = vld [vmem:[%s7 + $0x18] sm:$0xff]
        %v3659 = vld [vmem:[%s7 + $0x20] sm:$0xff]
        %v3660 = vld [vmem:[%s7 + $0x28] sm:$0xff]
        %v3661 = vld [vmem:[%s7 + $0x30] sm:$0xff]
        %v3662 = vld [vmem:[%s7 + $0x38] sm:$0xff]
        %v3663 = vld [vmem:[%s7 + $0x40] sm:$0xff]
        %v3664 = vld [vmem:[%s7 + $0x48] sm:$0xff]
        %v3665 = vld [vmem:[%s7 + $0x50] sm:$0xff]
        %v3666 = vld [vmem:[%s7 + $0x58] sm:$0xff]
        %v3667 = vld [vmem:[%s7 + $0x60] sm:$0xff]
        %v3668 = vld [vmem:[%s7 + $0x68] sm:$0xff]
        %v3669 = vld [vmem:[%s7 + $0x70] sm:$0xff]
        %v3670 = vld [vmem:[%s7 + $0x78] sm:$0xff]
        %v3671 = vld [vmem:[%s7 + $0x80] sm:$0xff]
        %v3672 = vld [vmem:[%s7 + $0x88] sm:$0xff]
        %v3673 = vld [vmem:[%s7 + $0x90] sm:$0xff]
        %v3674 = vld [vmem:[%s7 + $0x98] sm:$0xff]
        %v3675 = vld [vmem:[%s7 + $0xa0] sm:$0xff]
        %v3676 = vld [vmem:[%s7 + $0xa8] sm:$0xff]
        %v3677 = vld [vmem:[%s7 + $0xb0] sm:$0xff]
        %v3678 = vld [vmem:[%s7 + $0xb8] sm:$0xff]
        %v3679 = vld [vmem:[%s7 + $0xc0] sm:$0xff]
        %v3680 = vld [vmem:[%s7 + $0xc8] sm:$0xff]
        %v3681 = vld [vmem:[%s7 + $0xd0] sm:$0xff]
        %v3682 = vld [vmem:[%s7 + $0xd8] sm:$0xff]
        %v3683 = vld [vmem:[%s7 + $0xe0] sm:$0xff]
        %v3684 = vld [vmem:[%s7 + $0xe8] sm:$0xff]
        %v3685 = vld [vmem:[%s7 + $0xf0] sm:$0xff]
        %v3686 = vld [vmem:[%s7 + $0xf8] sm:$0xff]
        %3688 = vset.pattern.permute.xlu0 0
        %3689 = vperm.xlu0 %3688, %v3655
        %v3690 = vpop.permute.xlu0 %3689
        %3693 = vset.pattern.permute.xlu0 0
        %3694 = vperm.xlu0 %3693, %v3656
        %v3695 = vpop.permute.xlu0 %3694
        %3698 = vset.pattern.permute.xlu0 0
        %3699 = vperm.xlu0 %3698, %v3657
        %v3700 = vpop.permute.xlu0 %3699
        %3703 = vset.pattern.permute.xlu0 0
        %3704 = vperm.xlu0 %3703, %v3658
        %v3705 = vpop.permute.xlu0 %3704
        %3708 = vset.pattern.permute.xlu0 0
        %3709 = vperm.xlu0 %3708, %v3659
        %v3710 = vpop.permute.xlu0 %3709
        %3713 = vset.pattern.permute.xlu0 0
        %3714 = vperm.xlu0 %3713, %v3660
        %v3715 = vpop.permute.xlu0 %3714
        %3718 = vset.pattern.permute.xlu0 0
        %3719 = vperm.xlu0 %3718, %v3661
        %v3720 = vpop.permute.xlu0 %3719
        %3723 = vset.pattern.permute.xlu0 0
        %3724 = vperm.xlu0 %3723, %v3662
        %v3725 = vpop.permute.xlu0 %3724
        %3728 = vset.pattern.permute.xlu0 0
        %3729 = vperm.xlu0 %3728, %v3663
        %v3730 = vpop.permute.xlu0 %3729
        %3733 = vset.pattern.permute.xlu0 0
        %3734 = vperm.xlu0 %3733, %v3664
        %v3735 = vpop.permute.xlu0 %3734
        %3738 = vset.pattern.permute.xlu0 0
        %3739 = vperm.xlu0 %3738, %v3665
        %v3740 = vpop.permute.xlu0 %3739
        %3743 = vset.pattern.permute.xlu0 0
        %3744 = vperm.xlu0 %3743, %v3666
        %v3745 = vpop.permute.xlu0 %3744
        %3748 = vset.pattern.permute.xlu0 0
        %3749 = vperm.xlu0 %3748, %v3667
        %v3750 = vpop.permute.xlu0 %3749
        %3753 = vset.pattern.permute.xlu0 0
        %3754 = vperm.xlu0 %3753, %v3668
        %v3755 = vpop.permute.xlu0 %3754
        %3758 = vset.pattern.permute.xlu0 0
        %3759 = vperm.xlu0 %3758, %v3669
        %v3760 = vpop.permute.xlu0 %3759
        %3763 = vset.pattern.permute.xlu0 0
        %3764 = vperm.xlu0 %3763, %v3670
        %v3765 = vpop.permute.xlu0 %3764
        %3768 = vset.pattern.permute.xlu0 0
        %3769 = vperm.xlu0 %3768, %v3671
        %v3770 = vpop.permute.xlu0 %3769
        %3773 = vset.pattern.permute.xlu0 0
        %3774 = vperm.xlu0 %3773, %v3672
        %v3775 = vpop.permute.xlu0 %3774
        %3778 = vset.pattern.permute.xlu0 0
        %3779 = vperm.xlu0 %3778, %v3673
        %v3780 = vpop.permute.xlu0 %3779
        %3783 = vset.pattern.permute.xlu0 0
        %3784 = vperm.xlu0 %3783, %v3674
        %v3785 = vpop.permute.xlu0 %3784
        %3788 = vset.pattern.permute.xlu0 0
        %3789 = vperm.xlu0 %3788, %v3675
        %v3790 = vpop.permute.xlu0 %3789
        %3793 = vset.pattern.permute.xlu0 0
        %3794 = vperm.xlu0 %3793, %v3676
        %v3795 = vpop.permute.xlu0 %3794
        %3798 = vset.pattern.permute.xlu0 0
        %3799 = vperm.xlu0 %3798, %v3677
        %v3800 = vpop.permute.xlu0 %3799
        %3803 = vset.pattern.permute.xlu0 0
        %3804 = vperm.xlu0 %3803, %v3678
        %v3805 = vpop.permute.xlu0 %3804
        %3808 = vset.pattern.permute.xlu0 0
        %3809 = vperm.xlu0 %3808, %v3679
        %v3810 = vpop.permute.xlu0 %3809
        %3813 = vset.pattern.permute.xlu0 0
        %3814 = vperm.xlu0 %3813, %v3680
        %v3815 = vpop.permute.xlu0 %3814
        %3818 = vset.pattern.permute.xlu0 0
        %3819 = vperm.xlu0 %3818, %v3681
        %v3820 = vpop.permute.xlu0 %3819
        %3823 = vset.pattern.permute.xlu0 0
        %3824 = vperm.xlu0 %3823, %v3682
        %v3825 = vpop.permute.xlu0 %3824
        %3828 = vset.pattern.permute.xlu0 0
        %3829 = vperm.xlu0 %3828, %v3683
        %v3830 = vpop.permute.xlu0 %3829
        %3833 = vset.pattern.permute.xlu0 0
        %3834 = vperm.xlu0 %3833, %v3684
        %v3835 = vpop.permute.xlu0 %3834
        %3838 = vset.pattern.permute.xlu0 0
        %3839 = vperm.xlu0 %3838, %v3685
        %v3840 = vpop.permute.xlu0 %3839
        %3843 = vset.pattern.permute.xlu0 0
        %3844 = vperm.xlu0 %3843, %v3686
        %v3845 = vpop.permute.xlu0 %3844
        %v3879 = vunpack.c.l.b16 %v3623
        %v3880 = vunpack.c.h.b16 %v3623
        %v3881 = vunpack.c.l.b16 %v3624
        %v3882 = vunpack.c.h.b16 %v3624
        %v3883 = vunpack.c.l.b16 %v3625
        %v3884 = vunpack.c.h.b16 %v3625
        %v3885 = vunpack.c.l.b16 %v3626
        %v3886 = vunpack.c.h.b16 %v3626
        %v3887 = vunpack.c.l.b16 %v3627
        %v3888 = vunpack.c.h.b16 %v3627
        %v3889 = vunpack.c.l.b16 %v3628
        %v3890 = vunpack.c.h.b16 %v3628
        %v3891 = vunpack.c.l.b16 %v3629
        %v3892 = vunpack.c.h.b16 %v3629
        %v3893 = vunpack.c.l.b16 %v3630
        %v3894 = vunpack.c.h.b16 %v3630
        %v3895 = vunpack.c.l.b16 %v3631
        %v3896 = vunpack.c.h.b16 %v3631
        %v3897 = vunpack.c.l.b16 %v3632
        %v3898 = vunpack.c.h.b16 %v3632
        %v3899 = vunpack.c.l.b16 %v3633
        %v3900 = vunpack.c.h.b16 %v3633
        %v3901 = vunpack.c.l.b16 %v3634
        %v3902 = vunpack.c.h.b16 %v3634
        %v3903 = vunpack.c.l.b16 %v3635
        %v3904 = vunpack.c.h.b16 %v3635
        %v3905 = vunpack.c.l.b16 %v3636
        %v3906 = vunpack.c.h.b16 %v3636
        %v3907 = vunpack.c.l.b16 %v3637
        %v3908 = vunpack.c.h.b16 %v3637
        %v3909 = vunpack.c.l.b16 %v3638
        %v3910 = vunpack.c.h.b16 %v3638
        %v3911 = vunpack.c.l.b16 %v3639
        %v3912 = vunpack.c.h.b16 %v3639
        %v3913 = vunpack.c.l.b16 %v3640
        %v3914 = vunpack.c.h.b16 %v3640
        %v3915 = vunpack.c.l.b16 %v3641
        %v3916 = vunpack.c.h.b16 %v3641
        %v3917 = vunpack.c.l.b16 %v3642
        %v3918 = vunpack.c.h.b16 %v3642
        %v3919 = vunpack.c.l.b16 %v3643
        %v3920 = vunpack.c.h.b16 %v3643
        %v3921 = vunpack.c.l.b16 %v3644
        %v3922 = vunpack.c.h.b16 %v3644
        %v3923 = vunpack.c.l.b16 %v3645
        %v3924 = vunpack.c.h.b16 %v3645
        %v3925 = vunpack.c.l.b16 %v3646
        %v3926 = vunpack.c.h.b16 %v3646
        %v3927 = vunpack.c.l.b16 %v3647
        %v3928 = vunpack.c.h.b16 %v3647
        %v3929 = vunpack.c.l.b16 %v3648
        %v3930 = vunpack.c.h.b16 %v3648
        %v3931 = vunpack.c.l.b16 %v3649
        %v3932 = vunpack.c.h.b16 %v3649
        %v3933 = vunpack.c.l.b16 %v3650
        %v3934 = vunpack.c.h.b16 %v3650
        %v3935 = vunpack.c.l.b16 %v3651
        %v3936 = vunpack.c.h.b16 %v3651
        %v3937 = vunpack.c.l.b16 %v3652
        %v3938 = vunpack.c.h.b16 %v3652
        %v3939 = vunpack.c.l.b16 %v3653
        %v3940 = vunpack.c.h.b16 %v3653
        %v3941 = vunpack.c.l.b16 %v3654
        %v3942 = vunpack.c.h.b16 %v3654
        %v3943 = vpack.c.b16 %v3881, %v3879
        %v3944 = vpack.c.b16 %v3882, %v3880
        %v3945 = vpack.c.b16 %v3885, %v3883
        %v3946 = vpack.c.b16 %v3886, %v3884
        %v3947 = vpack.c.b16 %v3889, %v3887
        %v3948 = vpack.c.b16 %v3890, %v3888
        %v3949 = vpack.c.b16 %v3893, %v3891
        %v3950 = vpack.c.b16 %v3894, %v3892
        %v3951 = vpack.c.b16 %v3897, %v3895
        %v3952 = vpack.c.b16 %v3898, %v3896
        %v3953 = vpack.c.b16 %v3901, %v3899
        %v3954 = vpack.c.b16 %v3902, %v3900
        %v3955 = vpack.c.b16 %v3905, %v3903
        %v3956 = vpack.c.b16 %v3906, %v3904
        %v3957 = vpack.c.b16 %v3909, %v3907
        %v3958 = vpack.c.b16 %v3910, %v3908
        %v3959 = vpack.c.b16 %v3913, %v3911
        %v3960 = vpack.c.b16 %v3914, %v3912
        %v3961 = vpack.c.b16 %v3917, %v3915
        %v3962 = vpack.c.b16 %v3918, %v3916
        %v3963 = vpack.c.b16 %v3921, %v3919
        %v3964 = vpack.c.b16 %v3922, %v3920
        %v3965 = vpack.c.b16 %v3925, %v3923
        %v3966 = vpack.c.b16 %v3926, %v3924
        %v3967 = vpack.c.b16 %v3929, %v3927
        %v3968 = vpack.c.b16 %v3930, %v3928
        %v3969 = vpack.c.b16 %v3933, %v3931
        %v3970 = vpack.c.b16 %v3934, %v3932
        %v3971 = vpack.c.b16 %v3937, %v3935
        %v3972 = vpack.c.b16 %v3938, %v3936
        %v3973 = vpack.c.b16 %v3941, %v3939
        %v3974 = vpack.c.b16 %v3942, %v3940
        %4007 = vmatprep.subr.bf16.mxu0 %v3560
        %4008 = vmatpush1.bf16.msra.mxu0 %v3559
        %4009 = vmatprep.subr.bf16.mxu0 %v3564
        %4010 = vmatpush1.bf16.msra.mxu0 %v3563
        %4011 = vmatprep.subr.bf16.mxu0 %v3568
        %4012 = vmatpush1.bf16.msra.mxu0 %v3567
        %4013 = vmatprep.subr.bf16.mxu0 %v3572
        %4014 = vmatpush1.bf16.msra.mxu0 %v3571
        %4015 = vmatprep.subr.bf16.mxu0 %v3576
        %4016 = vmatpush1.bf16.msra.mxu0 %v3575
        %4017 = vmatprep.subr.bf16.mxu0 %v3580
        %4018 = vmatpush1.bf16.msra.mxu0 %v3579
        %4019 = vmatprep.subr.bf16.mxu0 %v3584
        %4020 = vmatpush1.bf16.msra.mxu0 %v3583
        %4021 = vmatprep.subr.bf16.mxu0 %v3588
        %4022 = vmatpush1.bf16.msra.mxu0 %v3587
        %4023 = vmatprep.subr.bf16.mxu0 %v3592
        %4024 = vmatpush1.bf16.msra.mxu0 %v3591
        %4025 = vmatprep.subr.bf16.mxu0 %v3596
        %4026 = vmatpush1.bf16.msra.mxu0 %v3595
        %4027 = vmatprep.subr.bf16.mxu0 %v3600
        %4028 = vmatpush1.bf16.msra.mxu0 %v3599
        %4029 = vmatprep.subr.bf16.mxu0 %v3604
        %4030 = vmatpush1.bf16.msra.mxu0 %v3603
        %4031 = vmatprep.subr.bf16.mxu0 %v3608
        %4032 = vmatpush1.bf16.msra.mxu0 %v3607
        %4033 = vmatprep.subr.bf16.mxu0 %v3612
        %4034 = vmatpush1.bf16.msra.mxu0 %v3611
        %4035 = vmatprep.subr.bf16.mxu0 %v3616
        %4036 = vmatpush1.bf16.msra.mxu0 %v3615
        %4037 = vmatprep.subr.bf16.mxu0 %v3620
        %4038 = vmatpush1.bf16.msra.mxu0 %v3619
        %4039 = vmatprep.mubr.bf16.mxu0 %v3944
        %4040 = vmatmul.mubr.bf16.gmra.mrb[0].mxu0 %v3943
        %v4041 = vpop.f32.mrb[0].mxu0
        %v4042 = vadd.f32 %v3690, %v4041
        %v4043 = vpop.f32.mrb[0].mxu0
        %v4044 = vadd.f32 %v3690, %v4043
        %v4045 = vpop.f32.mrb[0].mxu0
        %v4046 = vadd.f32 %v3695, %v4045
        %v4047 = vpop.f32.mrb[0].mxu0
        %v4048 = vadd.f32 %v3695, %v4047
        %4049 = vmatprep.mubr.bf16.mxu0 %v3946
        %4050 = vmatmul.mubr.bf16.gmra.mrb[0].mxu0 %v3945
        %v4051 = vpop.f32.mrb[0].mxu0
        %v4052 = vadd.f32 %v3700, %v4051
        %v4053 = vpop.f32.mrb[0].mxu0
        %v4054 = vadd.f32 %v3700, %v4053
        %v4055 = vpop.f32.mrb[0].mxu0
        %v4056 = vadd.f32 %v3705, %v4055
        %v4057 = vpop.f32.mrb[0].mxu0
        %v4058 = vadd.f32 %v3705, %v4057
        %4059 = vmatprep.mubr.bf16.mxu0 %v3948
        %4060 = vmatmul.mubr.bf16.gmra.mrb[0].mxu0 %v3947
        %v4061 = vpop.f32.mrb[0].mxu0
        %v4062 = vadd.f32 %v3710, %v4061
        %v4063 = vpop.f32.mrb[0].mxu0
        %v4064 = vadd.f32 %v3710, %v4063
        %v4065 = vpop.f32.mrb[0].mxu0
        %v4066 = vadd.f32 %v3715, %v4065
        %v4067 = vpop.f32.mrb[0].mxu0
        %v4068 = vadd.f32 %v3715, %v4067
        %4069 = vmatprep.mubr.bf16.mxu0 %v3950
        %4070 = vmatmul.mubr.bf16.gmra.mrb[0].mxu0 %v3949
        %v4071 = vpop.f32.mrb[0].mxu0
        %v4072 = vadd.f32 %v3720, %v4071
        %v4073 = vpop.f32.mrb[0].mxu0
        %v4074 = vadd.f32 %v3720, %v4073
        %v4075 = vpop.f32.mrb[0].mxu0
        %v4076 = vadd.f32 %v3725, %v4075
        %v4077 = vpop.f32.mrb[0].mxu0
        %v4078 = vadd.f32 %v3725, %v4077
        %4079 = vmatprep.mubr.bf16.mxu0 %v3952
        %4080 = vmatmul.mubr.bf16.gmra.mrb[0].mxu0 %v3951
        %v4081 = vpop.f32.mrb[0].mxu0
        %v4082 = vadd.f32 %v3730, %v4081
        %v4083 = vpop.f32.mrb[0].mxu0
        %v4084 = vadd.f32 %v3730, %v4083
        %v4085 = vpop.f32.mrb[0].mxu0
        %v4086 = vadd.f32 %v3735, %v4085
        %v4087 = vpop.f32.mrb[0].mxu0
        %v4088 = vadd.f32 %v3735, %v4087
        %4089 = vmatprep.mubr.bf16.mxu0 %v3954
        %4090 = vmatmul.mubr.bf16.gmra.mrb[0].mxu0 %v3953
        %v4091 = vpop.f32.mrb[0].mxu0
        %v4092 = vadd.f32 %v3740, %v4091
        %v4093 = vpop.f32.mrb[0].mxu0
        %v4094 = vadd.f32 %v3740, %v4093
        %v4095 = vpop.f32.mrb[0].mxu0
        %v4096 = vadd.f32 %v3745, %v4095
        %v4097 = vpop.f32.mrb[0].mxu0
        %v4098 = vadd.f32 %v3745, %v4097
        %4099 = vmatprep.mubr.bf16.mxu0 %v3956
        %4100 = vmatmul.mubr.bf16.gmra.mrb[0].mxu0 %v3955
        %v4101 = vpop.f32.mrb[0].mxu0
        %v4102 = vadd.f32 %v3750, %v4101
        %v4103 = vpop.f32.mrb[0].mxu0
        %v4104 = vadd.f32 %v3750, %v4103
        %v4105 = vpop.f32.mrb[0].mxu0
        %v4106 = vadd.f32 %v3755, %v4105
        %v4107 = vpop.f32.mrb[0].mxu0
        %v4108 = vadd.f32 %v3755, %v4107
        %4109 = vmatprep.mubr.bf16.mxu0 %v3958
        %4110 = vmatmul.mubr.bf16.gmra.mrb[0].mxu0 %v3957
        %v4111 = vpop.f32.mrb[0].mxu0
        %v4112 = vadd.f32 %v3760, %v4111
        %v4113 = vpop.f32.mrb[0].mxu0
        %v4114 = vadd.f32 %v3760, %v4113
        %v4115 = vpop.f32.mrb[0].mxu0
        %v4116 = vadd.f32 %v3765, %v4115
        %v4117 = vpop.f32.mrb[0].mxu0
        %v4118 = vadd.f32 %v3765, %v4117
        %4119 = vmatprep.mubr.bf16.mxu0 %v3960
        %4120 = vmatmul.mubr.bf16.gmra.mrb[0].mxu0 %v3959
        %v4121 = vpop.f32.mrb[0].mxu0
        %v4122 = vadd.f32 %v3770, %v4121
        %v4123 = vpop.f32.mrb[0].mxu0
        %v4124 = vadd.f32 %v3770, %v4123
        %v4125 = vpop.f32.mrb[0].mxu0
        %v4126 = vadd.f32 %v3775, %v4125
        %v4127 = vpop.f32.mrb[0].mxu0
        %v4128 = vadd.f32 %v3775, %v4127
        %4129 = vmatprep.mubr.bf16.mxu0 %v3962
        %4130 = vmatmul.mubr.bf16.gmra.mrb[0].mxu0 %v3961
        %v4131 = vpop.f32.mrb[0].mxu0
        %v4132 = vadd.f32 %v3780, %v4131
        %v4133 = vpop.f32.mrb[0].mxu0
        %v4134 = vadd.f32 %v3780, %v4133
        %v4135 = vpop.f32.mrb[0].mxu0
        %v4136 = vadd.f32 %v3785, %v4135
        %v4137 = vpop.f32.mrb[0].mxu0
        %v4138 = vadd.f32 %v3785, %v4137
        %4139 = vmatprep.mubr.bf16.mxu0 %v3964
        %4140 = vmatmul.mubr.bf16.gmra.mrb[0].mxu0 %v3963
        %v4141 = vpop.f32.mrb[0].mxu0
        %v4142 = vadd.f32 %v3790, %v4141
        %v4143 = vpop.f32.mrb[0].mxu0
        %v4144 = vadd.f32 %v3790, %v4143
        %v4145 = vpop.f32.mrb[0].mxu0
        %v4146 = vadd.f32 %v3795, %v4145
        %v4147 = vpop.f32.mrb[0].mxu0
        %v4148 = vadd.f32 %v3795, %v4147
        %4149 = vmatprep.mubr.bf16.mxu0 %v3966
        %4150 = vmatmul.mubr.bf16.gmra.mrb[0].mxu0 %v3965
        %v4151 = vpop.f32.mrb[0].mxu0
        %v4152 = vadd.f32 %v3800, %v4151
        %v4153 = vpop.f32.mrb[0].mxu0
        %v4154 = vadd.f32 %v3800, %v4153
        %v4155 = vpop.f32.mrb[0].mxu0
        %v4156 = vadd.f32 %v3805, %v4155
        %v4157 = vpop.f32.mrb[0].mxu0
        %v4158 = vadd.f32 %v3805, %v4157
        %4159 = vmatprep.mubr.bf16.mxu0 %v3968
        %4160 = vmatmul.mubr.bf16.gmra.mrb[0].mxu0 %v3967
        %v4161 = vpop.f32.mrb[0].mxu0
        %v4162 = vadd.f32 %v3810, %v4161
        %v4163 = vpop.f32.mrb[0].mxu0
        %v4164 = vadd.f32 %v3810, %v4163
        %v4165 = vpop.f32.mrb[0].mxu0
        %v4166 = vadd.f32 %v3815, %v4165
        %v4167 = vpop.f32.mrb[0].mxu0
        %v4168 = vadd.f32 %v3815, %v4167
        %4169 = vmatprep.mubr.bf16.mxu0 %v3970
        %4170 = vmatmul.mubr.bf16.gmra.mrb[0].mxu0 %v3969
        %v4171 = vpop.f32.mrb[0].mxu0
        %v4172 = vadd.f32 %v3820, %v4171
        %v4173 = vpop.f32.mrb[0].mxu0
        %v4174 = vadd.f32 %v3820, %v4173
        %v4175 = vpop.f32.mrb[0].mxu0
        %v4176 = vadd.f32 %v3825, %v4175
        %v4177 = vpop.f32.mrb[0].mxu0
        %v4178 = vadd.f32 %v3825, %v4177
        %4179 = vmatprep.mubr.bf16.mxu0 %v3972
        %4180 = vmatmul.mubr.bf16.gmra.mrb[0].mxu0 %v3971
        %v4181 = vpop.f32.mrb[0].mxu0
        %v4182 = vadd.f32 %v3830, %v4181
        %v4183 = vpop.f32.mrb[0].mxu0
        %v4184 = vadd.f32 %v3830, %v4183
        %v4185 = vpop.f32.mrb[0].mxu0
        %v4186 = vadd.f32 %v3835, %v4185
        %v4187 = vpop.f32.mrb[0].mxu0
        %v4188 = vadd.f32 %v3835, %v4187
        %4189 = vmatprep.mubr.bf16.mxu0 %v3974
        %4190 = vmatmul.mubr.bf16.gmra.mrb[0].mxu0 %v3973
        %v4191 = vpop.f32.mrb[0].mxu0
        %v4192 = vadd.f32 %v3840, %v4191
        %v4193 = vpop.f32.mrb[0].mxu0
        %v4194 = vadd.f32 %v3840, %v4193
        %v4195 = vpop.f32.mrb[0].mxu0
        %v4196 = vadd.f32 %v3845, %v4195
        %v4197 = vpop.f32.mrb[0].mxu0
        %v4198 = vadd.f32 %v3845, %v4197
        %4199 = vdwg.mxu0
        %4200 = vmatprep.subr.bf16.mxu0 %v3562
        %4201 = vmatpush1.bf16.msra.mxu0 %v3561
        %4202 = vmatprep.subr.bf16.mxu0 %v3566
        %4203 = vmatpush1.bf16.msra.mxu0 %v3565
        %4204 = vmatprep.subr.bf16.mxu0 %v3570
        %4205 = vmatpush1.bf16.msra.mxu0 %v3569
        %4206 = vmatprep.subr.bf16.mxu0 %v3574
        %4207 = vmatpush1.bf16.msra.mxu0 %v3573
        %4208 = vmatprep.subr.bf16.mxu0 %v3578
        %4209 = vmatpush1.bf16.msra.mxu0 %v3577
        %4210 = vmatprep.subr.bf16.mxu0 %v3582
        %4211 = vmatpush1.bf16.msra.mxu0 %v3581
        %4212 = vmatprep.subr.bf16.mxu0 %v3586
        %4213 = vmatpush1.bf16.msra.mxu0 %v3585
        %4214 = vmatprep.subr.bf16.mxu0 %v3590
        %4215 = vmatpush1.bf16.msra.mxu0 %v3589
        %4216 = vmatprep.subr.bf16.mxu0 %v3594
        %4217 = vmatpush1.bf16.msra.mxu0 %v3593
        %4218 = vmatprep.subr.bf16.mxu0 %v3598
        %4219 = vmatpush1.bf16.msra.mxu0 %v3597
        %4220 = vmatprep.subr.bf16.mxu0 %v3602
        %4221 = vmatpush1.bf16.msra.mxu0 %v3601
        %4222 = vmatprep.subr.bf16.mxu0 %v3606
        %4223 = vmatpush1.bf16.msra.mxu0 %v3605
        %4224 = vmatprep.subr.bf16.mxu0 %v3610
        %4225 = vmatpush1.bf16.msra.mxu0 %v3609
        %4226 = vmatprep.subr.bf16.mxu0 %v3614
        %4227 = vmatpush1.bf16.msra.mxu0 %v3613
        %4228 = vmatprep.subr.bf16.mxu0 %v3618
        %4229 = vmatpush1.bf16.msra.mxu0 %v3617
        %4230 = vmatprep.subr.bf16.mxu0 %v3622
        %4231 = vmatpush1.bf16.msra.mxu0 %v3621
        %4232 = vmatprep.mubr.bf16.mxu0 %v3944
        %4233 = vmatmul.mubr.bf16.gmra.mrb[0].mxu0 %v3943
        %v4234 = vpop.f32.mrb[0].mxu0
        %v4235 = vadd.f32 %v3690, %v4234
        %v4236 = vpop.f32.mrb[0].mxu0
        %v4237 = vadd.f32 %v3690, %v4236
        %v4238 = vpop.f32.mrb[0].mxu0
        %v4239 = vadd.f32 %v3695, %v4238
        %v4240 = vpop.f32.mrb[0].mxu0
        %v4241 = vadd.f32 %v3695, %v4240
        %4242 = vmatprep.mubr.bf16.mxu0 %v3946
        %4243 = vmatmul.mubr.bf16.gmra.mrb[0].mxu0 %v3945
        %v4244 = vpop.f32.mrb[0].mxu0
        %v4245 = vadd.f32 %v3700, %v4244
        %v4246 = vpop.f32.mrb[0].mxu0
        %v4247 = vadd.f32 %v3700, %v4246
        %v4248 = vpop.f32.mrb[0].mxu0
        %v4249 = vadd.f32 %v3705, %v4248
        %v4250 = vpop.f32.mrb[0].mxu0
        %v4251 = vadd.f32 %v3705, %v4250
        %4252 = vmatprep.mubr.bf16.mxu0 %v3948
        %4253 = vmatmul.mubr.bf16.gmra.mrb[0].mxu0 %v3947
        %v4254 = vpop.f32.mrb[0].mxu0
        %v4255 = vadd.f32 %v3710, %v4254
        %v4256 = vpop.f32.mrb[0].mxu0
        %v4257 = vadd.f32 %v3710, %v4256
        %v4258 = vpop.f32.mrb[0].mxu0
        %v4259 = vadd.f32 %v3715, %v4258
        %v4260 = vpop.f32.mrb[0].mxu0
        %v4261 = vadd.f32 %v3715, %v4260
        %4262 = vmatprep.mubr.bf16.mxu0 %v3950
        %4263 = vmatmul.mubr.bf16.gmra.mrb[0].mxu0 %v3949
        %v4264 = vpop.f32.mrb[0].mxu0
        %v4265 = vadd.f32 %v3720, %v4264
        %v4266 = vpop.f32.mrb[0].mxu0
        %v4267 = vadd.f32 %v3720, %v4266
        %v4268 = vpop.f32.mrb[0].mxu0
        %v4269 = vadd.f32 %v3725, %v4268
        %v4270 = vpop.f32.mrb[0].mxu0
        %v4271 = vadd.f32 %v3725, %v4270
        %4272 = vmatprep.mubr.bf16.mxu0 %v3952
        %4273 = vmatmul.mubr.bf16.gmra.mrb[0].mxu0 %v3951
        %v4274 = vpop.f32.mrb[0].mxu0
        %v4275 = vadd.f32 %v3730, %v4274
        %v4276 = vpop.f32.mrb[0].mxu0
        %v4277 = vadd.f32 %v3730, %v4276
        %v4278 = vpop.f32.mrb[0].mxu0
        %v4279 = vadd.f32 %v3735, %v4278
        %v4280 = vpop.f32.mrb[0].mxu0
        %v4281 = vadd.f32 %v3735, %v4280
        %4282 = vmatprep.mubr.bf16.mxu0 %v3954
        %4283 = vmatmul.mubr.bf16.gmra.mrb[0].mxu0 %v3953
        %v4284 = vpop.f32.mrb[0].mxu0
        %v4285 = vadd.f32 %v3740, %v4284
        %v4286 = vpop.f32.mrb[0].mxu0
        %v4287 = vadd.f32 %v3740, %v4286
        %v4288 = vpop.f32.mrb[0].mxu0
        %v4289 = vadd.f32 %v3745, %v4288
        %v4290 = vpop.f32.mrb[0].mxu0
        %v4291 = vadd.f32 %v3745, %v4290
        %4292 = vmatprep.mubr.bf16.mxu0 %v3956
        %4293 = vmatmul.mubr.bf16.gmra.mrb[0].mxu0 %v3955
        %v4294 = vpop.f32.mrb[0].mxu0
        %v4295 = vadd.f32 %v3750, %v4294
        %v4296 = vpop.f32.mrb[0].mxu0
        %v4297 = vadd.f32 %v3750, %v4296
        %v4298 = vpop.f32.mrb[0].mxu0
        %v4299 = vadd.f32 %v3755, %v4298
        %v4300 = vpop.f32.mrb[0].mxu0
        %v4301 = vadd.f32 %v3755, %v4300
        %4302 = vmatprep.mubr.bf16.mxu0 %v3958
        %4303 = vmatmul.mubr.bf16.gmra.mrb[0].mxu0 %v3957
        %v4304 = vpop.f32.mrb[0].mxu0
        %v4305 = vadd.f32 %v3760, %v4304
        %v4306 = vpop.f32.mrb[0].mxu0
        %v4307 = vadd.f32 %v3760, %v4306
        %v4308 = vpop.f32.mrb[0].mxu0
        %v4309 = vadd.f32 %v3765, %v4308
        %v4310 = vpop.f32.mrb[0].mxu0
        %v4311 = vadd.f32 %v3765, %v4310
        %4312 = vmatprep.mubr.bf16.mxu0 %v3960
        %4313 = vmatmul.mubr.bf16.gmra.mrb[0].mxu0 %v3959
        %v4314 = vpop.f32.mrb[0].mxu0
        %v4315 = vadd.f32 %v3770, %v4314
        %v4316 = vpop.f32.mrb[0].mxu0
        %v4317 = vadd.f32 %v3770, %v4316
        %v4318 = vpop.f32.mrb[0].mxu0
        %v4319 = vadd.f32 %v3775, %v4318
        %v4320 = vpop.f32.mrb[0].mxu0
        %v4321 = vadd.f32 %v3775, %v4320
        %4322 = vmatprep.mubr.bf16.mxu0 %v3962
        %4323 = vmatmul.mubr.bf16.gmra.mrb[0].mxu0 %v3961
        %v4324 = vpop.f32.mrb[0].mxu0
        %v4325 = vadd.f32 %v3780, %v4324
        %v4326 = vpop.f32.mrb[0].mxu0
        %v4327 = vadd.f32 %v3780, %v4326
        %v4328 = vpop.f32.mrb[0].mxu0
        %v4329 = vadd.f32 %v3785, %v4328
        %v4330 = vpop.f32.mrb[0].mxu0
        %v4331 = vadd.f32 %v3785, %v4330
        %4332 = vmatprep.mubr.bf16.mxu0 %v3964
        %4333 = vmatmul.mubr.bf16.gmra.mrb[0].mxu0 %v3963
        %v4334 = vpop.f32.mrb[0].mxu0
        %v4335 = vadd.f32 %v3790, %v4334
        %v4336 = vpop.f32.mrb[0].mxu0
        %v4337 = vadd.f32 %v3790, %v4336
        %v4338 = vpop.f32.mrb[0].mxu0
        %v4339 = vadd.f32 %v3795, %v4338
        %v4340 = vpop.f32.mrb[0].mxu0
        %v4341 = vadd.f32 %v3795, %v4340
        %4342 = vmatprep.mubr.bf16.mxu0 %v3966
        %4343 = vmatmul.mubr.bf16.gmra.mrb[0].mxu0 %v3965
        %v4344 = vpop.f32.mrb[0].mxu0
        %v4345 = vadd.f32 %v3800, %v4344
        %v4346 = vpop.f32.mrb[0].mxu0
        %v4347 = vadd.f32 %v3800, %v4346
        %v4348 = vpop.f32.mrb[0].mxu0
        %v4349 = vadd.f32 %v3805, %v4348
        %v4350 = vpop.f32.mrb[0].mxu0
        %v4351 = vadd.f32 %v3805, %v4350
        %4352 = vmatprep.mubr.bf16.mxu0 %v3968
        %4353 = vmatmul.mubr.bf16.gmra.mrb[0].mxu0 %v3967
        %v4354 = vpop.f32.mrb[0].mxu0
        %v4355 = vadd.f32 %v3810, %v4354
        %v4356 = vpop.f32.mrb[0].mxu0
        %v4357 = vadd.f32 %v3810, %v4356
        %v4358 = vpop.f32.mrb[0].mxu0
        %v4359 = vadd.f32 %v3815, %v4358
        %v4360 = vpop.f32.mrb[0].mxu0
        %v4361 = vadd.f32 %v3815, %v4360
        %4362 = vmatprep.mubr.bf16.mxu0 %v3970
        %4363 = vmatmul.mubr.bf16.gmra.mrb[0].mxu0 %v3969
        %v4364 = vpop.f32.mrb[0].mxu0
        %v4365 = vadd.f32 %v3820, %v4364
        %v4366 = vpop.f32.mrb[0].mxu0
        %v4367 = vadd.f32 %v3820, %v4366
        %v4368 = vpop.f32.mrb[0].mxu0
        %v4369 = vadd.f32 %v3825, %v4368
        %v4370 = vpop.f32.mrb[0].mxu0
        %v4371 = vadd.f32 %v3825, %v4370
        %4372 = vmatprep.mubr.bf16.mxu0 %v3972
        %4373 = vmatmul.mubr.bf16.gmra.mrb[0].mxu0 %v3971
        %v4374 = vpop.f32.mrb[0].mxu0
        %v4375 = vadd.f32 %v3830, %v4374
        %v4376 = vpop.f32.mrb[0].mxu0
        %v4377 = vadd.f32 %v3830, %v4376
        %v4378 = vpop.f32.mrb[0].mxu0
        %v4379 = vadd.f32 %v3835, %v4378
        %v4380 = vpop.f32.mrb[0].mxu0
        %v4381 = vadd.f32 %v3835, %v4380
        %4382 = vmatprep.mubr.bf16.mxu0 %v3974
        %4383 = vmatmul.mubr.bf16.gmra.mrb[0].mxu0 %v3973
        %v4384 = vpop.f32.mrb[0].mxu0
        %v4385 = vadd.f32 %v3840, %v4384
        %v4386 = vpop.f32.mrb[0].mxu0
        %v4387 = vadd.f32 %v3840, %v4386
        %v4388 = vpop.f32.mrb[0].mxu0
        %v4389 = vadd.f32 %v3845, %v4388
        %v4390 = vpop.f32.mrb[0].mxu0
        %v4391 = vadd.f32 %v3845, %v4390
        %4392 = vdwg.mxu0
        %vm4393 = vcmp.ge.f32.partialorder %v4042, 0.0
        %vm4394 = vcmp.ge.f32.partialorder %v4044, 0.0
        %vm4395 = vcmp.ge.f32.partialorder %v4235, 0.0
        %vm4396 = vcmp.ge.f32.partialorder %v4237, 0.0
        %vm4397 = vcmp.ge.f32.partialorder %v4046, 0.0
        %vm4398 = vcmp.ge.f32.partialorder %v4048, 0.0
        %vm4399 = vcmp.ge.f32.partialorder %v4239, 0.0
        %vm4400 = vcmp.ge.f32.partialorder %v4241, 0.0
        %vm4401 = vcmp.ge.f32.partialorder %v4052, 0.0
        %vm4402 = vcmp.ge.f32.partialorder %v4054, 0.0
        %vm4403 = vcmp.ge.f32.partialorder %v4245, 0.0
        %vm4404 = vcmp.ge.f32.partialorder %v4247, 0.0
        %vm4405 = vcmp.ge.f32.partialorder %v4056, 0.0
        %vm4406 = vcmp.ge.f32.partialorder %v4058, 0.0
        %vm4407 = vcmp.ge.f32.partialorder %v4249, 0.0
        %vm4408 = vcmp.ge.f32.partialorder %v4251, 0.0
        %vm4409 = vcmp.ge.f32.partialorder %v4062, 0.0
        %vm4410 = vcmp.ge.f32.partialorder %v4064, 0.0
        %vm4411 = vcmp.ge.f32.partialorder %v4255, 0.0
        %vm4412 = vcmp.ge.f32.partialorder %v4257, 0.0
        %vm4413 = vcmp.ge.f32.partialorder %v4066, 0.0
        %vm4414 = vcmp.ge.f32.partialorder %v4068, 0.0
        %vm4415 = vcmp.ge.f32.partialorder %v4259, 0.0
        %vm4416 = vcmp.ge.f32.partialorder %v4261, 0.0
        %vm4417 = vcmp.ge.f32.partialorder %v4072, 0.0
        %vm4418 = vcmp.ge.f32.partialorder %v4074, 0.0
        %vm4419 = vcmp.ge.f32.partialorder %v4265, 0.0
        %vm4420 = vcmp.ge.f32.partialorder %v4267, 0.0
        %vm4421 = vcmp.ge.f32.partialorder %v4076, 0.0
        %vm4422 = vcmp.ge.f32.partialorder %v4078, 0.0
        %vm4423 = vcmp.ge.f32.partialorder %v4269, 0.0
        %vm4424 = vcmp.ge.f32.partialorder %v4271, 0.0
        %vm4425 = vcmp.ge.f32.partialorder %v4082, 0.0
        %vm4426 = vcmp.ge.f32.partialorder %v4084, 0.0
        %vm4427 = vcmp.ge.f32.partialorder %v4275, 0.0
        %vm4428 = vcmp.ge.f32.partialorder %v4277, 0.0
        %vm4429 = vcmp.ge.f32.partialorder %v4086, 0.0
        %vm4430 = vcmp.ge.f32.partialorder %v4088, 0.0
        %vm4431 = vcmp.ge.f32.partialorder %v4279, 0.0
        %vm4432 = vcmp.ge.f32.partialorder %v4281, 0.0
        %vm4433 = vcmp.ge.f32.partialorder %v4092, 0.0
        %vm4434 = vcmp.ge.f32.partialorder %v4094, 0.0
        %vm4435 = vcmp.ge.f32.partialorder %v4285, 0.0
        %vm4436 = vcmp.ge.f32.partialorder %v4287, 0.0
        %vm4437 = vcmp.ge.f32.partialorder %v4096, 0.0
        %vm4438 = vcmp.ge.f32.partialorder %v4098, 0.0
        %vm4439 = vcmp.ge.f32.partialorder %v4289, 0.0
        %vm4440 = vcmp.ge.f32.partialorder %v4291, 0.0
        %vm4441 = vcmp.ge.f32.partialorder %v4102, 0.0
        %vm4442 = vcmp.ge.f32.partialorder %v4104, 0.0
        %vm4443 = vcmp.ge.f32.partialorder %v4295, 0.0
        %vm4444 = vcmp.ge.f32.partialorder %v4297, 0.0
        %vm4445 = vcmp.ge.f32.partialorder %v4106, 0.0
        %vm4446 = vcmp.ge.f32.partialorder %v4108, 0.0
        %vm4447 = vcmp.ge.f32.partialorder %v4299, 0.0
        %vm4448 = vcmp.ge.f32.partialorder %v4301, 0.0
        %vm4449 = vcmp.ge.f32.partialorder %v4112, 0.0
        %vm4450 = vcmp.ge.f32.partialorder %v4114, 0.0
        %vm4451 = vcmp.ge.f32.partialorder %v4305, 0.0
        %vm4452 = vcmp.ge.f32.partialorder %v4307, 0.0
        %vm4453 = vcmp.ge.f32.partialorder %v4116, 0.0
        %vm4454 = vcmp.ge.f32.partialorder %v4118, 0.0
        %vm4455 = vcmp.ge.f32.partialorder %v4309, 0.0
        %vm4456 = vcmp.ge.f32.partialorder %v4311, 0.0
        %vm4457 = vcmp.ge.f32.partialorder %v4122, 0.0
        %vm4458 = vcmp.ge.f32.partialorder %v4124, 0.0
        %vm4459 = vcmp.ge.f32.partialorder %v4315, 0.0
        %vm4460 = vcmp.ge.f32.partialorder %v4317, 0.0
        %vm4461 = vcmp.ge.f32.partialorder %v4126, 0.0
        %vm4462 = vcmp.ge.f32.partialorder %v4128, 0.0
        %vm4463 = vcmp.ge.f32.partialorder %v4319, 0.0
        %vm4464 = vcmp.ge.f32.partialorder %v4321, 0.0
        %vm4465 = vcmp.ge.f32.partialorder %v4132, 0.0
        %vm4466 = vcmp.ge.f32.partialorder %v4134, 0.0
        %vm4467 = vcmp.ge.f32.partialorder %v4325, 0.0
        %vm4468 = vcmp.ge.f32.partialorder %v4327, 0.0
        %vm4469 = vcmp.ge.f32.partialorder %v4136, 0.0
        %vm4470 = vcmp.ge.f32.partialorder %v4138, 0.0
        %vm4471 = vcmp.ge.f32.partialorder %v4329, 0.0
        %vm4472 = vcmp.ge.f32.partialorder %v4331, 0.0
        %vm4473 = vcmp.ge.f32.partialorder %v4142, 0.0
        %vm4474 = vcmp.ge.f32.partialorder %v4144, 0.0
        %vm4475 = vcmp.ge.f32.partialorder %v4335, 0.0
        %vm4476 = vcmp.ge.f32.partialorder %v4337, 0.0
        %vm4477 = vcmp.ge.f32.partialorder %v4146, 0.0
        %vm4478 = vcmp.ge.f32.partialorder %v4148, 0.0
        %vm4479 = vcmp.ge.f32.partialorder %v4339, 0.0
        %vm4480 = vcmp.ge.f32.partialorder %v4341, 0.0
        %vm4481 = vcmp.ge.f32.partialorder %v4152, 0.0
        %vm4482 = vcmp.ge.f32.partialorder %v4154, 0.0
        %vm4483 = vcmp.ge.f32.partialorder %v4345, 0.0
        %vm4484 = vcmp.ge.f32.partialorder %v4347, 0.0
        %vm4485 = vcmp.ge.f32.partialorder %v4156, 0.0
        %vm4486 = vcmp.ge.f32.partialorder %v4158, 0.0
        %vm4487 = vcmp.ge.f32.partialorder %v4349, 0.0
        %vm4488 = vcmp.ge.f32.partialorder %v4351, 0.0
        %vm4489 = vcmp.ge.f32.partialorder %v4162, 0.0
        %vm4490 = vcmp.ge.f32.partialorder %v4164, 0.0
        %vm4491 = vcmp.ge.f32.partialorder %v4355, 0.0
        %vm4492 = vcmp.ge.f32.partialorder %v4357, 0.0
        %vm4493 = vcmp.ge.f32.partialorder %v4166, 0.0
        %vm4494 = vcmp.ge.f32.partialorder %v4168, 0.0
        %vm4495 = vcmp.ge.f32.partialorder %v4359, 0.0
        %vm4496 = vcmp.ge.f32.partialorder %v4361, 0.0
        %vm4497 = vcmp.ge.f32.partialorder %v4172, 0.0
        %vm4498 = vcmp.ge.f32.partialorder %v4174, 0.0
        %vm4499 = vcmp.ge.f32.partialorder %v4365, 0.0
        %vm4500 = vcmp.ge.f32.partialorder %v4367, 0.0
        %vm4501 = vcmp.ge.f32.partialorder %v4176, 0.0
        %vm4502 = vcmp.ge.f32.partialorder %v4178, 0.0
        %vm4503 = vcmp.ge.f32.partialorder %v4369, 0.0
        %vm4504 = vcmp.ge.f32.partialorder %v4371, 0.0
        %vm4505 = vcmp.ge.f32.partialorder %v4182, 0.0
        %vm4506 = vcmp.ge.f32.partialorder %v4184, 0.0
        %vm4507 = vcmp.ge.f32.partialorder %v4375, 0.0
        %vm4508 = vcmp.ge.f32.partialorder %v4377, 0.0
        %vm4509 = vcmp.ge.f32.partialorder %v4186, 0.0
        %vm4510 = vcmp.ge.f32.partialorder %v4188, 0.0
        %vm4511 = vcmp.ge.f32.partialorder %v4379, 0.0
        %vm4512 = vcmp.ge.f32.partialorder %v4381, 0.0
        %vm4513 = vcmp.ge.f32.partialorder %v4192, 0.0
        %vm4514 = vcmp.ge.f32.partialorder %v4194, 0.0
        %vm4515 = vcmp.ge.f32.partialorder %v4385, 0.0
        %vm4516 = vcmp.ge.f32.partialorder %v4387, 0.0
        %vm4517 = vcmp.ge.f32.partialorder %v4196, 0.0
        %vm4518 = vcmp.ge.f32.partialorder %v4198, 0.0
        %vm4519 = vcmp.ge.f32.partialorder %v4389, 0.0
        %vm4520 = vcmp.ge.f32.partialorder %v4391, 0.0
        %v4521 = vstv %s433
        %v4522 = vmul.f32 %v4521, %v4042
        %v4523 = vmul.f32 %v4521, %v4044
        %v4524 = vmul.f32 %v4521, %v4235
        %v4525 = vmul.f32 %v4521, %v4237
        %v4526 = vmul.f32 %v4521, %v4046
        %v4527 = vmul.f32 %v4521, %v4048
        %v4528 = vmul.f32 %v4521, %v4239
        %v4529 = vmul.f32 %v4521, %v4241
        %v4530 = vmul.f32 %v4521, %v4052
        %v4531 = vmul.f32 %v4521, %v4054
        %v4532 = vmul.f32 %v4521, %v4245
        %v4533 = vmul.f32 %v4521, %v4247
        %v4534 = vmul.f32 %v4521, %v4056
        %v4535 = vmul.f32 %v4521, %v4058
        %v4536 = vmul.f32 %v4521, %v4249
        %v4537 = vmul.f32 %v4521, %v4251
        %v4538 = vmul.f32 %v4521, %v4062
        %v4539 = vmul.f32 %v4521, %v4064
        %v4540 = vmul.f32 %v4521, %v4255
        %v4541 = vmul.f32 %v4521, %v4257
        %v4542 = vmul.f32 %v4521, %v4066
        %v4543 = vmul.f32 %v4521, %v4068
        %v4544 = vmul.f32 %v4521, %v4259
        %v4545 = vmul.f32 %v4521, %v4261
        %v4546 = vmul.f32 %v4521, %v4072
        %v4547 = vmul.f32 %v4521, %v4074
        %v4548 = vmul.f32 %v4521, %v4265
        %v4549 = vmul.f32 %v4521, %v4267
        %v4550 = vmul.f32 %v4521, %v4076
        %v4551 = vmul.f32 %v4521, %v4078
        %v4552 = vmul.f32 %v4521, %v4269
        %v4553 = vmul.f32 %v4521, %v4271
        %v4554 = vmul.f32 %v4521, %v4082
        %v4555 = vmul.f32 %v4521, %v4084
        %v4556 = vmul.f32 %v4521, %v4275
        %v4557 = vmul.f32 %v4521, %v4277
        %v4558 = vmul.f32 %v4521, %v4086
        %v4559 = vmul.f32 %v4521, %v4088
        %v4560 = vmul.f32 %v4521, %v4279
        %v4561 = vmul.f32 %v4521, %v4281
        %v4562 = vmul.f32 %v4521, %v4092
        %v4563 = vmul.f32 %v4521, %v4094
        %v4564 = vmul.f32 %v4521, %v4285
        %v4565 = vmul.f32 %v4521, %v4287
        %v4566 = vmul.f32 %v4521, %v4096
        %v4567 = vmul.f32 %v4521, %v4098
        %v4568 = vmul.f32 %v4521, %v4289
        %v4569 = vmul.f32 %v4521, %v4291
        %v4570 = vmul.f32 %v4521, %v4102
        %v4571 = vmul.f32 %v4521, %v4104
        %v4572 = vmul.f32 %v4521, %v4295
        %v4573 = vmul.f32 %v4521, %v4297
        %v4574 = vmul.f32 %v4521, %v4106
        %v4575 = vmul.f32 %v4521, %v4108
        %v4576 = vmul.f32 %v4521, %v4299
        %v4577 = vmul.f32 %v4521, %v4301
        %v4578 = vmul.f32 %v4521, %v4112
        %v4579 = vmul.f32 %v4521, %v4114
        %v4580 = vmul.f32 %v4521, %v4305
        %v4581 = vmul.f32 %v4521, %v4307
        %v4582 = vmul.f32 %v4521, %v4116
        %v4583 = vmul.f32 %v4521, %v4118
        %v4584 = vmul.f32 %v4521, %v4309
        %v4585 = vmul.f32 %v4521, %v4311
        %v4586 = vmul.f32 %v4521, %v4122
        %v4587 = vmul.f32 %v4521, %v4124
        %v4588 = vmul.f32 %v4521, %v4315
        %v4589 = vmul.f32 %v4521, %v4317
        %v4590 = vmul.f32 %v4521, %v4126
        %v4591 = vmul.f32 %v4521, %v4128
        %v4592 = vmul.f32 %v4521, %v4319
        %v4593 = vmul.f32 %v4521, %v4321
        %v4594 = vmul.f32 %v4521, %v4132
        %v4595 = vmul.f32 %v4521, %v4134
        %v4596 = vmul.f32 %v4521, %v4325
        %v4597 = vmul.f32 %v4521, %v4327
        %v4598 = vmul.f32 %v4521, %v4136
        %v4599 = vmul.f32 %v4521, %v4138
        %v4600 = vmul.f32 %v4521, %v4329
        %v4601 = vmul.f32 %v4521, %v4331
        %v4602 = vmul.f32 %v4521, %v4142
        %v4603 = vmul.f32 %v4521, %v4144
        %v4604 = vmul.f32 %v4521, %v4335
        %v4605 = vmul.f32 %v4521, %v4337
        %v4606 = vmul.f32 %v4521, %v4146
        %v4607 = vmul.f32 %v4521, %v4148
        %v4608 = vmul.f32 %v4521, %v4339
        %v4609 = vmul.f32 %v4521, %v4341
        %v4610 = vmul.f32 %v4521, %v4152
        %v4611 = vmul.f32 %v4521, %v4154
        %v4612 = vmul.f32 %v4521, %v4345
        %v4613 = vmul.f32 %v4521, %v4347
        %v4614 = vmul.f32 %v4521, %v4156
        %v4615 = vmul.f32 %v4521, %v4158
        %v4616 = vmul.f32 %v4521, %v4349
        %v4617 = vmul.f32 %v4521, %v4351
        %v4618 = vmul.f32 %v4521, %v4162
        %v4619 = vmul.f32 %v4521, %v4164
        %v4620 = vmul.f32 %v4521, %v4355
        %v4621 = vmul.f32 %v4521, %v4357
        %v4622 = vmul.f32 %v4521, %v4166
        %v4623 = vmul.f32 %v4521, %v4168
        %v4624 = vmul.f32 %v4521, %v4359
        %v4625 = vmul.f32 %v4521, %v4361
        %v4626 = vmul.f32 %v4521, %v4172
        %v4627 = vmul.f32 %v4521, %v4174
        %v4628 = vmul.f32 %v4521, %v4365
        %v4629 = vmul.f32 %v4521, %v4367
        %v4630 = vmul.f32 %v4521, %v4176
        %v4631 = vmul.f32 %v4521, %v4178
        %v4632 = vmul.f32 %v4521, %v4369
        %v4633 = vmul.f32 %v4521, %v4371
        %v4634 = vmul.f32 %v4521, %v4182
        %v4635 = vmul.f32 %v4521, %v4184
        %v4636 = vmul.f32 %v4521, %v4375
        %v4637 = vmul.f32 %v4521, %v4377
        %v4638 = vmul.f32 %v4521, %v4186
        %v4639 = vmul.f32 %v4521, %v4188
        %v4640 = vmul.f32 %v4521, %v4379
        %v4641 = vmul.f32 %v4521, %v4381
        %v4642 = vmul.f32 %v4521, %v4192
        %v4643 = vmul.f32 %v4521, %v4194
        %v4644 = vmul.f32 %v4521, %v4385
        %v4645 = vmul.f32 %v4521, %v4387
        %v4646 = vmul.f32 %v4521, %v4196
        %v4647 = vmul.f32 %v4521, %v4198
        %v4648 = vmul.f32 %v4521, %v4389
        %v4649 = vmul.f32 %v4521, %v4391
        %v4650 = vsel %vm4393, %v4042, %v4522
        %v4651 = vsel %vm4394, %v4044, %v4523
        %v4652 = vsel %vm4395, %v4235, %v4524
        %v4653 = vsel %vm4396, %v4237, %v4525
        %v4654 = vsel %vm4397, %v4046, %v4526
        %v4655 = vsel %vm4398, %v4048, %v4527
        %v4656 = vsel %vm4399, %v4239, %v4528
        %v4657 = vsel %vm4400, %v4241, %v4529
        %v4658 = vsel %vm4401, %v4052, %v4530
        %v4659 = vsel %vm4402, %v4054, %v4531
        %v4660 = vsel %vm4403, %v4245, %v4532
        %v4661 = vsel %vm4404, %v4247, %v4533
        %v4662 = vsel %vm4405, %v4056, %v4534
        %v4663 = vsel %vm4406, %v4058, %v4535
        %v4664 = vsel %vm4407, %v4249, %v4536
        %v4665 = vsel %vm4408, %v4251, %v4537
        %v4666 = vsel %vm4409, %v4062, %v4538
        %v4667 = vsel %vm4410, %v4064, %v4539
        %v4668 = vsel %vm4411, %v4255, %v4540
        %v4669 = vsel %vm4412, %v4257, %v4541
        %v4670 = vsel %vm4413, %v4066, %v4542
        %v4671 = vsel %vm4414, %v4068, %v4543
        %v4672 = vsel %vm4415, %v4259, %v4544
        %v4673 = vsel %vm4416, %v4261, %v4545
        %v4674 = vsel %vm4417, %v4072, %v4546
        %v4675 = vsel %vm4418, %v4074, %v4547
        %v4676 = vsel %vm4419, %v4265, %v4548
        %v4677 = vsel %vm4420, %v4267, %v4549
        %v4678 = vsel %vm4421, %v4076, %v4550
        %v4679 = vsel %vm4422, %v4078, %v4551
        %v4680 = vsel %vm4423, %v4269, %v4552
        %v4681 = vsel %vm4424, %v4271, %v4553
        %v4682 = vsel %vm4425, %v4082, %v4554
        %v4683 = vsel %vm4426, %v4084, %v4555
        %v4684 = vsel %vm4427, %v4275, %v4556
        %v4685 = vsel %vm4428, %v4277, %v4557
        %v4686 = vsel %vm4429, %v4086, %v4558
        %v4687 = vsel %vm4430, %v4088, %v4559
        %v4688 = vsel %vm4431, %v4279, %v4560
        %v4689 = vsel %vm4432, %v4281, %v4561
        %v4690 = vsel %vm4433, %v4092, %v4562
        %v4691 = vsel %vm4434, %v4094, %v4563
        %v4692 = vsel %vm4435, %v4285, %v4564
        %v4693 = vsel %vm4436, %v4287, %v4565
        %v4694 = vsel %vm4437, %v4096, %v4566
        %v4695 = vsel %vm4438, %v4098, %v4567
        %v4696 = vsel %vm4439, %v4289, %v4568
        %v4697 = vsel %vm4440, %v4291, %v4569
        %v4698 = vsel %vm4441, %v4102, %v4570
        %v4699 = vsel %vm4442, %v4104, %v4571
        %v4700 = vsel %vm4443, %v4295, %v4572
        %v4701 = vsel %vm4444, %v4297, %v4573
        %v4702 = vsel %vm4445, %v4106, %v4574
        %v4703 = vsel %vm4446, %v4108, %v4575
        %v4704 = vsel %vm4447, %v4299, %v4576
        %v4705 = vsel %vm4448, %v4301, %v4577
        %v4706 = vsel %vm4449, %v4112, %v4578
        %v4707 = vsel %vm4450, %v4114, %v4579
        %v4708 = vsel %vm4451, %v4305, %v4580
        %v4709 = vsel %vm4452, %v4307, %v4581
        %v4710 = vsel %vm4453, %v4116, %v4582
        %v4711 = vsel %vm4454, %v4118, %v4583
        %v4712 = vsel %vm4455, %v4309, %v4584
        %v4713 = vsel %vm4456, %v4311, %v4585
        %v4714 = vsel %vm4457, %v4122, %v4586
        %v4715 = vsel %vm4458, %v4124, %v4587
        %v4716 = vsel %vm4459, %v4315, %v4588
        %v4717 = vsel %vm4460, %v4317, %v4589
        %v4718 = vsel %vm4461, %v4126, %v4590
        %v4719 = vsel %vm4462, %v4128, %v4591
        %v4720 = vsel %vm4463, %v4319, %v4592
        %v4721 = vsel %vm4464, %v4321, %v4593
        %v4722 = vsel %vm4465, %v4132, %v4594
        %v4723 = vsel %vm4466, %v4134, %v4595
        %v4724 = vsel %vm4467, %v4325, %v4596
        %v4725 = vsel %vm4468, %v4327, %v4597
        %v4726 = vsel %vm4469, %v4136, %v4598
        %v4727 = vsel %vm4470, %v4138, %v4599
        %v4728 = vsel %vm4471, %v4329, %v4600
        %v4729 = vsel %vm4472, %v4331, %v4601
        %v4730 = vsel %vm4473, %v4142, %v4602
        %v4731 = vsel %vm4474, %v4144, %v4603
        %v4732 = vsel %vm4475, %v4335, %v4604
        %v4733 = vsel %vm4476, %v4337, %v4605
        %v4734 = vsel %vm4477, %v4146, %v4606
        %v4735 = vsel %vm4478, %v4148, %v4607
        %v4736 = vsel %vm4479, %v4339, %v4608
        %v4737 = vsel %vm4480, %v4341, %v4609
        %v4738 = vsel %vm4481, %v4152, %v4610
        %v4739 = vsel %vm4482, %v4154, %v4611
        %v4740 = vsel %vm4483, %v4345, %v4612
        %v4741 = vsel %vm4484, %v4347, %v4613
        %v4742 = vsel %vm4485, %v4156, %v4614
        %v4743 = vsel %vm4486, %v4158, %v4615
        %v4744 = vsel %vm4487, %v4349, %v4616
        %v4745 = vsel %vm4488, %v4351, %v4617
        %v4746 = vsel %vm4489, %v4162, %v4618
        %v4747 = vsel %vm4490, %v4164, %v4619
        %v4748 = vsel %vm4491, %v4355, %v4620
        %v4749 = vsel %vm4492, %v4357, %v4621
        %v4750 = vsel %vm4493, %v4166, %v4622
        %v4751 = vsel %vm4494, %v4168, %v4623
        %v4752 = vsel %vm4495, %v4359, %v4624
        %v4753 = vsel %vm4496, %v4361, %v4625
        %v4754 = vsel %vm4497, %v4172, %v4626
        %v4755 = vsel %vm4498, %v4174, %v4627
        %v4756 = vsel %vm4499, %v4365, %v4628
        %v4757 = vsel %vm4500, %v4367, %v4629
        %v4758 = vsel %vm4501, %v4176, %v4630
        %v4759 = vsel %vm4502, %v4178, %v4631
        %v4760 = vsel %vm4503, %v4369, %v4632
        %v4761 = vsel %vm4504, %v4371, %v4633
        %v4762 = vsel %vm4505, %v4182, %v4634
        %v4763 = vsel %vm4506, %v4184, %v4635
        %v4764 = vsel %vm4507, %v4375, %v4636
        %v4765 = vsel %vm4508, %v4377, %v4637
        %v4766 = vsel %vm4509, %v4186, %v4638
        %v4767 = vsel %vm4510, %v4188, %v4639
        %v4768 = vsel %vm4511, %v4379, %v4640
        %v4769 = vsel %vm4512, %v4381, %v4641
        %v4770 = vsel %vm4513, %v4192, %v4642
        %v4771 = vsel %vm4514, %v4194, %v4643
        %v4772 = vsel %vm4515, %v4385, %v4644
        %v4773 = vsel %vm4516, %v4387, %v4645
        %v4774 = vsel %vm4517, %v4196, %v4646
        %v4775 = vsel %vm4518, %v4198, %v4647
        %v4776 = vsel %vm4519, %v4389, %v4648
        %v4777 = vsel %vm4520, %v4391, %v4649
        %v4778 = vpack.c.bf16 %v4654, %v4650
        %v4779 = vpack.c.bf16 %v4655, %v4651
        %v4780 = vpack.c.bf16 %v4656, %v4652
        %v4781 = vpack.c.bf16 %v4657, %v4653
        %v4782 = vpack.c.bf16 %v4662, %v4658
        %v4783 = vpack.c.bf16 %v4663, %v4659
        %v4784 = vpack.c.bf16 %v4664, %v4660
        %v4785 = vpack.c.bf16 %v4665, %v4661
        %v4786 = vpack.c.bf16 %v4670, %v4666
        %v4787 = vpack.c.bf16 %v4671, %v4667
        %v4788 = vpack.c.bf16 %v4672, %v4668
        %v4789 = vpack.c.bf16 %v4673, %v4669
        %v4790 = vpack.c.bf16 %v4678, %v4674
        %v4791 = vpack.c.bf16 %v4679, %v4675
        %v4792 = vpack.c.bf16 %v4680, %v4676
        %v4793 = vpack.c.bf16 %v4681, %v4677
        %v4794 = vpack.c.bf16 %v4686, %v4682
        %v4795 = vpack.c.bf16 %v4687, %v4683
        %v4796 = vpack.c.bf16 %v4688, %v4684
        %v4797 = vpack.c.bf16 %v4689, %v4685
        %v4798 = vpack.c.bf16 %v4694, %v4690
        %v4799 = vpack.c.bf16 %v4695, %v4691
        %v4800 = vpack.c.bf16 %v4696, %v4692
        %v4801 = vpack.c.bf16 %v4697, %v4693
        %v4802 = vpack.c.bf16 %v4702, %v4698
        %v4803 = vpack.c.bf16 %v4703, %v4699
        %v4804 = vpack.c.bf16 %v4704, %v4700
        %v4805 = vpack.c.bf16 %v4705, %v4701
        %v4806 = vpack.c.bf16 %v4710, %v4706
        %v4807 = vpack.c.bf16 %v4711, %v4707
        %v4808 = vpack.c.bf16 %v4712, %v4708
        %v4809 = vpack.c.bf16 %v4713, %v4709
        %v4810 = vpack.c.bf16 %v4718, %v4714
        %v4811 = vpack.c.bf16 %v4719, %v4715
        %v4812 = vpack.c.bf16 %v4720, %v4716
        %v4813 = vpack.c.bf16 %v4721, %v4717
        %v4814 = vpack.c.bf16 %v4726, %v4722
        %v4815 = vpack.c.bf16 %v4727, %v4723
        %v4816 = vpack.c.bf16 %v4728, %v4724
        %v4817 = vpack.c.bf16 %v4729, %v4725
        %v4818 = vpack.c.bf16 %v4734, %v4730
        %v4819 = vpack.c.bf16 %v4735, %v4731
        %v4820 = vpack.c.bf16 %v4736, %v4732
        %v4821 = vpack.c.bf16 %v4737, %v4733
        %v4822 = vpack.c.bf16 %v4742, %v4738
        %v4823 = vpack.c.bf16 %v4743, %v4739
        %v4824 = vpack.c.bf16 %v4744, %v4740
        %v4825 = vpack.c.bf16 %v4745, %v4741
        %v4826 = vpack.c.bf16 %v4750, %v4746
        %v4827 = vpack.c.bf16 %v4751, %v4747
        %v4828 = vpack.c.bf16 %v4752, %v4748
        %v4829 = vpack.c.bf16 %v4753, %v4749
        %v4830 = vpack.c.bf16 %v4758, %v4754
        %v4831 = vpack.c.bf16 %v4759, %v4755
        %v4832 = vpack.c.bf16 %v4760, %v4756
        %v4833 = vpack.c.bf16 %v4761, %v4757
        %v4834 = vpack.c.bf16 %v4766, %v4762
        %v4835 = vpack.c.bf16 %v4767, %v4763
        %v4836 = vpack.c.bf16 %v4768, %v4764
        %v4837 = vpack.c.bf16 %v4769, %v4765
        %v4838 = vpack.c.bf16 %v4774, %v4770
        %v4839 = vpack.c.bf16 %v4775, %v4771
        %v4840 = vpack.c.bf16 %v4776, %v4772
        %v4841 = vpack.c.bf16 %v4777, %v4773
        %v4842 = vld [vmem:[%s8] sm:$0xff]
        %v4843 = vld [vmem:[%s8 + $0x8] sm:$0xff]
        %v4844 = vld [vmem:[%s8 + $0x10] sm:$0xff]
        %v4845 = vld [vmem:[%s8 + $0x18] sm:$0xff]
        %v4846 = vld [vmem:[%s8 + $0x20] sm:$0xff]
        %v4847 = vld [vmem:[%s8 + $0x28] sm:$0xff]
        %v4848 = vld [vmem:[%s8 + $0x30] sm:$0xff]
        %v4849 = vld [vmem:[%s8 + $0x38] sm:$0xff]
        %v4850 = vld [vmem:[%s8 + $0x40] sm:$0xff]
        %v4851 = vld [vmem:[%s8 + $0x48] sm:$0xff]
        %v4852 = vld [vmem:[%s8 + $0x50] sm:$0xff]
        %v4853 = vld [vmem:[%s8 + $0x58] sm:$0xff]
        %v4854 = vld [vmem:[%s8 + $0x60] sm:$0xff]
        %v4855 = vld [vmem:[%s8 + $0x68] sm:$0xff]
        %v4856 = vld [vmem:[%s8 + $0x70] sm:$0xff]
        %v4857 = vld [vmem:[%s8 + $0x78] sm:$0xff]
        %v4858 = vld [vmem:[%s8 + $0x80] sm:$0xff]
        %v4859 = vld [vmem:[%s8 + $0x88] sm:$0xff]
        %v4860 = vld [vmem:[%s8 + $0x90] sm:$0xff]
        %v4861 = vld [vmem:[%s8 + $0x98] sm:$0xff]
        %v4862 = vld [vmem:[%s8 + $0xa0] sm:$0xff]
        %v4863 = vld [vmem:[%s8 + $0xa8] sm:$0xff]
        %v4864 = vld [vmem:[%s8 + $0xb0] sm:$0xff]
        %v4865 = vld [vmem:[%s8 + $0xb8] sm:$0xff]
        %v4866 = vld [vmem:[%s8 + $0xc0] sm:$0xff]
        %v4867 = vld [vmem:[%s8 + $0xc8] sm:$0xff]
        %v4868 = vld [vmem:[%s8 + $0xd0] sm:$0xff]
        %v4869 = vld [vmem:[%s8 + $0xd8] sm:$0xff]
        %v4870 = vld [vmem:[%s8 + $0xe0] sm:$0xff]
        %v4871 = vld [vmem:[%s8 + $0xe8] sm:$0xff]
        %v4872 = vld [vmem:[%s8 + $0xf0] sm:$0xff]
        %v4873 = vld [vmem:[%s8 + $0xf8] sm:$0xff]
        %v4874 = vld [vmem:[%s9] sm:$0xff]
        %v4875 = vld [vmem:[%s9 + $0x8] sm:$0xff]
        %v4876 = vld [vmem:[%s9 + $0x10] sm:$0xff]
        %v4877 = vld [vmem:[%s9 + $0x18] sm:$0xff]
        %v4878 = vld [vmem:[%s9 + $0x20] sm:$0xff]
        %v4879 = vld [vmem:[%s9 + $0x28] sm:$0xff]
        %v4880 = vld [vmem:[%s9 + $0x30] sm:$0xff]
        %v4881 = vld [vmem:[%s9 + $0x38] sm:$0xff]
        %v4882 = vld [vmem:[%s9 + $0x40] sm:$0xff]
        %v4883 = vld [vmem:[%s9 + $0x48] sm:$0xff]
        %v4884 = vld [vmem:[%s9 + $0x50] sm:$0xff]
        %v4885 = vld [vmem:[%s9 + $0x58] sm:$0xff]
        %v4886 = vld [vmem:[%s9 + $0x60] sm:$0xff]
        %v4887 = vld [vmem:[%s9 + $0x68] sm:$0xff]
        %v4888 = vld [vmem:[%s9 + $0x70] sm:$0xff]
        %v4889 = vld [vmem:[%s9 + $0x78] sm:$0xff]
        %v4890 = vld [vmem:[%s9 + $0x80] sm:$0xff]
        %v4891 = vld [vmem:[%s9 + $0x88] sm:$0xff]
        %v4892 = vld [vmem:[%s9 + $0x90] sm:$0xff]
        %v4893 = vld [vmem:[%s9 + $0x98] sm:$0xff]
        %v4894 = vld [vmem:[%s9 + $0xa0] sm:$0xff]
        %v4895 = vld [vmem:[%s9 + $0xa8] sm:$0xff]
        %v4896 = vld [vmem:[%s9 + $0xb0] sm:$0xff]
        %v4897 = vld [vmem:[%s9 + $0xb8] sm:$0xff]
        %v4898 = vld [vmem:[%s9 + $0xc0] sm:$0xff]
        %v4899 = vld [vmem:[%s9 + $0xc8] sm:$0xff]
        %v4900 = vld [vmem:[%s9 + $0xd0] sm:$0xff]
        %v4901 = vld [vmem:[%s9 + $0xd8] sm:$0xff]
        %v4902 = vld [vmem:[%s9 + $0xe0] sm:$0xff]
        %v4903 = vld [vmem:[%s9 + $0xe8] sm:$0xff]
        %v4904 = vld [vmem:[%s9 + $0xf0] sm:$0xff]
        %v4905 = vld [vmem:[%s9 + $0xf8] sm:$0xff]
        %4907 = vset.pattern.permute.xlu0 0
        %4908 = vperm.xlu0 %4907, %v4874
        %v4909 = vpop.permute.xlu0 %4908
        %4912 = vset.pattern.permute.xlu0 0
        %4913 = vperm.xlu0 %4912, %v4875
        %v4914 = vpop.permute.xlu0 %4913
        %4917 = vset.pattern.permute.xlu0 0
        %4918 = vperm.xlu0 %4917, %v4876
        %v4919 = vpop.permute.xlu0 %4918
        %4922 = vset.pattern.permute.xlu0 0
        %4923 = vperm.xlu0 %4922, %v4877
        %v4924 = vpop.permute.xlu0 %4923
        %4927 = vset.pattern.permute.xlu0 0
        %4928 = vperm.xlu0 %4927, %v4878
        %v4929 = vpop.permute.xlu0 %4928
        %4932 = vset.pattern.permute.xlu0 0
        %4933 = vperm.xlu0 %4932, %v4879
        %v4934 = vpop.permute.xlu0 %4933
        %4937 = vset.pattern.permute.xlu0 0
        %4938 = vperm.xlu0 %4937, %v4880
        %v4939 = vpop.permute.xlu0 %4938
        %4942 = vset.pattern.permute.xlu0 0
        %4943 = vperm.xlu0 %4942, %v4881
        %v4944 = vpop.permute.xlu0 %4943
        %4947 = vset.pattern.permute.xlu0 0
        %4948 = vperm.xlu0 %4947, %v4882
        %v4949 = vpop.permute.xlu0 %4948
        %4952 = vset.pattern.permute.xlu0 0
        %4953 = vperm.xlu0 %4952, %v4883
        %v4954 = vpop.permute.xlu0 %4953
        %4957 = vset.pattern.permute.xlu0 0
        %4958 = vperm.xlu0 %4957, %v4884
        %v4959 = vpop.permute.xlu0 %4958
        %4962 = vset.pattern.permute.xlu0 0
        %4963 = vperm.xlu0 %4962, %v4885
        %v4964 = vpop.permute.xlu0 %4963
        %4967 = vset.pattern.permute.xlu0 0
        %4968 = vperm.xlu0 %4967, %v4886
        %v4969 = vpop.permute.xlu0 %4968
        %4972 = vset.pattern.permute.xlu0 0
        %4973 = vperm.xlu0 %4972, %v4887
        %v4974 = vpop.permute.xlu0 %4973
        %4977 = vset.pattern.permute.xlu0 0
        %4978 = vperm.xlu0 %4977, %v4888
        %v4979 = vpop.permute.xlu0 %4978
        %4982 = vset.pattern.permute.xlu0 0
        %4983 = vperm.xlu0 %4982, %v4889
        %v4984 = vpop.permute.xlu0 %4983
        %4987 = vset.pattern.permute.xlu0 0
        %4988 = vperm.xlu0 %4987, %v4890
        %v4989 = vpop.permute.xlu0 %4988
        %4992 = vset.pattern.permute.xlu0 0
        %4993 = vperm.xlu0 %4992, %v4891
        %v4994 = vpop.permute.xlu0 %4993
        %4997 = vset.pattern.permute.xlu0 0
        %4998 = vperm.xlu0 %4997, %v4892
        %v4999 = vpop.permute.xlu0 %4998
        %5002 = vset.pattern.permute.xlu0 0
        %5003 = vperm.xlu0 %5002, %v4893
        %v5004 = vpop.permute.xlu0 %5003
        %5007 = vset.pattern.permute.xlu0 0
        %5008 = vperm.xlu0 %5007, %v4894
        %v5009 = vpop.permute.xlu0 %5008
        %5012 = vset.pattern.permute.xlu0 0
        %5013 = vperm.xlu0 %5012, %v4895
        %v5014 = vpop.permute.xlu0 %5013
        %5017 = vset.pattern.permute.xlu0 0
        %5018 = vperm.xlu0 %5017, %v4896
        %v5019 = vpop.permute.xlu0 %5018
        %5022 = vset.pattern.permute.xlu0 0
        %5023 = vperm.xlu0 %5022, %v4897
        %v5024 = vpop.permute.xlu0 %5023
        %5027 = vset.pattern.permute.xlu0 0
        %5028 = vperm.xlu0 %5027, %v4898
        %v5029 = vpop.permute.xlu0 %5028
        %5032 = vset.pattern.permute.xlu0 0
        %5033 = vperm.xlu0 %5032, %v4899
        %v5034 = vpop.permute.xlu0 %5033
        %5037 = vset.pattern.permute.xlu0 0
        %5038 = vperm.xlu0 %5037, %v4900
        %v5039 = vpop.permute.xlu0 %5038
        %5042 = vset.pattern.permute.xlu0 0
        %5043 = vperm.xlu0 %5042, %v4901
        %v5044 = vpop.permute.xlu0 %5043
        %5047 = vset.pattern.permute.xlu0 0
        %5048 = vperm.xlu0 %5047, %v4902
        %v5049 = vpop.permute.xlu0 %5048
        %5052 = vset.pattern.permute.xlu0 0
        %5053 = vperm.xlu0 %5052, %v4903
        %v5054 = vpop.permute.xlu0 %5053
        %5057 = vset.pattern.permute.xlu0 0
        %5058 = vperm.xlu0 %5057, %v4904
        %v5059 = vpop.permute.xlu0 %5058
        %5062 = vset.pattern.permute.xlu0 0
        %5063 = vperm.xlu0 %5062, %v4905
        %v5064 = vpop.permute.xlu0 %5063
        %v5098 = vunpack.c.l.b16 %v4842
        %v5099 = vunpack.c.h.b16 %v4842
        %v5100 = vunpack.c.l.b16 %v4843
        %v5101 = vunpack.c.h.b16 %v4843
        %v5102 = vunpack.c.l.b16 %v4844
        %v5103 = vunpack.c.h.b16 %v4844
        %v5104 = vunpack.c.l.b16 %v4845
        %v5105 = vunpack.c.h.b16 %v4845
        %v5106 = vunpack.c.l.b16 %v4846
        %v5107 = vunpack.c.h.b16 %v4846
        %v5108 = vunpack.c.l.b16 %v4847
        %v5109 = vunpack.c.h.b16 %v4847
        %v5110 = vunpack.c.l.b16 %v4848
        %v5111 = vunpack.c.h.b16 %v4848
        %v5112 = vunpack.c.l.b16 %v4849
        %v5113 = vunpack.c.h.b16 %v4849
        %v5114 = vunpack.c.l.b16 %v4850
        %v5115 = vunpack.c.h.b16 %v4850
        %v5116 = vunpack.c.l.b16 %v4851
        %v5117 = vunpack.c.h.b16 %v4851
        %v5118 = vunpack.c.l.b16 %v4852
        %v5119 = vunpack.c.h.b16 %v4852
        %v5120 = vunpack.c.l.b16 %v4853
        %v5121 = vunpack.c.h.b16 %v4853
        %v5122 = vunpack.c.l.b16 %v4854
        %v5123 = vunpack.c.h.b16 %v4854
        %v5124 = vunpack.c.l.b16 %v4855
        %v5125 = vunpack.c.h.b16 %v4855
        %v5126 = vunpack.c.l.b16 %v4856
        %v5127 = vunpack.c.h.b16 %v4856
        %v5128 = vunpack.c.l.b16 %v4857
        %v5129 = vunpack.c.h.b16 %v4857
        %v5130 = vunpack.c.l.b16 %v4858
        %v5131 = vunpack.c.h.b16 %v4858
        %v5132 = vunpack.c.l.b16 %v4859
        %v5133 = vunpack.c.h.b16 %v4859
        %v5134 = vunpack.c.l.b16 %v4860
        %v5135 = vunpack.c.h.b16 %v4860
        %v5136 = vunpack.c.l.b16 %v4861
        %v5137 = vunpack.c.h.b16 %v4861
        %v5138 = vunpack.c.l.b16 %v4862
        %v5139 = vunpack.c.h.b16 %v4862
        %v5140 = vunpack.c.l.b16 %v4863
        %v5141 = vunpack.c.h.b16 %v4863
        %v5142 = vunpack.c.l.b16 %v4864
        %v5143 = vunpack.c.h.b16 %v4864
        %v5144 = vunpack.c.l.b16 %v4865
        %v5145 = vunpack.c.h.b16 %v4865
        %v5146 = vunpack.c.l.b16 %v4866
        %v5147 = vunpack.c.h.b16 %v4866
        %v5148 = vunpack.c.l.b16 %v4867
        %v5149 = vunpack.c.h.b16 %v4867
        %v5150 = vunpack.c.l.b16 %v4868
        %v5151 = vunpack.c.h.b16 %v4868
        %v5152 = vunpack.c.l.b16 %v4869
        %v5153 = vunpack.c.h.b16 %v4869
        %v5154 = vunpack.c.l.b16 %v4870
        %v5155 = vunpack.c.h.b16 %v4870
        %v5156 = vunpack.c.l.b16 %v4871
        %v5157 = vunpack.c.h.b16 %v4871
        %v5158 = vunpack.c.l.b16 %v4872
        %v5159 = vunpack.c.h.b16 %v4872
        %v5160 = vunpack.c.l.b16 %v4873
        %v5161 = vunpack.c.h.b16 %v4873
        %v5162 = vpack.c.b16 %v5100, %v5098
        %v5163 = vpack.c.b16 %v5101, %v5099
        %v5164 = vpack.c.b16 %v5104, %v5102
        %v5165 = vpack.c.b16 %v5105, %v5103
        %v5166 = vpack.c.b16 %v5108, %v5106
        %v5167 = vpack.c.b16 %v5109, %v5107
        %v5168 = vpack.c.b16 %v5112, %v5110
        %v5169 = vpack.c.b16 %v5113, %v5111
        %v5170 = vpack.c.b16 %v5116, %v5114
        %v5171 = vpack.c.b16 %v5117, %v5115
        %v5172 = vpack.c.b16 %v5120, %v5118
        %v5173 = vpack.c.b16 %v5121, %v5119
        %v5174 = vpack.c.b16 %v5124, %v5122
        %v5175 = vpack.c.b16 %v5125, %v5123
        %v5176 = vpack.c.b16 %v5128, %v5126
        %v5177 = vpack.c.b16 %v5129, %v5127
        %v5178 = vpack.c.b16 %v5132, %v5130
        %v5179 = vpack.c.b16 %v5133, %v5131
        %v5180 = vpack.c.b16 %v5136, %v5134
        %v5181 = vpack.c.b16 %v5137, %v5135
        %v5182 = vpack.c.b16 %v5140, %v5138
        %v5183 = vpack.c.b16 %v5141, %v5139
        %v5184 = vpack.c.b16 %v5144, %v5142
        %v5185 = vpack.c.b16 %v5145, %v5143
        %v5186 = vpack.c.b16 %v5148, %v5146
        %v5187 = vpack.c.b16 %v5149, %v5147
        %v5188 = vpack.c.b16 %v5152, %v5150
        %v5189 = vpack.c.b16 %v5153, %v5151
        %v5190 = vpack.c.b16 %v5156, %v5154
        %v5191 = vpack.c.b16 %v5157, %v5155
        %v5192 = vpack.c.b16 %v5160, %v5158
        %v5193 = vpack.c.b16 %v5161, %v5159
        %5226 = vmatprep.subr.bf16.mxu0 %v4779
        %5227 = vmatpush1.bf16.msra.mxu0 %v4778
        %5228 = vmatprep.subr.bf16.mxu0 %v4783
        %5229 = vmatpush1.bf16.msra.mxu0 %v4782
        %5230 = vmatprep.subr.bf16.mxu0 %v4787
        %5231 = vmatpush1.bf16.msra.mxu0 %v4786
        %5232 = vmatprep.subr.bf16.mxu0 %v4791
        %5233 = vmatpush1.bf16.msra.mxu0 %v4790
        %5234 = vmatprep.subr.bf16.mxu0 %v4795
        %5235 = vmatpush1.bf16.msra.mxu0 %v4794
        %5236 = vmatprep.subr.bf16.mxu0 %v4799
        %5237 = vmatpush1.bf16.msra.mxu0 %v4798
        %5238 = vmatprep.subr.bf16.mxu0 %v4803
        %5239 = vmatpush1.bf16.msra.mxu0 %v4802
        %5240 = vmatprep.subr.bf16.mxu0 %v4807
        %5241 = vmatpush1.bf16.msra.mxu0 %v4806
        %5242 = vmatprep.subr.bf16.mxu0 %v4811
        %5243 = vmatpush1.bf16.msra.mxu0 %v4810
        %5244 = vmatprep.subr.bf16.mxu0 %v4815
        %5245 = vmatpush1.bf16.msra.mxu0 %v4814
        %5246 = vmatprep.subr.bf16.mxu0 %v4819
        %5247 = vmatpush1.bf16.msra.mxu0 %v4818
        %5248 = vmatprep.subr.bf16.mxu0 %v4823
        %5249 = vmatpush1.bf16.msra.mxu0 %v4822
        %5250 = vmatprep.subr.bf16.mxu0 %v4827
        %5251 = vmatpush1.bf16.msra.mxu0 %v4826
        %5252 = vmatprep.subr.bf16.mxu0 %v4831
        %5253 = vmatpush1.bf16.msra.mxu0 %v4830
        %5254 = vmatprep.subr.bf16.mxu0 %v4835
        %5255 = vmatpush1.bf16.msra.mxu0 %v4834
        %5256 = vmatprep.subr.bf16.mxu0 %v4839
        %5257 = vmatpush1.bf16.msra.mxu0 %v4838
        %5258 = vmatprep.mubr.bf16.mxu0 %v5163
        %5259 = vmatmul.mubr.bf16.gmra.mrb[0].mxu0 %v5162
        %v5260 = vpop.f32.mrb[0].mxu0
        %v5261 = vadd.f32 %v4909, %v5260
        %v5262 = vpop.f32.mrb[0].mxu0
        %v5263 = vadd.f32 %v4909, %v5262
        %v5264 = vpop.f32.mrb[0].mxu0
        %v5265 = vadd.f32 %v4914, %v5264
        %v5266 = vpop.f32.mrb[0].mxu0
        %v5267 = vadd.f32 %v4914, %v5266
        %5268 = vmatprep.mubr.bf16.mxu0 %v5165
        %5269 = vmatmul.mubr.bf16.gmra.mrb[0].mxu0 %v5164
        %v5270 = vpop.f32.mrb[0].mxu0
        %v5271 = vadd.f32 %v4919, %v5270
        %v5272 = vpop.f32.mrb[0].mxu0
        %v5273 = vadd.f32 %v4919, %v5272
        %v5274 = vpop.f32.mrb[0].mxu0
        %v5275 = vadd.f32 %v4924, %v5274
        %v5276 = vpop.f32.mrb[0].mxu0
        %v5277 = vadd.f32 %v4924, %v5276
        %5278 = vmatprep.mubr.bf16.mxu0 %v5167
        %5279 = vmatmul.mubr.bf16.gmra.mrb[0].mxu0 %v5166
        %v5280 = vpop.f32.mrb[0].mxu0
        %v5281 = vadd.f32 %v4929, %v5280
        %v5282 = vpop.f32.mrb[0].mxu0
        %v5283 = vadd.f32 %v4929, %v5282
        %v5284 = vpop.f32.mrb[0].mxu0
        %v5285 = vadd.f32 %v4934, %v5284
        %v5286 = vpop.f32.mrb[0].mxu0
        %v5287 = vadd.f32 %v4934, %v5286
        %5288 = vmatprep.mubr.bf16.mxu0 %v5169
        %5289 = vmatmul.mubr.bf16.gmra.mrb[0].mxu0 %v5168
        %v5290 = vpop.f32.mrb[0].mxu0
        %v5291 = vadd.f32 %v4939, %v5290
        %v5292 = vpop.f32.mrb[0].mxu0
        %v5293 = vadd.f32 %v4939, %v5292
        %v5294 = vpop.f32.mrb[0].mxu0
        %v5295 = vadd.f32 %v4944, %v5294
        %v5296 = vpop.f32.mrb[0].mxu0
        %v5297 = vadd.f32 %v4944, %v5296
        %5298 = vmatprep.mubr.bf16.mxu0 %v5171
        %5299 = vmatmul.mubr.bf16.gmra.mrb[0].mxu0 %v5170
        %v5300 = vpop.f32.mrb[0].mxu0
        %v5301 = vadd.f32 %v4949, %v5300
        %v5302 = vpop.f32.mrb[0].mxu0
        %v5303 = vadd.f32 %v4949, %v5302
        %v5304 = vpop.f32.mrb[0].mxu0
        %v5305 = vadd.f32 %v4954, %v5304
        %v5306 = vpop.f32.mrb[0].mxu0
        %v5307 = vadd.f32 %v4954, %v5306
        %5308 = vmatprep.mubr.bf16.mxu0 %v5173
        %5309 = vmatmul.mubr.bf16.gmra.mrb[0].mxu0 %v5172
        %v5310 = vpop.f32.mrb[0].mxu0
        %v5311 = vadd.f32 %v4959, %v5310
        %v5312 = vpop.f32.mrb[0].mxu0
        %v5313 = vadd.f32 %v4959, %v5312
        %v5314 = vpop.f32.mrb[0].mxu0
        %v5315 = vadd.f32 %v4964, %v5314
        %v5316 = vpop.f32.mrb[0].mxu0
        %v5317 = vadd.f32 %v4964, %v5316
        %5318 = vmatprep.mubr.bf16.mxu0 %v5175
        %5319 = vmatmul.mubr.bf16.gmra.mrb[0].mxu0 %v5174
        %v5320 = vpop.f32.mrb[0].mxu0
        %v5321 = vadd.f32 %v4969, %v5320
        %v5322 = vpop.f32.mrb[0].mxu0
        %v5323 = vadd.f32 %v4969, %v5322
        %v5324 = vpop.f32.mrb[0].mxu0
        %v5325 = vadd.f32 %v4974, %v5324
        %v5326 = vpop.f32.mrb[0].mxu0
        %v5327 = vadd.f32 %v4974, %v5326
        %5328 = vmatprep.mubr.bf16.mxu0 %v5177
        %5329 = vmatmul.mubr.bf16.gmra.mrb[0].mxu0 %v5176
        %v5330 = vpop.f32.mrb[0].mxu0
        %v5331 = vadd.f32 %v4979, %v5330
        %v5332 = vpop.f32.mrb[0].mxu0
        %v5333 = vadd.f32 %v4979, %v5332
        %v5334 = vpop.f32.mrb[0].mxu0
        %v5335 = vadd.f32 %v4984, %v5334
        %v5336 = vpop.f32.mrb[0].mxu0
        %v5337 = vadd.f32 %v4984, %v5336
        %5338 = vmatprep.mubr.bf16.mxu0 %v5179
        %5339 = vmatmul.mubr.bf16.gmra.mrb[0].mxu0 %v5178
        %v5340 = vpop.f32.mrb[0].mxu0
        %v5341 = vadd.f32 %v4989, %v5340
        %v5342 = vpop.f32.mrb[0].mxu0
        %v5343 = vadd.f32 %v4989, %v5342
        %v5344 = vpop.f32.mrb[0].mxu0
        %v5345 = vadd.f32 %v4994, %v5344
        %v5346 = vpop.f32.mrb[0].mxu0
        %v5347 = vadd.f32 %v4994, %v5346
        %5348 = vmatprep.mubr.bf16.mxu0 %v5181
        %5349 = vmatmul.mubr.bf16.gmra.mrb[0].mxu0 %v5180
        %v5350 = vpop.f32.mrb[0].mxu0
        %v5351 = vadd.f32 %v4999, %v5350
        %v5352 = vpop.f32.mrb[0].mxu0
        %v5353 = vadd.f32 %v4999, %v5352
        %v5354 = vpop.f32.mrb[0].mxu0
        %v5355 = vadd.f32 %v5004, %v5354
        %v5356 = vpop.f32.mrb[0].mxu0
        %v5357 = vadd.f32 %v5004, %v5356
        %5358 = vmatprep.mubr.bf16.mxu0 %v5183
        %5359 = vmatmul.mubr.bf16.gmra.mrb[0].mxu0 %v5182
        %v5360 = vpop.f32.mrb[0].mxu0
        %v5361 = vadd.f32 %v5009, %v5360
        %v5362 = vpop.f32.mrb[0].mxu0
        %v5363 = vadd.f32 %v5009, %v5362
        %v5364 = vpop.f32.mrb[0].mxu0
        %v5365 = vadd.f32 %v5014, %v5364
        %v5366 = vpop.f32.mrb[0].mxu0
        %v5367 = vadd.f32 %v5014, %v5366
        %5368 = vmatprep.mubr.bf16.mxu0 %v5185
        %5369 = vmatmul.mubr.bf16.gmra.mrb[0].mxu0 %v5184
        %v5370 = vpop.f32.mrb[0].mxu0
        %v5371 = vadd.f32 %v5019, %v5370
        %v5372 = vpop.f32.mrb[0].mxu0
        %v5373 = vadd.f32 %v5019, %v5372
        %v5374 = vpop.f32.mrb[0].mxu0
        %v5375 = vadd.f32 %v5024, %v5374
        %v5376 = vpop.f32.mrb[0].mxu0
        %v5377 = vadd.f32 %v5024, %v5376
        %5378 = vmatprep.mubr.bf16.mxu0 %v5187
        %5379 = vmatmul.mubr.bf16.gmra.mrb[0].mxu0 %v5186
        %v5380 = vpop.f32.mrb[0].mxu0
        %v5381 = vadd.f32 %v5029, %v5380
        %v5382 = vpop.f32.mrb[0].mxu0
        %v5383 = vadd.f32 %v5029, %v5382
        %v5384 = vpop.f32.mrb[0].mxu0
        %v5385 = vadd.f32 %v5034, %v5384
        %v5386 = vpop.f32.mrb[0].mxu0
        %v5387 = vadd.f32 %v5034, %v5386
        %5388 = vmatprep.mubr.bf16.mxu0 %v5189
        %5389 = vmatmul.mubr.bf16.gmra.mrb[0].mxu0 %v5188
        %v5390 = vpop.f32.mrb[0].mxu0
        %v5391 = vadd.f32 %v5039, %v5390
        %v5392 = vpop.f32.mrb[0].mxu0
        %v5393 = vadd.f32 %v5039, %v5392
        %v5394 = vpop.f32.mrb[0].mxu0
        %v5395 = vadd.f32 %v5044, %v5394
        %v5396 = vpop.f32.mrb[0].mxu0
        %v5397 = vadd.f32 %v5044, %v5396
        %5398 = vmatprep.mubr.bf16.mxu0 %v5191
        %5399 = vmatmul.mubr.bf16.gmra.mrb[0].mxu0 %v5190
        %v5400 = vpop.f32.mrb[0].mxu0
        %v5401 = vadd.f32 %v5049, %v5400
        %v5402 = vpop.f32.mrb[0].mxu0
        %v5403 = vadd.f32 %v5049, %v5402
        %v5404 = vpop.f32.mrb[0].mxu0
        %v5405 = vadd.f32 %v5054, %v5404
        %v5406 = vpop.f32.mrb[0].mxu0
        %v5407 = vadd.f32 %v5054, %v5406
        %5408 = vmatprep.mubr.bf16.mxu0 %v5193
        %5409 = vmatmul.mubr.bf16.gmra.mrb[0].mxu0 %v5192
        %v5410 = vpop.f32.mrb[0].mxu0
        %v5411 = vadd.f32 %v5059, %v5410
        %v5412 = vpop.f32.mrb[0].mxu0
        %v5413 = vadd.f32 %v5059, %v5412
        %v5414 = vpop.f32.mrb[0].mxu0
        %v5415 = vadd.f32 %v5064, %v5414
        %v5416 = vpop.f32.mrb[0].mxu0
        %v5417 = vadd.f32 %v5064, %v5416
        %5418 = vdwg.mxu0
        %5419 = vmatprep.subr.bf16.mxu0 %v4781
        %5420 = vmatpush1.bf16.msra.mxu0 %v4780
        %5421 = vmatprep.subr.bf16.mxu0 %v4785
        %5422 = vmatpush1.bf16.msra.mxu0 %v4784
        %5423 = vmatprep.subr.bf16.mxu0 %v4789
        %5424 = vmatpush1.bf16.msra.mxu0 %v4788
        %5425 = vmatprep.subr.bf16.mxu0 %v4793
        %5426 = vmatpush1.bf16.msra.mxu0 %v4792
        %5427 = vmatprep.subr.bf16.mxu0 %v4797
        %5428 = vmatpush1.bf16.msra.mxu0 %v4796
        %5429 = vmatprep.subr.bf16.mxu0 %v4801
        %5430 = vmatpush1.bf16.msra.mxu0 %v4800
        %5431 = vmatprep.subr.bf16.mxu0 %v4805
        %5432 = vmatpush1.bf16.msra.mxu0 %v4804
        %5433 = vmatprep.subr.bf16.mxu0 %v4809
        %5434 = vmatpush1.bf16.msra.mxu0 %v4808
        %5435 = vmatprep.subr.bf16.mxu0 %v4813
        %5436 = vmatpush1.bf16.msra.mxu0 %v4812
        %5437 = vmatprep.subr.bf16.mxu0 %v4817
        %5438 = vmatpush1.bf16.msra.mxu0 %v4816
        %5439 = vmatprep.subr.bf16.mxu0 %v4821
        %5440 = vmatpush1.bf16.msra.mxu0 %v4820
        %5441 = vmatprep.subr.bf16.mxu0 %v4825
        %5442 = vmatpush1.bf16.msra.mxu0 %v4824
        %5443 = vmatprep.subr.bf16.mxu0 %v4829
        %5444 = vmatpush1.bf16.msra.mxu0 %v4828
        %5445 = vmatprep.subr.bf16.mxu0 %v4833
        %5446 = vmatpush1.bf16.msra.mxu0 %v4832
        %5447 = vmatprep.subr.bf16.mxu0 %v4837
        %5448 = vmatpush1.bf16.msra.mxu0 %v4836
        %5449 = vmatprep.subr.bf16.mxu0 %v4841
        %5450 = vmatpush1.bf16.msra.mxu0 %v4840
        %5451 = vmatprep.mubr.bf16.mxu0 %v5163
        %5452 = vmatmul.mubr.bf16.gmra.mrb[0].mxu0 %v5162
        %v5453 = vpop.f32.mrb[0].mxu0
        %v5454 = vadd.f32 %v4909, %v5453
        %v5455 = vpop.f32.mrb[0].mxu0
        %v5456 = vadd.f32 %v4909, %v5455
        %v5457 = vpop.f32.mrb[0].mxu0
        %v5458 = vadd.f32 %v4914, %v5457
        %v5459 = vpop.f32.mrb[0].mxu0
        %v5460 = vadd.f32 %v4914, %v5459
        %5461 = vmatprep.mubr.bf16.mxu0 %v5165
        %5462 = vmatmul.mubr.bf16.gmra.mrb[0].mxu0 %v5164
        %v5463 = vpop.f32.mrb[0].mxu0
        %v5464 = vadd.f32 %v4919, %v5463
        %v5465 = vpop.f32.mrb[0].mxu0
        %v5466 = vadd.f32 %v4919, %v5465
        %v5467 = vpop.f32.mrb[0].mxu0
        %v5468 = vadd.f32 %v4924, %v5467
        %v5469 = vpop.f32.mrb[0].mxu0
        %v5470 = vadd.f32 %v4924, %v5469
        %5471 = vmatprep.mubr.bf16.mxu0 %v5167
        %5472 = vmatmul.mubr.bf16.gmra.mrb[0].mxu0 %v5166
        %v5473 = vpop.f32.mrb[0].mxu0
        %v5474 = vadd.f32 %v4929, %v5473
        %v5475 = vpop.f32.mrb[0].mxu0
        %v5476 = vadd.f32 %v4929, %v5475
        %v5477 = vpop.f32.mrb[0].mxu0
        %v5478 = vadd.f32 %v4934, %v5477
        %v5479 = vpop.f32.mrb[0].mxu0
        %v5480 = vadd.f32 %v4934, %v5479
        %5481 = vmatprep.mubr.bf16.mxu0 %v5169
        %5482 = vmatmul.mubr.bf16.gmra.mrb[0].mxu0 %v5168
        %v5483 = vpop.f32.mrb[0].mxu0
        %v5484 = vadd.f32 %v4939, %v5483
        %v5485 = vpop.f32.mrb[0].mxu0
        %v5486 = vadd.f32 %v4939, %v5485
        %v5487 = vpop.f32.mrb[0].mxu0
        %v5488 = vadd.f32 %v4944, %v5487
        %v5489 = vpop.f32.mrb[0].mxu0
        %v5490 = vadd.f32 %v4944, %v5489
        %5491 = vmatprep.mubr.bf16.mxu0 %v5171
        %5492 = vmatmul.mubr.bf16.gmra.mrb[0].mxu0 %v5170
        %v5493 = vpop.f32.mrb[0].mxu0
        %v5494 = vadd.f32 %v4949, %v5493
        %v5495 = vpop.f32.mrb[0].mxu0
        %v5496 = vadd.f32 %v4949, %v5495
        %v5497 = vpop.f32.mrb[0].mxu0
        %v5498 = vadd.f32 %v4954, %v5497
        %v5499 = vpop.f32.mrb[0].mxu0
        %v5500 = vadd.f32 %v4954, %v5499
        %5501 = vmatprep.mubr.bf16.mxu0 %v5173
        %5502 = vmatmul.mubr.bf16.gmra.mrb[0].mxu0 %v5172
        %v5503 = vpop.f32.mrb[0].mxu0
        %v5504 = vadd.f32 %v4959, %v5503
        %v5505 = vpop.f32.mrb[0].mxu0
        %v5506 = vadd.f32 %v4959, %v5505
        %v5507 = vpop.f32.mrb[0].mxu0
        %v5508 = vadd.f32 %v4964, %v5507
        %v5509 = vpop.f32.mrb[0].mxu0
        %v5510 = vadd.f32 %v4964, %v5509
        %5511 = vmatprep.mubr.bf16.mxu0 %v5175
        %5512 = vmatmul.mubr.bf16.gmra.mrb[0].mxu0 %v5174
        %v5513 = vpop.f32.mrb[0].mxu0
        %v5514 = vadd.f32 %v4969, %v5513
        %v5515 = vpop.f32.mrb[0].mxu0
        %v5516 = vadd.f32 %v4969, %v5515
        %v5517 = vpop.f32.mrb[0].mxu0
        %v5518 = vadd.f32 %v4974, %v5517
        %v5519 = vpop.f32.mrb[0].mxu0
        %v5520 = vadd.f32 %v4974, %v5519
        %5521 = vmatprep.mubr.bf16.mxu0 %v5177
        %5522 = vmatmul.mubr.bf16.gmra.mrb[0].mxu0 %v5176
        %v5523 = vpop.f32.mrb[0].mxu0
        %v5524 = vadd.f32 %v4979, %v5523
        %v5525 = vpop.f32.mrb[0].mxu0
        %v5526 = vadd.f32 %v4979, %v5525
        %v5527 = vpop.f32.mrb[0].mxu0
        %v5528 = vadd.f32 %v4984, %v5527
        %v5529 = vpop.f32.mrb[0].mxu0
        %v5530 = vadd.f32 %v4984, %v5529
        %5531 = vmatprep.mubr.bf16.mxu0 %v5179
        %5532 = vmatmul.mubr.bf16.gmra.mrb[0].mxu0 %v5178
        %v5533 = vpop.f32.mrb[0].mxu0
        %v5534 = vadd.f32 %v4989, %v5533
        %v5535 = vpop.f32.mrb[0].mxu0
        %v5536 = vadd.f32 %v4989, %v5535
        %v5537 = vpop.f32.mrb[0].mxu0
        %v5538 = vadd.f32 %v4994, %v5537
        %v5539 = vpop.f32.mrb[0].mxu0
        %v5540 = vadd.f32 %v4994, %v5539
        %5541 = vmatprep.mubr.bf16.mxu0 %v5181
        %5542 = vmatmul.mubr.bf16.gmra.mrb[0].mxu0 %v5180
        %v5543 = vpop.f32.mrb[0].mxu0
        %v5544 = vadd.f32 %v4999, %v5543
        %v5545 = vpop.f32.mrb[0].mxu0
        %v5546 = vadd.f32 %v4999, %v5545
        %v5547 = vpop.f32.mrb[0].mxu0
        %v5548 = vadd.f32 %v5004, %v5547
        %v5549 = vpop.f32.mrb[0].mxu0
        %v5550 = vadd.f32 %v5004, %v5549
        %5551 = vmatprep.mubr.bf16.mxu0 %v5183
        %5552 = vmatmul.mubr.bf16.gmra.mrb[0].mxu0 %v5182
        %v5553 = vpop.f32.mrb[0].mxu0
        %v5554 = vadd.f32 %v5009, %v5553
        %v5555 = vpop.f32.mrb[0].mxu0
        %v5556 = vadd.f32 %v5009, %v5555
        %v5557 = vpop.f32.mrb[0].mxu0
        %v5558 = vadd.f32 %v5014, %v5557
        %v5559 = vpop.f32.mrb[0].mxu0
        %v5560 = vadd.f32 %v5014, %v5559
        %5561 = vmatprep.mubr.bf16.mxu0 %v5185
        %5562 = vmatmul.mubr.bf16.gmra.mrb[0].mxu0 %v5184
        %v5563 = vpop.f32.mrb[0].mxu0
        %v5564 = vadd.f32 %v5019, %v5563
        %v5565 = vpop.f32.mrb[0].mxu0
        %v5566 = vadd.f32 %v5019, %v5565
        %v5567 = vpop.f32.mrb[0].mxu0
        %v5568 = vadd.f32 %v5024, %v5567
        %v5569 = vpop.f32.mrb[0].mxu0
        %v5570 = vadd.f32 %v5024, %v5569
        %5571 = vmatprep.mubr.bf16.mxu0 %v5187
        %5572 = vmatmul.mubr.bf16.gmra.mrb[0].mxu0 %v5186
        %v5573 = vpop.f32.mrb[0].mxu0
        %v5574 = vadd.f32 %v5029, %v5573
        %v5575 = vpop.f32.mrb[0].mxu0
        %v5576 = vadd.f32 %v5029, %v5575
        %v5577 = vpop.f32.mrb[0].mxu0
        %v5578 = vadd.f32 %v5034, %v5577
        %v5579 = vpop.f32.mrb[0].mxu0
        %v5580 = vadd.f32 %v5034, %v5579
        %5581 = vmatprep.mubr.bf16.mxu0 %v5189
        %5582 = vmatmul.mubr.bf16.gmra.mrb[0].mxu0 %v5188
        %v5583 = vpop.f32.mrb[0].mxu0
        %v5584 = vadd.f32 %v5039, %v5583
        %v5585 = vpop.f32.mrb[0].mxu0
        %v5586 = vadd.f32 %v5039, %v5585
        %v5587 = vpop.f32.mrb[0].mxu0
        %v5588 = vadd.f32 %v5044, %v5587
        %v5589 = vpop.f32.mrb[0].mxu0
        %v5590 = vadd.f32 %v5044, %v5589
        %5591 = vmatprep.mubr.bf16.mxu0 %v5191
        %5592 = vmatmul.mubr.bf16.gmra.mrb[0].mxu0 %v5190
        %v5593 = vpop.f32.mrb[0].mxu0
        %v5594 = vadd.f32 %v5049, %v5593
        %v5595 = vpop.f32.mrb[0].mxu0
        %v5596 = vadd.f32 %v5049, %v5595
        %v5597 = vpop.f32.mrb[0].mxu0
        %v5598 = vadd.f32 %v5054, %v5597
        %v5599 = vpop.f32.mrb[0].mxu0
        %v5600 = vadd.f32 %v5054, %v5599
        %5601 = vmatprep.mubr.bf16.mxu0 %v5193
        %5602 = vmatmul.mubr.bf16.gmra.mrb[0].mxu0 %v5192
        %v5603 = vpop.f32.mrb[0].mxu0
        %v5604 = vadd.f32 %v5059, %v5603
        %v5605 = vpop.f32.mrb[0].mxu0
        %v5606 = vadd.f32 %v5059, %v5605
        %v5607 = vpop.f32.mrb[0].mxu0
        %v5608 = vadd.f32 %v5064, %v5607
        %v5609 = vpop.f32.mrb[0].mxu0
        %v5610 = vadd.f32 %v5064, %v5609
        %5611 = vdwg.mxu0
        %vm5612 = vcmp.ge.f32.partialorder %v5261, 0.0
        %vm5613 = vcmp.ge.f32.partialorder %v5263, 0.0
        %vm5614 = vcmp.ge.f32.partialorder %v5454, 0.0
        %vm5615 = vcmp.ge.f32.partialorder %v5456, 0.0
        %vm5616 = vcmp.ge.f32.partialorder %v5265, 0.0
        %vm5617 = vcmp.ge.f32.partialorder %v5267, 0.0
        %vm5618 = vcmp.ge.f32.partialorder %v5458, 0.0
        %vm5619 = vcmp.ge.f32.partialorder %v5460, 0.0
        %vm5620 = vcmp.ge.f32.partialorder %v5271, 0.0
        %vm5621 = vcmp.ge.f32.partialorder %v5273, 0.0
        %vm5622 = vcmp.ge.f32.partialorder %v5464, 0.0
        %vm5623 = vcmp.ge.f32.partialorder %v5466, 0.0
        %vm5624 = vcmp.ge.f32.partialorder %v5275, 0.0
        %vm5625 = vcmp.ge.f32.partialorder %v5277, 0.0
        %vm5626 = vcmp.ge.f32.partialorder %v5468, 0.0
        %vm5627 = vcmp.ge.f32.partialorder %v5470, 0.0
        %vm5628 = vcmp.ge.f32.partialorder %v5281, 0.0
        %vm5629 = vcmp.ge.f32.partialorder %v5283, 0.0
        %vm5630 = vcmp.ge.f32.partialorder %v5474, 0.0
        %vm5631 = vcmp.ge.f32.partialorder %v5476, 0.0
        %vm5632 = vcmp.ge.f32.partialorder %v5285, 0.0
        %vm5633 = vcmp.ge.f32.partialorder %v5287, 0.0
        %vm5634 = vcmp.ge.f32.partialorder %v5478, 0.0
        %vm5635 = vcmp.ge.f32.partialorder %v5480, 0.0
        %vm5636 = vcmp.ge.f32.partialorder %v5291, 0.0
        %vm5637 = vcmp.ge.f32.partialorder %v5293, 0.0
        %vm5638 = vcmp.ge.f32.partialorder %v5484, 0.0
        %vm5639 = vcmp.ge.f32.partialorder %v5486, 0.0
        %vm5640 = vcmp.ge.f32.partialorder %v5295, 0.0
        %vm5641 = vcmp.ge.f32.partialorder %v5297, 0.0
        %vm5642 = vcmp.ge.f32.partialorder %v5488, 0.0
        %vm5643 = vcmp.ge.f32.partialorder %v5490, 0.0
        %vm5644 = vcmp.ge.f32.partialorder %v5301, 0.0
        %vm5645 = vcmp.ge.f32.partialorder %v5303, 0.0
        %vm5646 = vcmp.ge.f32.partialorder %v5494, 0.0
        %vm5647 = vcmp.ge.f32.partialorder %v5496, 0.0
        %vm5648 = vcmp.ge.f32.partialorder %v5305, 0.0
        %vm5649 = vcmp.ge.f32.partialorder %v5307, 0.0
        %vm5650 = vcmp.ge.f32.partialorder %v5498, 0.0
        %vm5651 = vcmp.ge.f32.partialorder %v5500, 0.0
        %vm5652 = vcmp.ge.f32.partialorder %v5311, 0.0
        %vm5653 = vcmp.ge.f32.partialorder %v5313, 0.0
        %vm5654 = vcmp.ge.f32.partialorder %v5504, 0.0
        %vm5655 = vcmp.ge.f32.partialorder %v5506, 0.0
        %vm5656 = vcmp.ge.f32.partialorder %v5315, 0.0
        %vm5657 = vcmp.ge.f32.partialorder %v5317, 0.0
        %vm5658 = vcmp.ge.f32.partialorder %v5508, 0.0
        %vm5659 = vcmp.ge.f32.partialorder %v5510, 0.0
        %vm5660 = vcmp.ge.f32.partialorder %v5321, 0.0
        %vm5661 = vcmp.ge.f32.partialorder %v5323, 0.0
        %vm5662 = vcmp.ge.f32.partialorder %v5514, 0.0
        %vm5663 = vcmp.ge.f32.partialorder %v5516, 0.0
        %vm5664 = vcmp.ge.f32.partialorder %v5325, 0.0
        %vm5665 = vcmp.ge.f32.partialorder %v5327, 0.0
        %vm5666 = vcmp.ge.f32.partialorder %v5518, 0.0
        %vm5667 = vcmp.ge.f32.partialorder %v5520, 0.0
        %vm5668 = vcmp.ge.f32.partialorder %v5331, 0.0
        %vm5669 = vcmp.ge.f32.partialorder %v5333, 0.0
        %vm5670 = vcmp.ge.f32.partialorder %v5524, 0.0
        %vm5671 = vcmp.ge.f32.partialorder %v5526, 0.0
        %vm5672 = vcmp.ge.f32.partialorder %v5335, 0.0
        %vm5673 = vcmp.ge.f32.partialorder %v5337, 0.0
        %vm5674 = vcmp.ge.f32.partialorder %v5528, 0.0
        %vm5675 = vcmp.ge.f32.partialorder %v5530, 0.0
        %vm5676 = vcmp.ge.f32.partialorder %v5341, 0.0
        %vm5677 = vcmp.ge.f32.partialorder %v5343, 0.0
        %vm5678 = vcmp.ge.f32.partialorder %v5534, 0.0
        %vm5679 = vcmp.ge.f32.partialorder %v5536, 0.0
        %vm5680 = vcmp.ge.f32.partialorder %v5345, 0.0
        %vm5681 = vcmp.ge.f32.partialorder %v5347, 0.0
        %vm5682 = vcmp.ge.f32.partialorder %v5538, 0.0
        %vm5683 = vcmp.ge.f32.partialorder %v5540, 0.0
        %vm5684 = vcmp.ge.f32.partialorder %v5351, 0.0
        %vm5685 = vcmp.ge.f32.partialorder %v5353, 0.0
        %vm5686 = vcmp.ge.f32.partialorder %v5544, 0.0
        %vm5687 = vcmp.ge.f32.partialorder %v5546, 0.0
        %vm5688 = vcmp.ge.f32.partialorder %v5355, 0.0
        %vm5689 = vcmp.ge.f32.partialorder %v5357, 0.0
        %vm5690 = vcmp.ge.f32.partialorder %v5548, 0.0
        %vm5691 = vcmp.ge.f32.partialorder %v5550, 0.0
        %vm5692 = vcmp.ge.f32.partialorder %v5361, 0.0
        %vm5693 = vcmp.ge.f32.partialorder %v5363, 0.0
        %vm5694 = vcmp.ge.f32.partialorder %v5554, 0.0
        %vm5695 = vcmp.ge.f32.partialorder %v5556, 0.0
        %vm5696 = vcmp.ge.f32.partialorder %v5365, 0.0
        %vm5697 = vcmp.ge.f32.partialorder %v5367, 0.0
        %vm5698 = vcmp.ge.f32.partialorder %v5558, 0.0
        %vm5699 = vcmp.ge.f32.partialorder %v5560, 0.0
        %vm5700 = vcmp.ge.f32.partialorder %v5371, 0.0
        %vm5701 = vcmp.ge.f32.partialorder %v5373, 0.0
        %vm5702 = vcmp.ge.f32.partialorder %v5564, 0.0
        %vm5703 = vcmp.ge.f32.partialorder %v5566, 0.0
        %vm5704 = vcmp.ge.f32.partialorder %v5375, 0.0
        %vm5705 = vcmp.ge.f32.partialorder %v5377, 0.0
        %vm5706 = vcmp.ge.f32.partialorder %v5568, 0.0
        %vm5707 = vcmp.ge.f32.partialorder %v5570, 0.0
        %vm5708 = vcmp.ge.f32.partialorder %v5381, 0.0
        %vm5709 = vcmp.ge.f32.partialorder %v5383, 0.0
        %vm5710 = vcmp.ge.f32.partialorder %v5574, 0.0
        %vm5711 = vcmp.ge.f32.partialorder %v5576, 0.0
        %vm5712 = vcmp.ge.f32.partialorder %v5385, 0.0
        %vm5713 = vcmp.ge.f32.partialorder %v5387, 0.0
        %vm5714 = vcmp.ge.f32.partialorder %v5578, 0.0
        %vm5715 = vcmp.ge.f32.partialorder %v5580, 0.0
        %vm5716 = vcmp.ge.f32.partialorder %v5391, 0.0
        %vm5717 = vcmp.ge.f32.partialorder %v5393, 0.0
        %vm5718 = vcmp.ge.f32.partialorder %v5584, 0.0
        %vm5719 = vcmp.ge.f32.partialorder %v5586, 0.0
        %vm5720 = vcmp.ge.f32.partialorder %v5395, 0.0
        %vm5721 = vcmp.ge.f32.partialorder %v5397, 0.0
        %vm5722 = vcmp.ge.f32.partialorder %v5588, 0.0
        %vm5723 = vcmp.ge.f32.partialorder %v5590, 0.0
        %vm5724 = vcmp.ge.f32.partialorder %v5401, 0.0
        %vm5725 = vcmp.ge.f32.partialorder %v5403, 0.0
        %vm5726 = vcmp.ge.f32.partialorder %v5594, 0.0
        %vm5727 = vcmp.ge.f32.partialorder %v5596, 0.0
        %vm5728 = vcmp.ge.f32.partialorder %v5405, 0.0
        %vm5729 = vcmp.ge.f32.partialorder %v5407, 0.0
        %vm5730 = vcmp.ge.f32.partialorder %v5598, 0.0
        %vm5731 = vcmp.ge.f32.partialorder %v5600, 0.0
        %vm5732 = vcmp.ge.f32.partialorder %v5411, 0.0
        %vm5733 = vcmp.ge.f32.partialorder %v5413, 0.0
        %vm5734 = vcmp.ge.f32.partialorder %v5604, 0.0
        %vm5735 = vcmp.ge.f32.partialorder %v5606, 0.0
        %vm5736 = vcmp.ge.f32.partialorder %v5415, 0.0
        %vm5737 = vcmp.ge.f32.partialorder %v5417, 0.0
        %vm5738 = vcmp.ge.f32.partialorder %v5608, 0.0
        %vm5739 = vcmp.ge.f32.partialorder %v5610, 0.0
        %v5740 = vstv %s434
        %v5741 = vmul.f32 %v5740, %v5261
        %v5742 = vmul.f32 %v5740, %v5263
        %v5743 = vmul.f32 %v5740, %v5454
        %v5744 = vmul.f32 %v5740, %v5456
        %v5745 = vmul.f32 %v5740, %v5265
        %v5746 = vmul.f32 %v5740, %v5267
        %v5747 = vmul.f32 %v5740, %v5458
        %v5748 = vmul.f32 %v5740, %v5460
        %v5749 = vmul.f32 %v5740, %v5271
        %v5750 = vmul.f32 %v5740, %v5273
        %v5751 = vmul.f32 %v5740, %v5464
        %v5752 = vmul.f32 %v5740, %v5466
        %v5753 = vmul.f32 %v5740, %v5275
        %v5754 = vmul.f32 %v5740, %v5277
        %v5755 = vmul.f32 %v5740, %v5468
        %v5756 = vmul.f32 %v5740, %v5470
        %v5757 = vmul.f32 %v5740, %v5281
        %v5758 = vmul.f32 %v5740, %v5283
        %v5759 = vmul.f32 %v5740, %v5474
        %v5760 = vmul.f32 %v5740, %v5476
        %v5761 = vmul.f32 %v5740, %v5285
        %v5762 = vmul.f32 %v5740, %v5287
        %v5763 = vmul.f32 %v5740, %v5478
        %v5764 = vmul.f32 %v5740, %v5480
        %v5765 = vmul.f32 %v5740, %v5291
        %v5766 = vmul.f32 %v5740, %v5293
        %v5767 = vmul.f32 %v5740, %v5484
        %v5768 = vmul.f32 %v5740, %v5486
        %v5769 = vmul.f32 %v5740, %v5295
        %v5770 = vmul.f32 %v5740, %v5297
        %v5771 = vmul.f32 %v5740, %v5488
        %v5772 = vmul.f32 %v5740, %v5490
        %v5773 = vmul.f32 %v5740, %v5301
        %v5774 = vmul.f32 %v5740, %v5303
        %v5775 = vmul.f32 %v5740, %v5494
        %v5776 = vmul.f32 %v5740, %v5496
        %v5777 = vmul.f32 %v5740, %v5305
        %v5778 = vmul.f32 %v5740, %v5307
        %v5779 = vmul.f32 %v5740, %v5498
        %v5780 = vmul.f32 %v5740, %v5500
        %v5781 = vmul.f32 %v5740, %v5311
        %v5782 = vmul.f32 %v5740, %v5313
        %v5783 = vmul.f32 %v5740, %v5504
        %v5784 = vmul.f32 %v5740, %v5506
        %v5785 = vmul.f32 %v5740, %v5315
        %v5786 = vmul.f32 %v5740, %v5317
        %v5787 = vmul.f32 %v5740, %v5508
        %v5788 = vmul.f32 %v5740, %v5510
        %v5789 = vmul.f32 %v5740, %v5321
        %v5790 = vmul.f32 %v5740, %v5323
        %v5791 = vmul.f32 %v5740, %v5514
        %v5792 = vmul.f32 %v5740, %v5516
        %v5793 = vmul.f32 %v5740, %v5325
        %v5794 = vmul.f32 %v5740, %v5327
        %v5795 = vmul.f32 %v5740, %v5518
        %v5796 = vmul.f32 %v5740, %v5520
        %v5797 = vmul.f32 %v5740, %v5331
        %v5798 = vmul.f32 %v5740, %v5333
        %v5799 = vmul.f32 %v5740, %v5524
        %v5800 = vmul.f32 %v5740, %v5526
        %v5801 = vmul.f32 %v5740, %v5335
        %v5802 = vmul.f32 %v5740, %v5337
        %v5803 = vmul.f32 %v5740, %v5528
        %v5804 = vmul.f32 %v5740, %v5530
        %v5805 = vmul.f32 %v5740, %v5341
        %v5806 = vmul.f32 %v5740, %v5343
        %v5807 = vmul.f32 %v5740, %v5534
        %v5808 = vmul.f32 %v5740, %v5536
        %v5809 = vmul.f32 %v5740, %v5345
        %v5810 = vmul.f32 %v5740, %v5347
        %v5811 = vmul.f32 %v5740, %v5538
        %v5812 = vmul.f32 %v5740, %v5540
        %v5813 = vmul.f32 %v5740, %v5351
        %v5814 = vmul.f32 %v5740, %v5353
        %v5815 = vmul.f32 %v5740, %v5544
        %v5816 = vmul.f32 %v5740, %v5546
        %v5817 = vmul.f32 %v5740, %v5355
        %v5818 = vmul.f32 %v5740, %v5357
        %v5819 = vmul.f32 %v5740, %v5548
        %v5820 = vmul.f32 %v5740, %v5550
        %v5821 = vmul.f32 %v5740, %v5361
        %v5822 = vmul.f32 %v5740, %v5363
        %v5823 = vmul.f32 %v5740, %v5554
        %v5824 = vmul.f32 %v5740, %v5556
        %v5825 = vmul.f32 %v5740, %v5365
        %v5826 = vmul.f32 %v5740, %v5367
        %v5827 = vmul.f32 %v5740, %v5558
        %v5828 = vmul.f32 %v5740, %v5560
        %v5829 = vmul.f32 %v5740, %v5371
        %v5830 = vmul.f32 %v5740, %v5373
        %v5831 = vmul.f32 %v5740, %v5564
        %v5832 = vmul.f32 %v5740, %v5566
        %v5833 = vmul.f32 %v5740, %v5375
        %v5834 = vmul.f32 %v5740, %v5377
        %v5835 = vmul.f32 %v5740, %v5568
        %v5836 = vmul.f32 %v5740, %v5570
        %v5837 = vmul.f32 %v5740, %v5381
        %v5838 = vmul.f32 %v5740, %v5383
        %v5839 = vmul.f32 %v5740, %v5574
        %v5840 = vmul.f32 %v5740, %v5576
        %v5841 = vmul.f32 %v5740, %v5385
        %v5842 = vmul.f32 %v5740, %v5387
        %v5843 = vmul.f32 %v5740, %v5578
        %v5844 = vmul.f32 %v5740, %v5580
        %v5845 = vmul.f32 %v5740, %v5391
        %v5846 = vmul.f32 %v5740, %v5393
        %v5847 = vmul.f32 %v5740, %v5584
        %v5848 = vmul.f32 %v5740, %v5586
        %v5849 = vmul.f32 %v5740, %v5395
        %v5850 = vmul.f32 %v5740, %v5397
        %v5851 = vmul.f32 %v5740, %v5588
        %v5852 = vmul.f32 %v5740, %v5590
        %v5853 = vmul.f32 %v5740, %v5401
        %v5854 = vmul.f32 %v5740, %v5403
        %v5855 = vmul.f32 %v5740, %v5594
        %v5856 = vmul.f32 %v5740, %v5596
        %v5857 = vmul.f32 %v5740, %v5405
        %v5858 = vmul.f32 %v5740, %v5407
        %v5859 = vmul.f32 %v5740, %v5598
        %v5860 = vmul.f32 %v5740, %v5600
        %v5861 = vmul.f32 %v5740, %v5411
        %v5862 = vmul.f32 %v5740, %v5413
        %v5863 = vmul.f32 %v5740, %v5604
        %v5864 = vmul.f32 %v5740, %v5606
        %v5865 = vmul.f32 %v5740, %v5415
        %v5866 = vmul.f32 %v5740, %v5417
        %v5867 = vmul.f32 %v5740, %v5608
        %v5868 = vmul.f32 %v5740, %v5610
        %v5869 = vsel %vm5612, %v5261, %v5741
        %v5870 = vsel %vm5613, %v5263, %v5742
        %v5871 = vsel %vm5614, %v5454, %v5743
        %v5872 = vsel %vm5615, %v5456, %v5744
        %v5873 = vsel %vm5616, %v5265, %v5745
        %v5874 = vsel %vm5617, %v5267, %v5746
        %v5875 = vsel %vm5618, %v5458, %v5747
        %v5876 = vsel %vm5619, %v5460, %v5748
        %v5877 = vsel %vm5620, %v5271, %v5749
        %v5878 = vsel %vm5621, %v5273, %v5750
        %v5879 = vsel %vm5622, %v5464, %v5751
        %v5880 = vsel %vm5623, %v5466, %v5752
        %v5881 = vsel %vm5624, %v5275, %v5753
        %v5882 = vsel %vm5625, %v5277, %v5754
        %v5883 = vsel %vm5626, %v5468, %v5755
        %v5884 = vsel %vm5627, %v5470, %v5756
        %v5885 = vsel %vm5628, %v5281, %v5757
        %v5886 = vsel %vm5629, %v5283, %v5758
        %v5887 = vsel %vm5630, %v5474, %v5759
        %v5888 = vsel %vm5631, %v5476, %v5760
        %v5889 = vsel %vm5632, %v5285, %v5761
        %v5890 = vsel %vm5633, %v5287, %v5762
        %v5891 = vsel %vm5634, %v5478, %v5763
        %v5892 = vsel %vm5635, %v5480, %v5764
        %v5893 = vsel %vm5636, %v5291, %v5765
        %v5894 = vsel %vm5637, %v5293, %v5766
        %v5895 = vsel %vm5638, %v5484, %v5767
        %v5896 = vsel %vm5639, %v5486, %v5768
        %v5897 = vsel %vm5640, %v5295, %v5769
        %v5898 = vsel %vm5641, %v5297, %v5770
        %v5899 = vsel %vm5642, %v5488, %v5771
        %v5900 = vsel %vm5643, %v5490, %v5772
        %v5901 = vsel %vm5644, %v5301, %v5773
        %v5902 = vsel %vm5645, %v5303, %v5774
        %v5903 = vsel %vm5646, %v5494, %v5775
        %v5904 = vsel %vm5647, %v5496, %v5776
        %v5905 = vsel %vm5648, %v5305, %v5777
        %v5906 = vsel %vm5649, %v5307, %v5778
        %v5907 = vsel %vm5650, %v5498, %v5779
        %v5908 = vsel %vm5651, %v5500, %v5780
        %v5909 = vsel %vm5652, %v5311, %v5781
        %v5910 = vsel %vm5653, %v5313, %v5782
        %v5911 = vsel %vm5654, %v5504, %v5783
        %v5912 = vsel %vm5655, %v5506, %v5784
        %v5913 = vsel %vm5656, %v5315, %v5785
        %v5914 = vsel %vm5657, %v5317, %v5786
        %v5915 = vsel %vm5658, %v5508, %v5787
        %v5916 = vsel %vm5659, %v5510, %v5788
        %v5917 = vsel %vm5660, %v5321, %v5789
        %v5918 = vsel %vm5661, %v5323, %v5790
        %v5919 = vsel %vm5662, %v5514, %v5791
        %v5920 = vsel %vm5663, %v5516, %v5792
        %v5921 = vsel %vm5664, %v5325, %v5793
        %v5922 = vsel %vm5665, %v5327, %v5794
        %v5923 = vsel %vm5666, %v5518, %v5795
        %v5924 = vsel %vm5667, %v5520, %v5796
        %v5925 = vsel %vm5668, %v5331, %v5797
        %v5926 = vsel %vm5669, %v5333, %v5798
        %v5927 = vsel %vm5670, %v5524, %v5799
        %v5928 = vsel %vm5671, %v5526, %v5800
        %v5929 = vsel %vm5672, %v5335, %v5801
        %v5930 = vsel %vm5673, %v5337, %v5802
        %v5931 = vsel %vm5674, %v5528, %v5803
        %v5932 = vsel %vm5675, %v5530, %v5804
        %v5933 = vsel %vm5676, %v5341, %v5805
        %v5934 = vsel %vm5677, %v5343, %v5806
        %v5935 = vsel %vm5678, %v5534, %v5807
        %v5936 = vsel %vm5679, %v5536, %v5808
        %v5937 = vsel %vm5680, %v5345, %v5809
        %v5938 = vsel %vm5681, %v5347, %v5810
        %v5939 = vsel %vm5682, %v5538, %v5811
        %v5940 = vsel %vm5683, %v5540, %v5812
        %v5941 = vsel %vm5684, %v5351, %v5813
        %v5942 = vsel %vm5685, %v5353, %v5814
        %v5943 = vsel %vm5686, %v5544, %v5815
        %v5944 = vsel %vm5687, %v5546, %v5816
        %v5945 = vsel %vm5688, %v5355, %v5817
        %v5946 = vsel %vm5689, %v5357, %v5818
        %v5947 = vsel %vm5690, %v5548, %v5819
        %v5948 = vsel %vm5691, %v5550, %v5820
        %v5949 = vsel %vm5692, %v5361, %v5821
        %v5950 = vsel %vm5693, %v5363, %v5822
        %v5951 = vsel %vm5694, %v5554, %v5823
        %v5952 = vsel %vm5695, %v5556, %v5824
        %v5953 = vsel %vm5696, %v5365, %v5825
        %v5954 = vsel %vm5697, %v5367, %v5826
        %v5955 = vsel %vm5698, %v5558, %v5827
        %v5956 = vsel %vm5699, %v5560, %v5828
        %v5957 = vsel %vm5700, %v5371, %v5829
        %v5958 = vsel %vm5701, %v5373, %v5830
        %v5959 = vsel %vm5702, %v5564, %v5831
        %v5960 = vsel %vm5703, %v5566, %v5832
        %v5961 = vsel %vm5704, %v5375, %v5833
        %v5962 = vsel %vm5705, %v5377, %v5834
        %v5963 = vsel %vm5706, %v5568, %v5835
        %v5964 = vsel %vm5707, %v5570, %v5836
        %v5965 = vsel %vm5708, %v5381, %v5837
        %v5966 = vsel %vm5709, %v5383, %v5838
        %v5967 = vsel %vm5710, %v5574, %v5839
        %v5968 = vsel %vm5711, %v5576, %v5840
        %v5969 = vsel %vm5712, %v5385, %v5841
        %v5970 = vsel %vm5713, %v5387, %v5842
        %v5971 = vsel %vm5714, %v5578, %v5843
        %v5972 = vsel %vm5715, %v5580, %v5844
        %v5973 = vsel %vm5716, %v5391, %v5845
        %v5974 = vsel %vm5717, %v5393, %v5846
        %v5975 = vsel %vm5718, %v5584, %v5847
        %v5976 = vsel %vm5719, %v5586, %v5848
        %v5977 = vsel %vm5720, %v5395, %v5849
        %v5978 = vsel %vm5721, %v5397, %v5850
        %v5979 = vsel %vm5722, %v5588, %v5851
        %v5980 = vsel %vm5723, %v5590, %v5852
        %v5981 = vsel %vm5724, %v5401, %v5853
        %v5982 = vsel %vm5725, %v5403, %v5854
        %v5983 = vsel %vm5726, %v5594, %v5855
        %v5984 = vsel %vm5727, %v5596, %v5856
        %v5985 = vsel %vm5728, %v5405, %v5857
        %v5986 = vsel %vm5729, %v5407, %v5858
        %v5987 = vsel %vm5730, %v5598, %v5859
        %v5988 = vsel %vm5731, %v5600, %v5860
        %v5989 = vsel %vm5732, %v5411, %v5861
        %v5990 = vsel %vm5733, %v5413, %v5862
        %v5991 = vsel %vm5734, %v5604, %v5863
        %v5992 = vsel %vm5735, %v5606, %v5864
        %v5993 = vsel %vm5736, %v5415, %v5865
        %v5994 = vsel %vm5737, %v5417, %v5866
        %v5995 = vsel %vm5738, %v5608, %v5867
        %v5996 = vsel %vm5739, %v5610, %v5868
        %v5997 = vpack.c.bf16 %v5873, %v5869
        %v5998 = vpack.c.bf16 %v5874, %v5870
        %v5999 = vpack.c.bf16 %v5875, %v5871
        %v6000 = vpack.c.bf16 %v5876, %v5872
        %v6001 = vpack.c.bf16 %v5881, %v5877
        %v6002 = vpack.c.bf16 %v5882, %v5878
        %v6003 = vpack.c.bf16 %v5883, %v5879
        %v6004 = vpack.c.bf16 %v5884, %v5880
        %v6005 = vpack.c.bf16 %v5889, %v5885
        %v6006 = vpack.c.bf16 %v5890, %v5886
        %v6007 = vpack.c.bf16 %v5891, %v5887
        %v6008 = vpack.c.bf16 %v5892, %v5888
        %v6009 = vpack.c.bf16 %v5897, %v5893
        %v6010 = vpack.c.bf16 %v5898, %v5894
        %v6011 = vpack.c.bf16 %v5899, %v5895
        %v6012 = vpack.c.bf16 %v5900, %v5896
        %v6013 = vpack.c.bf16 %v5905, %v5901
        %v6014 = vpack.c.bf16 %v5906, %v5902
        %v6015 = vpack.c.bf16 %v5907, %v5903
        %v6016 = vpack.c.bf16 %v5908, %v5904
        %v6017 = vpack.c.bf16 %v5913, %v5909
        %v6018 = vpack.c.bf16 %v5914, %v5910
        %v6019 = vpack.c.bf16 %v5915, %v5911
        %v6020 = vpack.c.bf16 %v5916, %v5912
        %v6021 = vpack.c.bf16 %v5921, %v5917
        %v6022 = vpack.c.bf16 %v5922, %v5918
        %v6023 = vpack.c.bf16 %v5923, %v5919
        %v6024 = vpack.c.bf16 %v5924, %v5920
        %v6025 = vpack.c.bf16 %v5929, %v5925
        %v6026 = vpack.c.bf16 %v5930, %v5926
        %v6027 = vpack.c.bf16 %v5931, %v5927
        %v6028 = vpack.c.bf16 %v5932, %v5928
        %v6029 = vpack.c.bf16 %v5937, %v5933
        %v6030 = vpack.c.bf16 %v5938, %v5934
        %v6031 = vpack.c.bf16 %v5939, %v5935
        %v6032 = vpack.c.bf16 %v5940, %v5936
        %v6033 = vpack.c.bf16 %v5945, %v5941
        %v6034 = vpack.c.bf16 %v5946, %v5942
        %v6035 = vpack.c.bf16 %v5947, %v5943
        %v6036 = vpack.c.bf16 %v5948, %v5944
        %v6037 = vpack.c.bf16 %v5953, %v5949
        %v6038 = vpack.c.bf16 %v5954, %v5950
        %v6039 = vpack.c.bf16 %v5955, %v5951
        %v6040 = vpack.c.bf16 %v5956, %v5952
        %v6041 = vpack.c.bf16 %v5961, %v5957
        %v6042 = vpack.c.bf16 %v5962, %v5958
        %v6043 = vpack.c.bf16 %v5963, %v5959
        %v6044 = vpack.c.bf16 %v5964, %v5960
        %v6045 = vpack.c.bf16 %v5969, %v5965
        %v6046 = vpack.c.bf16 %v5970, %v5966
        %v6047 = vpack.c.bf16 %v5971, %v5967
        %v6048 = vpack.c.bf16 %v5972, %v5968
        %v6049 = vpack.c.bf16 %v5977, %v5973
        %v6050 = vpack.c.bf16 %v5978, %v5974
        %v6051 = vpack.c.bf16 %v5979, %v5975
        %v6052 = vpack.c.bf16 %v5980, %v5976
        %v6053 = vpack.c.bf16 %v5985, %v5981
        %v6054 = vpack.c.bf16 %v5986, %v5982
        %v6055 = vpack.c.bf16 %v5987, %v5983
        %v6056 = vpack.c.bf16 %v5988, %v5984
        %v6057 = vpack.c.bf16 %v5993, %v5989
        %v6058 = vpack.c.bf16 %v5994, %v5990
        %v6059 = vpack.c.bf16 %v5995, %v5991
        %v6060 = vpack.c.bf16 %v5996, %v5992
        %v6061 = vld [vmem:[%s10] sm:$0x3]
        %v6062 = vld [vmem:[#allocation2] sm:$0x1]
        %6064 = vset.pattern.permute.xlu0 0
        %6065 = vperm.xlu0 %6064, %v6062
        %v6066 = vpop.permute.xlu0 %6065
        %v6068 = vlaneseq
        %v6069 = vshrl.u32 %v6068, 7
        %v6070 = vsub.s32 0, %v6069
        %v6071 = vrot.slane %v6066, %v6070
        %v6074 = vunpack.c.l.s4 1966171168
        %v6075 = vunpack.c.0.s8 %v6074
        %v6076 = vlaneseq
        %v6077 = vshrl.u32 %v6076, 7
        %v6078 = vsub.s32 %v6075, %v6077
        %v6079 = vrot.slane %v6061, %v6078
        %v6080 = vcombine.high %v6079, %v6079
        %v6082 = vunpack.c.l.s4 1966171168
        %v6083 = vunpack.c.0.s8 %v6082
        %v6084 = vlaneseq
        %v6085 = vshrl.u32 %v6084, 7
        %v6086 = vsub.s32 %v6083, %v6085
        %v6087 = vrot.slane %v6079, %v6086
        %v6089 = vunpack.c.l.s4 1966171168
        %v6090 = vunpack.c.0.s8 %v6089
        %v6091 = vlaneseq
        %v6092 = vshrl.u32 %v6091, 7
        %v6093 = vsub.s32 %v6090, %v6092
        %v6094 = vrot.slane %v6080, %v6093
        %6097 = vmatprep.subr.bf16.mxu0 %v5998
        %6098 = vmatpush1.bf16.msra.mxu0 %v5997
        %6099 = vmatprep.subr.bf16.mxu0 %v6002
        %6100 = vmatpush1.bf16.msra.mxu0 %v6001
        %6101 = vmatprep.subr.bf16.mxu0 %v6006
        %6102 = vmatpush1.bf16.msra.mxu0 %v6005
        %6103 = vmatprep.subr.bf16.mxu0 %v6010
        %6104 = vmatpush1.bf16.msra.mxu0 %v6009
        %6105 = vmatprep.subr.bf16.mxu0 %v6014
        %6106 = vmatpush1.bf16.msra.mxu0 %v6013
        %6107 = vmatprep.subr.bf16.mxu0 %v6018
        %6108 = vmatpush1.bf16.msra.mxu0 %v6017
        %6109 = vmatprep.subr.bf16.mxu0 %v6022
        %6110 = vmatpush1.bf16.msra.mxu0 %v6021
        %6111 = vmatprep.subr.bf16.mxu0 %v6026
        %6112 = vmatpush1.bf16.msra.mxu0 %v6025
        %6113 = vmatprep.subr.bf16.mxu0 %v6030
        %6114 = vmatpush1.bf16.msra.mxu0 %v6029
        %6115 = vmatprep.subr.bf16.mxu0 %v6034
        %6116 = vmatpush1.bf16.msra.mxu0 %v6033
        %6117 = vmatprep.subr.bf16.mxu0 %v6038
        %6118 = vmatpush1.bf16.msra.mxu0 %v6037
        %6119 = vmatprep.subr.bf16.mxu0 %v6042
        %6120 = vmatpush1.bf16.msra.mxu0 %v6041
        %6121 = vmatprep.subr.bf16.mxu0 %v6046
        %6122 = vmatpush1.bf16.msra.mxu0 %v6045
        %6123 = vmatprep.subr.bf16.mxu0 %v6050
        %6124 = vmatpush1.bf16.msra.mxu0 %v6049
        %6125 = vmatprep.subr.bf16.mxu0 %v6054
        %6126 = vmatpush1.bf16.msra.mxu0 %v6053
        %6127 = vmatprep.subr.bf16.mxu0 %v6058
        %6128 = vmatpush1.bf16.msra.mxu0 %v6057
        %6129 = vmatprep.mubr.bf16.mxu0 %v6094
        %6130 = vmatmul.mubr.bf16.gmra.mrb[0].mxu0 %v6087
        %v6131 = vpop.f32.mrb[0].mxu0
        %v6132 = vadd.f32 %v6071, %v6131
        %v6133 = vpop.f32.mrb[0].mxu0
        %v6134 = vadd.f32 %v6071, %v6133
        %v6135 = vpop.f32.mrb[0].mxu0
        %v6136 = vpop.f32.mrb[0].mxu0
        %6137 = vdwg.mxu0
        %6138 = vmatprep.subr.bf16.mxu0 %v6000
        %6139 = vmatpush1.bf16.msra.mxu0 %v5999
        %6140 = vmatprep.subr.bf16.mxu0 %v6004
        %6141 = vmatpush1.bf16.msra.mxu0 %v6003
        %6142 = vmatprep.subr.bf16.mxu0 %v6008
        %6143 = vmatpush1.bf16.msra.mxu0 %v6007
        %6144 = vmatprep.subr.bf16.mxu0 %v6012
        %6145 = vmatpush1.bf16.msra.mxu0 %v6011
        %6146 = vmatprep.subr.bf16.mxu0 %v6016
        %6147 = vmatpush1.bf16.msra.mxu0 %v6015
        %6148 = vmatprep.subr.bf16.mxu0 %v6020
        %6149 = vmatpush1.bf16.msra.mxu0 %v6019
        %6150 = vmatprep.subr.bf16.mxu0 %v6024
        %6151 = vmatpush1.bf16.msra.mxu0 %v6023
        %6152 = vmatprep.subr.bf16.mxu0 %v6028
        %6153 = vmatpush1.bf16.msra.mxu0 %v6027
        %6154 = vmatprep.subr.bf16.mxu0 %v6032
        %6155 = vmatpush1.bf16.msra.mxu0 %v6031
        %6156 = vmatprep.subr.bf16.mxu0 %v6036
        %6157 = vmatpush1.bf16.msra.mxu0 %v6035
        %6158 = vmatprep.subr.bf16.mxu0 %v6040
        %6159 = vmatpush1.bf16.msra.mxu0 %v6039
        %6160 = vmatprep.subr.bf16.mxu0 %v6044
        %6161 = vmatpush1.bf16.msra.mxu0 %v6043
        %6162 = vmatprep.subr.bf16.mxu0 %v6048
        %6163 = vmatpush1.bf16.msra.mxu0 %v6047
        %6164 = vmatprep.subr.bf16.mxu0 %v6052
        %6165 = vmatpush1.bf16.msra.mxu0 %v6051
        %6166 = vmatprep.subr.bf16.mxu0 %v6056
        %6167 = vmatpush1.bf16.msra.mxu0 %v6055
        %6168 = vmatprep.subr.bf16.mxu0 %v6060
        %6169 = vmatpush1.bf16.msra.mxu0 %v6059
        %6170 = vmatprep.mubr.bf16.mxu0 %v6094
        %6171 = vmatmul.mubr.bf16.gmra.mrb[0].mxu0 %v6087
        %v6172 = vpop.f32.mrb[0].mxu0
        %v6173 = vadd.f32 %v6071, %v6172
        %v6174 = vpop.f32.mrb[0].mxu0
        %v6175 = vadd.f32 %v6071, %v6174
        %v6176 = vpop.f32.mrb[0].mxu0
        %v6177 = vpop.f32.mrb[0].mxu0
        %6178 = vdwg.mxu0
        %v6183 = vcombine.low %v6132, %v6134
        %v6184 = vcombine.low %v6173, %v6175
        %v6186 = vunpack.c.l.s4 1966171168
        %v6187 = vunpack.c.0.s8 %v6186
        %v6188 = vlaneseq
        %v6189 = vshrl.u32 %v6188, 7
        %v6190 = vsub.s32 %v6187, %v6189
        %v6191 = vrot.slane %v6183, %v6190
        %v6193 = vunpack.c.l.s4 1966171168
        %v6194 = vunpack.c.0.s8 %v6193
        %v6195 = vlaneseq
        %v6196 = vshrl.u32 %v6195, 7
        %v6197 = vsub.s32 %v6194, %v6196
        %v6198 = vrot.slane %v6184, %v6197
        %v6199 = vcombine.low %v6191, %v6198
        %v6201 = vunpack.c.l.s4 1966171168
        %v6202 = vunpack.c.0.s8 %v6201
        %v6203 = vlaneseq
        %v6204 = vshrl.u32 %v6203, 7
        %v6205 = vsub.s32 %v6202, %v6204
        %v6206 = vrot.slane %v6199, %v6205
        %v6208 = vlaneseq
        %vm6209 = vcmp.ge.s32.totalorder %v6208, 0
        %vm6210 = vcmp.lt.s32.totalorder %v6208, 512
        %vm6211 = vmand %vm6209, %vm6210
        %6212 = vst.msk [vmem:[%s429] sm:$0xf] %vm6211, %v6206
        %s6213 = smul.u32 4, %s26
        %p6214 = scmp.lt.s32.totalorder %s6213, 7
        %s6215 = scalar_select %p6214, %s6213, 7
        %s6216 = scalar_lea.vmem %s12, %s6215
        // Predicated region
        $region73: #{kernelnn_forward.1} parent=67 // pred_check
          %p6217 = pneg %p301
        $region74: #{kernelnn_forward.1} parent=67 // pred_check_branch
          %6219 = sbr.rel (%p6217) target = $region76
        $region75: #{kernelnn_forward.1} parent=67 // pred_region
          %s6220 = smul.u32 4, %s26
        $region76: #{kernelnn_forward.1} parent=67 // pred_fallthru
          _
      $region68: #{kernelnn_forward.1} parent=5 // pred_fallthru
        _
      %p6221 = scmp.le.s32.totalorder 2, %s21
      // Predicated region
      $region77: #{kernelnn_forward.1} parent=5 // pred_check
        %p6222 = pneg %p6221
      $region78: #{kernelnn_forward.1} parent=5 // pred_check_branch
        %6224 = sbr.rel (%p6222) target = $region80
      $region79: #{kernelnn_forward.1} parent=5 // pred_region
        %s6225 = ssub.s32 %s21, 2
        // Predicated region
        $region81: #{kernelnn_forward.1} parent=79 // pred_check
          %p6226 = pneg %p307
        $region82: #{kernelnn_forward.1} parent=79 // pred_check_branch
          %6228 = sbr.rel (%p6226) target = $region84
        $region83: #{kernelnn_forward.1} parent=79 // pred_region
          %s6229 = smul.u32 4, %s27
          %p6230 = scmp.lt.s32.totalorder %s6229, 7
          %s6231 = scalar_select %p6230, %s6229, 7
          %s6232 = scalar_lea.vmem %s12, %s6231
        $region84: #{kernelnn_forward.1} parent=79 // pred_fallthru
          _
      $region80: #{kernelnn_forward.1} parent=5 // pred_fallthru
        _
    $region6: #{kernelnn_forward.1} parent=1 // loop_footer
      %s25 = sadd.s32 1, %s21
    $region7: #{kernelnn_forward.1} parent=1 // loop_footer_branch
      %20 = sbr.rel target = $region3
    $region8: #{kernelnn_forward.1} parent=1 // loop_exit
      _
    %6233 = vsyncpa [#allocation4], 1
    %s6234 = scalar_lea.sflag [#allocation4], 1
    %6235 = vsyncpa %s6234, 1

</llo_original>
